<compile_context>
chip_gen: v6e
topology: v6e:2x2x1
jax: 0.10.0
libtpu: 0.0.40
codegen_flags: <defaults>
</compile_context>

<pallas_src>
import jax
import jax.numpy as jnp
from jax import lax
from jax.experimental import pallas as pl
from jax.experimental.pallas import tpu as pltpu


def _loss_kernel(mel_t_ref, mel_p_ref,
                 pitch_t_ref, pitch_p_ref,
                 en_t_ref, en_p_ref,
                 dur_t_ref, logdur_p_ref,
                 mel_lens_ref, src_lens_ref,
                 out_ref,
                 mel_acc, pitch_acc, en_acc, dur_acc):
    f32 = jnp.float32
    c = pl.program_id(0)                      # frame-chunk index ("parallel")
    t = pl.program_id(1)                      # tile index within chunk ("arbitrary")
    tiles_per_chunk = pl.num_programs(1)

    B, tile_t, n_mels = mel_t_ref.shape
    t_src = dur_t_ref.shape[1]

    mel_lens = mel_lens_ref[...]              # [B, 1] int32: valid mel frames / utt
    src_lens = src_lens_ref[...]              # [B, 1] int32: valid src tokens / utt

    # ---- first tile of each chunk: zero this chunk's accumulators -----------
    @pl.when(t == 0)
    def _init():
        mel_acc[...] = jnp.zeros_like(mel_acc)
        pitch_acc[...] = jnp.zeros_like(pitch_acc)
        en_acc[...] = jnp.zeros_like(en_acc)
        dur_acc[...] = jnp.zeros_like(dur_acc)

    # ---- duration MSE (log domain): tiny, computed once in chunk 0 ----------
    @pl.when(jnp.logical_and(c == 0, t == 0))
    def _duration():
        # jnp.log(x + 1) matches torch.log(duration_target + 1) exactly.
        log_dur_t = jnp.log(dur_t_ref[...].astype(f32) + 1.0)
        dd = logdur_p_ref[...].astype(f32) - log_dur_t            # [B, T_src]
        s_col = lax.broadcasted_iota(jnp.int32, (B, t_src), 1)
        s_valid = s_col < src_lens                                # [B, T_src]
        dur_acc[...] = jnp.sum(jnp.where(s_valid, dd * dd, 0.0),
                               axis=0, keepdims=True)             # [1, T_src]

    # ---- per-tile frame validity from lengths (2-D only, no mask tensors) ---
    frame0 = (c * tiles_per_chunk + t) * tile_t
    col = frame0 + lax.broadcasted_iota(jnp.int32, (B, tile_t), 1)
    valid = col < mel_lens                                        # [B, tile_t]

    # ---- mel L1: reduce |diff| over the n_mels lanes first (XLU), then mask -
    # (jnp.where keeps NaN/Inf from partial-tile padding out of the sums)
    mel_row = jnp.sum(
        jnp.abs(mel_p_ref[...].astype(f32) - mel_t_ref[...].astype(f32)),
        axis=-1)                                                  # [B, tile_t]
    mel_acc[...] += jnp.sum(jnp.where(valid, mel_row, 0.0),
                            axis=0, keepdims=True)                # [1, tile_t]

    # ---- pitch / energy MSE partial sums -------------------------------------
    dp = pitch_p_ref[...].astype(f32) - pitch_t_ref[...].astype(f32)
    pitch_acc[...] += jnp.sum(jnp.where(valid, dp * dp, 0.0),
                              axis=0, keepdims=True)
    de = en_p_ref[...].astype(f32) - en_t_ref[...].astype(f32)
    en_acc[...] += jnp.sum(jnp.where(valid, de * de, 0.0),
                           axis=0, keepdims=True)

    # ---- last tile of this chunk: write per-chunk partial SUMS --------------
    @pl.when(t == tiles_per_chunk - 1)
    def _finalize():
        out_ref[0, 0, 0] = jnp.sum(mel_acc[...])     # mel L1 numerator
        out_ref[0, 0, 1] = jnp.sum(pitch_acc[...])   # pitch MSE numerator
        out_ref[0, 0, 2] = jnp.sum(en_acc[...])      # energy MSE numerator
        out_ref[0, 0, 3] = jnp.sum(dur_acc[...])     # duration MSE numerator


def _pick_tile_t(B, T_mel, n_mels, mel_itemsize, frame_itemsize=4):
    """Lane-dense frame tile (multiple of 128 frames).

    Targets ~8 MiB of real streamed HBM bytes per grid step (amortizes the
    ~0.35 us fixed per-step cost), capped so that the double-buffered,
    lane-padded VMEM footprint of the mel + frame streams stays <= ~28 MiB
    (fits v7x's 64 MiB physical VMEM with headroom as well as v5e/v6e)."""
    if T_mel <= 256:
        return int(T_mel)                     # full dim satisfies the block rules

    target_stream_bytes = 8 * 1024 * 1024
    per_frame_stream = B * (2 * n_mels * mel_itemsize + 4 * frame_itemsize)
    t = target_stream_bytes // max(per_frame_stream, 1)

    lanes = ((n_mels + 127) // 128) * 128     # VMEM lane padding of the mel blocks
    per_frame_vmem = B * (2 * 2 * lanes * mel_itemsize + 4 * 2 * frame_itemsize)
    vmem_budget = 28 * 1024 * 1024
    t = min(t, vmem_budget // max(per_frame_vmem, 1), 8192)

    t = max(128, (t // 128) * 128)
    t = min(t, (T_mel // 128) * 128)
    return int(t)


def loss_pallas(inputs, predictions, masks):
    """Mirrors Loss.forward(inputs, predictions, masks)."""
    mels_target, duration_target, pitch_target, energy_target = inputs
    (predicted_mels, log_duration_prediction,
     pitch_prediction, energy_prediction) = predictions
    src_mask, mel_mask = masks

    B, T_mel, n_mels = mels_target.shape
    T_src = duration_target.shape[1]

    # FastSpeech2 padding masks are contiguous tail-padding masks (True = pad),
    # so two tiny int32 length vectors replace two full B x T mask streams.
    mel_lens = jnp.sum(jnp.logical_not(mel_mask), axis=-1,
                       dtype=jnp.int32).reshape(B, 1)
    src_lens = jnp.sum(jnp.logical_not(src_mask), axis=-1,
                       dtype=jnp.int32).reshape(B, 1)

    mel_itemsize = jnp.dtype(mels_target.dtype).itemsize
    frame_itemsize = jnp.dtype(pitch_target.dtype).itemsize

    tile_t = _pick_tile_t(B, T_mel, n_mels, mel_itemsize, frame_itemsize)
    num_tiles = pl.cdiv(T_mel, tile_t)

    # Leading "parallel" chunk axis: splits the frame range across TensorCores
    # on v7x; harmless serial split on single-core v5e/v6e.
    num_chunks = 2 if num_tiles >= 2 else 1
    tiles_per_chunk = pl.cdiv(num_tiles, num_chunks)
    last_tile = num_tiles - 1

    # Clamp the block index for the (possible) over-run step of the last chunk
    # when num_tiles is odd; the kernel's validity mask (built from the
    # *unclamped* tile index) zeroes that step's contribution.
    def mel_idx(c, t):
        return (0, jnp.minimum(c * tiles_per_chunk + t, last_tile), 0)

    def frame_idx(c, t):
        return (0, jnp.minimum(c * tiles_per_chunk + t, last_tile))

    mel_spec = pl.BlockSpec((B, tile_t, n_mels), mel_idx)
    frame_spec = pl.BlockSpec((B, tile_t), frame_idx)
    src_spec = pl.BlockSpec((B, T_src), lambda c, t: (0, 0))     # resident
    len_spec = pl.BlockSpec((B, 1), lambda c, t: (0, 0))         # resident
    out_spec = pl.BlockSpec((1, 1, 4), lambda c, t: (c, 0, 0),
                            memory_space=pltpu.MemorySpace.SMEM)

    grid_spec = pltpu.PrefetchScalarGridSpec(
        num_scalar_prefetch=0,
        grid=(num_chunks, tiles_per_chunk),
        in_specs=[mel_spec, mel_spec,
                  frame_spec, frame_spec, frame_spec, frame_spec,
                  src_spec, src_spec,
                  len_spec, len_spec],
        out_specs=out_spec,
        scratch_shapes=[
            pltpu.VMEM((1, tile_t), jnp.float32),   # mel L1 per-frame partials
            pltpu.VMEM((1, tile_t), jnp.float32),   # pitch per-frame partials
            pltpu.VMEM((1, tile_t), jnp.float32),   # energy per-frame partials
            pltpu.VMEM((1, T_src), jnp.float32),    # duration per-token partials
        ],
    )

    # Advisory cost hint so XLA overlaps this bandwidth-bound call correctly.
    bytes_accessed = (2 * B * T_mel * n_mels * mel_itemsize
                      + 4 * B * T_mel * frame_itemsize
                      + 2 * B * T_src * 4
                      + 2 * B * 4
                      + num_chunks * 4 * 4)
    cost = pl.CostEstimate(
        flops=6 * B * T_mel * n_mels + 10 * B * T_mel + 8 * B * T_src,
        transcendentals=B * T_src,
        bytes_accessed=bytes_accessed,
    )

    partial = pl.pallas_call(
        _loss_kernel,
        grid_spec=grid_spec,
        out_shape=jax.ShapeDtypeStruct((num_chunks, 1, 4), jnp.float32),
        compiler_params=pltpu.CompilerParams(
            dimension_semantics=("parallel", "arbitrary"),
            vmem_limit_bytes=64 * 1024 * 1024,
        ),
        cost_estimate=cost,
    )(mels_target, predicted_mels,                   # native dtype, in-kernel upcast
      pitch_target, pitch_prediction,
      energy_target, energy_prediction,
      duration_target, log_duration_prediction,
      mel_lens, src_lens)

    # Trivial epilogue: combine per-chunk partial sums, divide by masked counts.
    sums = jnp.sum(partial.reshape(num_chunks, 4), axis=0)
    frame_cnt = jnp.sum(mel_lens).astype(jnp.float32)   # total valid mel frames
    src_cnt = jnp.sum(src_lens).astype(jnp.float32)     # total valid src tokens

    mel_loss = sums[0] / (frame_cnt * jnp.float32(n_mels))
    pitch_loss = sums[1] / frame_cnt
    energy_loss = sums[2] / frame_cnt
    duration_loss = sums[3] / src_cnt
    return mel_loss, pitch_loss, energy_loss, duration_loss


if __name__ == "__main__":
    key = jax.random.PRNGKey(0)
    B, T_SRC, T_MEL, N_MELS = 2, 24, 300, 80   # T_MEL not a tile multiple -> tests boundary

    k = jax.random.split(key, 8)
    # mels in bf16 to exercise the native-dtype path (upcast happens in-kernel)
    mels_target = jax.random.normal(k[0], (B, T_MEL, N_MELS), jnp.float32).astype(jnp.bfloat16)
    predicted_mels = jax.random.normal(k[1], (B, T_MEL, N_MELS), jnp.float32).astype(jnp.bfloat16)
    duration_target = jax.random.randint(k[2], (B, T_SRC), 0, 6).astype(jnp.float32)
    log_duration_prediction = jax.random.normal(k[3], (B, T_SRC), jnp.float32)
    pitch_target = jax.random.normal(k[4], (B, T_MEL), jnp.float32)
    pitch_prediction = jax.random.normal(k[5], (B, T_MEL), jnp.float32)
    energy_target = jax.random.normal(k[6], (B, T_MEL), jnp.float32)
    energy_prediction = jax.random.normal(k[7], (B, T_MEL), jnp.float32)

    # masks: True = padding (as in the PyTorch module), built from lengths
    src_len_vec = jnp.array([T_SRC, 17], jnp.int32)
    mel_len_vec = jnp.array([T_MEL, 211], jnp.int32)
    src_mask = jnp.arange(T_SRC)[None, :] >= src_len_vec[:, None]   # [B, T_src] bool
    mel_mask = jnp.arange(T_MEL)[None, :] >= mel_len_vec[:, None]   # [B, T_mel] bool

    inputs = (mels_target, duration_target, pitch_target, energy_target)
    predictions = (predicted_mels, log_duration_prediction,
                   pitch_prediction, energy_prediction)

    mel_loss, pitch_loss, energy_loss, duration_loss = loss_pallas(
        inputs, predictions, (src_mask, mel_mask))
    jax.block_until_ready((mel_loss, pitch_loss, energy_loss, duration_loss))

    # pure-JAX reference (masked_select + mean == masked sum / masked count)
    f32 = jnp.float32
    mv = (~mel_mask).astype(f32)
    sv = (~src_mask).astype(f32)
    mt32 = mels_target.astype(f32)
    pm32 = predicted_mels.astype(f32)
    ref_mel = jnp.sum(jnp.abs(pm32 - mt32) * mv[:, :, None]) / (jnp.sum(mv) * N_MELS)
    ref_dur = jnp.sum(((log_duration_prediction - jnp.log(duration_target + 1)) ** 2) * sv) / jnp.sum(sv)
    ref_pitch = jnp.sum(((pitch_prediction - pitch_target) ** 2) * mv) / jnp.sum(mv)
    ref_energy = jnp.sum(((energy_prediction - energy_target) ** 2) * mv) / jnp.sum(mv)

    assert jnp.allclose(mel_loss, ref_mel, rtol=1e-5, atol=1e-5), (mel_loss, ref_mel)
    assert jnp.allclose(duration_loss, ref_dur, rtol=1e-5, atol=1e-5), (duration_loss, ref_dur)
    assert jnp.allclose(pitch_loss, ref_pitch, rtol=1e-5, atol=1e-5), (pitch_loss, ref_pitch)
    assert jnp.allclose(energy_loss, ref_energy, rtol=1e-5, atol=1e-5), (energy_loss, ref_energy)

    print("KERNEL_OK")
</pallas_src>

<mosaic_0001>
module attributes {stable_mosaic.version = 11 : i64} {
  func.func @_loss_kernel(%arg0: i32, %arg1: i32, %arg2: memref<2x256x80xbf16, #tpu.memory_space<vmem>>, %arg3: memref<2x256x80xbf16, #tpu.memory_space<vmem>>, %arg4: memref<2x256xf32, #tpu.memory_space<vmem>>, %arg5: memref<2x256xf32, #tpu.memory_space<vmem>>, %arg6: memref<2x256xf32, #tpu.memory_space<vmem>>, %arg7: memref<2x256xf32, #tpu.memory_space<vmem>>, %arg8: memref<2x24xf32, #tpu.memory_space<vmem>>, %arg9: memref<2x24xf32, #tpu.memory_space<vmem>>, %arg10: memref<2x1xi32, #tpu.memory_space<vmem>>, %arg11: memref<2x1xi32, #tpu.memory_space<vmem>>, %arg12: memref<1x1x4xf32, #tpu.memory_space<smem>>, %arg13: memref<1x256xf32, #tpu.memory_space<vmem>>, %arg14: memref<1x256xf32, #tpu.memory_space<vmem>>, %arg15: memref<1x256xf32, #tpu.memory_space<vmem>>, %arg16: memref<1x24xf32, #tpu.memory_space<vmem>>) attributes {dimension_semantics = [#tpu.dimension_semantics<parallel>, #tpu.dimension_semantics<arbitrary>], iteration_bounds = array<i64: 2, 1>, scalar_prefetch = 0 : i64, scratch_operands = 4 : i64, tpu.core_type = #tpu.core_type<tc>, window_params = [{transform_indices = @transform_0, window_bounds = array<i64: 2, 256, 80>}, {transform_indices = @transform_1, window_bounds = array<i64: 2, 256, 80>}, {transform_indices = @transform_2, window_bounds = array<i64: 2, 256>}, {transform_indices = @transform_3, window_bounds = array<i64: 2, 256>}, {transform_indices = @transform_4, window_bounds = array<i64: 2, 256>}, {transform_indices = @transform_5, window_bounds = array<i64: 2, 256>}, {pipeline_mode = #tpu.pipeline_mode<synchronous>, transform_indices = @transform_6, window_bounds = array<i64: 2, 24>}, {pipeline_mode = #tpu.pipeline_mode<synchronous>, transform_indices = @transform_7, window_bounds = array<i64: 2, 24>}, {pipeline_mode = #tpu.pipeline_mode<synchronous>, transform_indices = @transform_8, window_bounds = array<i64: 2, 1>}, {pipeline_mode = #tpu.pipeline_mode<synchronous>, transform_indices = @transform_9, window_bounds = array<i64: 2, 1>}, {transform_indices = @transform_10, window_bounds = array<i64: 1, 1, 4>}]} {
    %c0 = arith.constant 0 : index
    %c0_0 = arith.constant 0 : index
    %0 = vector.load %arg10[%c0, %c0_0] : memref<2x1xi32, #tpu.memory_space<vmem>>, vector<2x1xi32>
    %c0_1 = arith.constant 0 : index
    %c0_2 = arith.constant 0 : index
    %1 = vector.load %arg11[%c0_1, %c0_2] : memref<2x1xi32, #tpu.memory_space<vmem>>, vector<2x1xi32>
    %c0_i32 = arith.constant 0 : i32
    %2 = arith.cmpi eq, %arg1, %c0_i32 : i32
    %3 = arith.extui %2 : i1 to i32
    %c0_i32_3 = arith.constant 0 : i32
    %4 = arith.cmpi ne, %3, %c0_i32_3 : i32
    scf.if %4 {
      %cst_41 = arith.constant 0.000000e+00 : f32
      %57 = vector.broadcast %cst_41 : f32 to vector<1x256xf32>
      %c0_42 = arith.constant 0 : index
      %c0_43 = arith.constant 0 : index
      %58 = vector.load %arg13[%c0_42, %c0_43] : memref<1x256xf32, #tpu.memory_space<vmem>>, vector<1x256xf32>
      tpu.vector_store %arg13[%c0_42, %c0_43], %57 {strides = array<i32>} : memref<1x256xf32, #tpu.memory_space<vmem>>, vector<1x256xf32>,
      %cst_44 = arith.constant 0.000000e+00 : f32
      %59 = vector.broadcast %cst_44 : f32 to vector<1x256xf32>
      %c0_45 = arith.constant 0 : index
      %c0_46 = arith.constant 0 : index
      %60 = vector.load %arg14[%c0_45, %c0_46] : memref<1x256xf32, #tpu.memory_space<vmem>>, vector<1x256xf32>
      tpu.vector_store %arg14[%c0_45, %c0_46], %59 {strides = array<i32>} : memref<1x256xf32, #tpu.memory_space<vmem>>, vector<1x256xf32>,
      %cst_47 = arith.constant 0.000000e+00 : f32
      %61 = vector.broadcast %cst_47 : f32 to vector<1x256xf32>
      %c0_48 = arith.constant 0 : index
      %c0_49 = arith.constant 0 : index
      %62 = vector.load %arg15[%c0_48, %c0_49] : memref<1x256xf32, #tpu.memory_space<vmem>>, vector<1x256xf32>
      tpu.vector_store %arg15[%c0_48, %c0_49], %61 {strides = array<i32>} : memref<1x256xf32, #tpu.memory_space<vmem>>, vector<1x256xf32>,
      %cst_50 = arith.constant 0.000000e+00 : f32
      %63 = vector.broadcast %cst_50 : f32 to vector<1x24xf32>
      %c0_51 = arith.constant 0 : index
      %c0_52 = arith.constant 0 : index
      %64 = vector.load %arg16[%c0_51, %c0_52] : memref<1x24xf32, #tpu.memory_space<vmem>>, vector<1x24xf32>
      tpu.vector_store %arg16[%c0_51, %c0_52], %63 {strides = array<i32>} : memref<1x24xf32, #tpu.memory_space<vmem>>, vector<1x24xf32>,
    } else {
    }
    %c0_i32_4 = arith.constant 0 : i32
    %5 = arith.cmpi eq, %arg0, %c0_i32_4 : i32
    %c0_i32_5 = arith.constant 0 : i32
    %6 = arith.cmpi eq, %arg1, %c0_i32_5 : i32
    %7 = arith.andi %5, %6 : i1
    %8 = arith.extui %7 : i1 to i32
    %c0_i32_6 = arith.constant 0 : i32
    %9 = arith.cmpi ne, %8, %c0_i32_6 : i32
    scf.if %9 {
      %c0_41 = arith.constant 0 : index
      %c0_42 = arith.constant 0 : index
      %57 = vector.load %arg8[%c0_41, %c0_42] : memref<2x24xf32, #tpu.memory_space<vmem>>, vector<2x24xf32>
      %cst_43 = arith.constant 1.000000e+00 : f32
      %58 = vector.broadcast %cst_43 : f32 to vector<2x24xf32>
      %59 = arith.addf %57, %58 : vector<2x24xf32>
      %60 = math.log %59 : vector<2x24xf32>
      %c0_44 = arith.constant 0 : index
      %c0_45 = arith.constant 0 : index
      %61 = vector.load %arg9[%c0_44, %c0_45] : memref<2x24xf32, #tpu.memory_space<vmem>>, vector<2x24xf32>
      %62 = arith.subf %61, %60 : vector<2x24xf32>
      %63 = tpu.iota {dimensions = array<i32: 1>} : vector<2x24xi32>
      %64 = vector.broadcast %1 : vector<2x1xi32> to vector<2x24xi32>
      %65 = arith.cmpi slt, %63, %64 : vector<2x24xi32>
      %66 = arith.mulf %62, %62 : vector<2x24xf32>
      %cst_46 = arith.constant 0.000000e+00 : f32
      %67 = vector.broadcast %cst_46 : f32 to vector<2x24xf32>
      %68 = arith.select %65, %66, %67 : vector<2x24xi1>, vector<2x24xf32>
      %cst_47 = arith.constant dense<0.000000e+00> : vector<24xf32>
      %69 = vector.multi_reduction <add>, %68, %cst_47 [0] : vector<2x24xf32> to vector<24xf32>
      %70 = vector.shape_cast %69 : vector<24xf32> to vector<1x24xf32>
      %c0_48 = arith.constant 0 : index
      %c0_49 = arith.constant 0 : index
      %71 = vector.load %arg16[%c0_48, %c0_49] : memref<1x24xf32, #tpu.memory_space<vmem>>, vector<1x24xf32>
      tpu.vector_store %arg16[%c0_48, %c0_49], %70 {strides = array<i32>} : memref<1x24xf32, #tpu.memory_space<vmem>>, vector<1x24xf32>,
    } else {
    }
    %c1_i32 = arith.constant 1 : i32
    %10 = arith.muli %arg0, %c1_i32 : i32
    %11 = arith.addi %10, %arg1 : i32
    %c256_i32 = arith.constant 256 : i32
    %12 = arith.muli %11, %c256_i32 : i32
    %13 = tpu.iota {dimensions = array<i32: 1>} : vector<2x256xi32>
    %14 = vector.broadcast %12 : i32 to vector<2x256xi32>
    %15 = arith.addi %14, %13 : vector<2x256xi32>
    %16 = vector.broadcast %0 : vector<2x1xi32> to vector<2x256xi32>
    %17 = arith.cmpi slt, %15, %16 : vector<2x256xi32>
    %c0_7 = arith.constant 0 : index
    %c0_8 = arith.constant 0 : index
    %c0_9 = arith.constant 0 : index
    %18 = vector.load %arg3[%c0_7, %c0_8, %c0_9] : memref<2x256x80xbf16, #tpu.memory_space<vmem>>, vector<2x256x80xbf16>
    %19 = arith.extf %18 : vector<2x256x80xbf16> to vector<2x256x80xf32>
    %c0_10 = arith.constant 0 : index
    %c0_11 = arith.constant 0 : index
    %c0_12 = arith.constant 0 : index
    %20 = vector.load %arg2[%c0_10, %c0_11, %c0_12] : memref<2x256x80xbf16, #tpu.memory_space<vmem>>, vector<2x256x80xbf16>
    %21 = arith.extf %20 : vector<2x256x80xbf16> to vector<2x256x80xf32>
    %22 = arith.subf %19, %21 : vector<2x256x80xf32>
    %23 = math.absf %22 : vector<2x256x80xf32>
    %cst = arith.constant dense<0.000000e+00> : vector<2x256xf32>
    %24 = vector.multi_reduction <add>, %23, %cst [2] : vector<2x256x80xf32> to vector<2x256xf32>
    %c0_13 = arith.constant 0 : index
    %c0_14 = arith.constant 0 : index
    %25 = vector.load %arg13[%c0_13, %c0_14] : memref<1x256xf32, #tpu.memory_space<vmem>>, vector<1x256xf32>
    %cst_15 = arith.constant 0.000000e+00 : f32
    %26 = vector.broadcast %cst_15 : f32 to vector<2x256xf32>
    %27 = arith.select %17, %24, %26 : vector<2x256xi1>, vector<2x256xf32>
    %cst_16 = arith.constant dense<0.000000e+00> : vector<256xf32>
    %28 = vector.multi_reduction <add>, %27, %cst_16 [0] : vector<2x256xf32> to vector<256xf32>
    %29 = vector.shape_cast %28 : vector<256xf32> to vector<1x256xf32>
    %30 = arith.addf %25, %29 : vector<1x256xf32>
    %c0_17 = arith.constant 0 : index
    %c0_18 = arith.constant 0 : index
    %31 = vector.load %arg13[%c0_17, %c0_18] : memref<1x256xf32, #tpu.memory_space<vmem>>, vector<1x256xf32>
    tpu.vector_store %arg13[%c0_17, %c0_18], %30 {strides = array<i32>} : memref<1x256xf32, #tpu.memory_space<vmem>>, vector<1x256xf32>,
    %c0_19 = arith.constant 0 : index
    %c0_20 = arith.constant 0 : index
    %32 = vector.load %arg5[%c0_19, %c0_20] : memref<2x256xf32, #tpu.memory_space<vmem>>, vector<2x256xf32>
    %c0_21 = arith.constant 0 : index
    %c0_22 = arith.constant 0 : index
    %33 = vector.load %arg4[%c0_21, %c0_22] : memref<2x256xf32, #tpu.memory_space<vmem>>, vector<2x256xf32>
    %34 = arith.subf %32, %33 : vector<2x256xf32>
    %c0_23 = arith.constant 0 : index
    %c0_24 = arith.constant 0 : index
    %35 = vector.load %arg14[%c0_23, %c0_24] : memref<1x256xf32, #tpu.memory_space<vmem>>, vector<1x256xf32>
    %36 = arith.mulf %34, %34 : vector<2x256xf32>
    %cst_25 = arith.constant 0.000000e+00 : f32
    %37 = vector.broadcast %cst_25 : f32 to vector<2x256xf32>
    %38 = arith.select %17, %36, %37 : vector<2x256xi1>, vector<2x256xf32>
    %cst_26 = arith.constant dense<0.000000e+00> : vector<256xf32>
    %39 = vector.multi_reduction <add>, %38, %cst_26 [0] : vector<2x256xf32> to vector<256xf32>
    %40 = vector.shape_cast %39 : vector<256xf32> to vector<1x256xf32>
    %41 = arith.addf %35, %40 : vector<1x256xf32>
    %c0_27 = arith.constant 0 : index
    %c0_28 = arith.constant 0 : index
    %42 = vector.load %arg14[%c0_27, %c0_28] : memref<1x256xf32, #tpu.memory_space<vmem>>, vector<1x256xf32>
    tpu.vector_store %arg14[%c0_27, %c0_28], %41 {strides = array<i32>} : memref<1x256xf32, #tpu.memory_space<vmem>>, vector<1x256xf32>,
    %c0_29 = arith.constant 0 : index
    %c0_30 = arith.constant 0 : index
    %43 = vector.load %arg7[%c0_29, %c0_30] : memref<2x256xf32, #tpu.memory_space<vmem>>, vector<2x256xf32>
    %c0_31 = arith.constant 0 : index
    %c0_32 = arith.constant 0 : index
    %44 = vector.load %arg6[%c0_31, %c0_32] : memref<2x256xf32, #tpu.memory_space<vmem>>, vector<2x256xf32>
    %45 = arith.subf %43, %44 : vector<2x256xf32>
    %c0_33 = arith.constant 0 : index
    %c0_34 = arith.constant 0 : index
    %46 = vector.load %arg15[%c0_33, %c0_34] : memref<1x256xf32, #tpu.memory_space<vmem>>, vector<1x256xf32>
    %47 = arith.mulf %45, %45 : vector<2x256xf32>
    %cst_35 = arith.constant 0.000000e+00 : f32
    %48 = vector.broadcast %cst_35 : f32 to vector<2x256xf32>
    %49 = arith.select %17, %47, %48 : vector<2x256xi1>, vector<2x256xf32>
    %cst_36 = arith.constant dense<0.000000e+00> : vector<256xf32>
    %50 = vector.multi_reduction <add>, %49, %cst_36 [0] : vector<2x256xf32> to vector<256xf32>
    %51 = vector.shape_cast %50 : vector<256xf32> to vector<1x256xf32>
    %52 = arith.addf %46, %51 : vector<1x256xf32>
    %c0_37 = arith.constant 0 : index
    %c0_38 = arith.constant 0 : index
    %53 = vector.load %arg15[%c0_37, %c0_38] : memref<1x256xf32, #tpu.memory_space<vmem>>, vector<1x256xf32>
    tpu.vector_store %arg15[%c0_37, %c0_38], %52 {strides = array<i32>} : memref<1x256xf32, #tpu.memory_space<vmem>>, vector<1x256xf32>,
    %c0_i32_39 = arith.constant 0 : i32
    %54 = arith.cmpi eq, %arg1, %c0_i32_39 : i32
    %55 = arith.extui %54 : i1 to i32
    %c0_i32_40 = arith.constant 0 : i32
    %56 = arith.cmpi ne, %55, %c0_i32_40 : i32
    scf.if %56 {
      %c0_41 = arith.constant 0 : index
      %c0_42 = arith.constant 0 : index
      %57 = vector.load %arg13[%c0_41, %c0_42] : memref<1x256xf32, #tpu.memory_space<vmem>>, vector<1x256xf32>
      %58 = vector.shape_cast %57 : vector<1x256xf32> to vector<1x1x256xf32>
      %cst_43 = arith.constant dense<0.000000e+00> : vector<1xf32>
      %59 = vector.multi_reduction <add>, %58, %cst_43 [1, 2] : vector<1x1x256xf32> to vector<1xf32>
      %60 = vector.shape_cast %59 : vector<1xf32> to vector<1x1x1xf32>
      %61 = vector.extract %60[0, 0, 0] : f32 from vector<1x1x1xf32>
      %c0_44 = arith.constant 0 : index
      %c0_45 = arith.constant 0 : index
      %c0_46 = arith.constant 0 : index
      %62 = memref.load %arg12[%c0_44, %c0_45, %c0_46] : memref<1x1x4xf32, #tpu.memory_space<smem>>
      memref.store %61, %arg12[%c0_44, %c0_45, %c0_46] : memref<1x1x4xf32, #tpu.memory_space<smem>>
      %c0_47 = arith.constant 0 : index
      %c0_48 = arith.constant 0 : index
      %63 = vector.load %arg14[%c0_47, %c0_48] : memref<1x256xf32, #tpu.memory_space<vmem>>, vector<1x256xf32>
      %64 = vector.shape_cast %63 : vector<1x256xf32> to vector<1x1x256xf32>
      %cst_49 = arith.constant dense<0.000000e+00> : vector<1xf32>
      %65 = vector.multi_reduction <add>, %64, %cst_49 [1, 2] : vector<1x1x256xf32> to vector<1xf32>
      %66 = vector.shape_cast %65 : vector<1xf32> to vector<1x1x1xf32>
      %67 = vector.extract %66[0, 0, 0] : f32 from vector<1x1x1xf32>
      %c0_50 = arith.constant 0 : index
      %c0_51 = arith.constant 0 : index
      %c1 = arith.constant 1 : index
      %68 = memref.load %arg12[%c0_50, %c0_51, %c1] : memref<1x1x4xf32, #tpu.memory_space<smem>>
      memref.store %67, %arg12[%c0_50, %c0_51, %c1] : memref<1x1x4xf32, #tpu.memory_space<smem>>
      %c0_52 = arith.constant 0 : index
      %c0_53 = arith.constant 0 : index
      %69 = vector.load %arg15[%c0_52, %c0_53] : memref<1x256xf32, #tpu.memory_space<vmem>>, vector<1x256xf32>
      %70 = vector.shape_cast %69 : vector<1x256xf32> to vector<1x1x256xf32>
      %cst_54 = arith.constant dense<0.000000e+00> : vector<1xf32>
      %71 = vector.multi_reduction <add>, %70, %cst_54 [1, 2] : vector<1x1x256xf32> to vector<1xf32>
      %72 = vector.shape_cast %71 : vector<1xf32> to vector<1x1x1xf32>
      %73 = vector.extract %72[0, 0, 0] : f32 from vector<1x1x1xf32>
      %c0_55 = arith.constant 0 : index
      %c0_56 = arith.constant 0 : index
      %c2 = arith.constant 2 : index
      %74 = memref.load %arg12[%c0_55, %c0_56, %c2] : memref<1x1x4xf32, #tpu.memory_space<smem>>
      memref.store %73, %arg12[%c0_55, %c0_56, %c2] : memref<1x1x4xf32, #tpu.memory_space<smem>>
      %c0_57 = arith.constant 0 : index
      %c0_58 = arith.constant 0 : index
      %75 = vector.load %arg16[%c0_57, %c0_58] : memref<1x24xf32, #tpu.memory_space<vmem>>, vector<1x24xf32>
      %76 = vector.shape_cast %75 : vector<1x24xf32> to vector<1x1x24xf32>
      %cst_59 = arith.constant dense<0.000000e+00> : vector<1xf32>
      %77 = vector.multi_reduction <add>, %76, %cst_59 [1, 2] : vector<1x1x24xf32> to vector<1xf32>
      %78 = vector.shape_cast %77 : vector<1xf32> to vector<1x1x1xf32>
      %79 = vector.extract %78[0, 0, 0] : f32 from vector<1x1x1xf32>
      %c0_60 = arith.constant 0 : index
      %c0_61 = arith.constant 0 : index
      %c3 = arith.constant 3 : index
      %80 = memref.load %arg12[%c0_60, %c0_61, %c3] : memref<1x1x4xf32, #tpu.memory_space<smem>>
      memref.store %79, %arg12[%c0_60, %c0_61, %c3] : memref<1x1x4xf32, #tpu.memory_space<smem>>
    } else {
    }
    return
  }
  func.func @transform_0(%arg0: i32, %arg1: i32) -> (i32, i32, i32) {
    %c1_i32 = arith.constant 1 : i32
    %0 = arith.muli %arg0, %c1_i32 : i32
    %1 = arith.addi %0, %arg1 : i32
    %c1_i32_0 = arith.constant 1 : i32
    %2 = arith.minsi %1, %c1_i32_0 : i32
    %c0_i32 = arith.constant 0 : i32
    %c0_i32_1 = arith.constant 0 : i32
    %c0_i32_2 = arith.constant 0 : i32
    return %c0_i32, %2, %c0_i32_1 : i32, i32, i32
  }
  func.func @transform_1(%arg0: i32, %arg1: i32) -> (i32, i32, i32) {
    %c1_i32 = arith.constant 1 : i32
    %0 = arith.muli %arg0, %c1_i32 : i32
    %1 = arith.addi %0, %arg1 : i32
    %c1_i32_0 = arith.constant 1 : i32
    %2 = arith.minsi %1, %c1_i32_0 : i32
    %c0_i32 = arith.constant 0 : i32
    %c0_i32_1 = arith.constant 0 : i32
    %c0_i32_2 = arith.constant 0 : i32
    return %c0_i32, %2, %c0_i32_1 : i32, i32, i32
  }
  func.func @transform_2(%arg0: i32, %arg1: i32) -> (i32, i32) {
    %c1_i32 = arith.constant 1 : i32
    %0 = arith.muli %arg0, %c1_i32 : i32
    %1 = arith.addi %0, %arg1 : i32
    %c1_i32_0 = arith.constant 1 : i32
    %2 = arith.minsi %1, %c1_i32_0 : i32
    %c0_i32 = arith.constant 0 : i32
    %c0_i32_1 = arith.constant 0 : i32
    return %c0_i32, %2 : i32, i32
  }
  func.func @transform_3(%arg0: i32, %arg1: i32) -> (i32, i32) {
    %c1_i32 = arith.constant 1 : i32
    %0 = arith.muli %arg0, %c1_i32 : i32
    %1 = arith.addi %0, %arg1 : i32
    %c1_i32_0 = arith.constant 1 : i32
    %2 = arith.minsi %1, %c1_i32_0 : i32
    %c0_i32 = arith.constant 0 : i32
    %c0_i32_1 = arith.constant 0 : i32
    return %c0_i32, %2 : i32, i32
  }
  func.func @transform_4(%arg0: i32, %arg1: i32) -> (i32, i32) {
    %c1_i32 = arith.constant 1 : i32
    %0 = arith.muli %arg0, %c1_i32 : i32
    %1 = arith.addi %0, %arg1 : i32
    %c1_i32_0 = arith.constant 1 : i32
    %2 = arith.minsi %1, %c1_i32_0 : i32
    %c0_i32 = arith.constant 0 : i32
    %c0_i32_1 = arith.constant 0 : i32
    return %c0_i32, %2 : i32, i32
  }
  func.func @transform_5(%arg0: i32, %arg1: i32) -> (i32, i32) {
    %c1_i32 = arith.constant 1 : i32
    %0 = arith.muli %arg0, %c1_i32 : i32
    %1 = arith.addi %0, %arg1 : i32
    %c1_i32_0 = arith.constant 1 : i32
    %2 = arith.minsi %1, %c1_i32_0 : i32
    %c0_i32 = arith.constant 0 : i32
    %c0_i32_1 = arith.constant 0 : i32
    return %c0_i32, %2 : i32, i32
  }
  func.func @transform_6(%arg0: i32, %arg1: i32) -> (i32, i32) {
    %c0_i32 = arith.constant 0 : i32
    %c0_i32_0 = arith.constant 0 : i32
    %c0_i32_1 = arith.constant 0 : i32
    return %c0_i32, %c0_i32_0 : i32, i32
  }
  func.func @transform_7(%arg0: i32, %arg1: i32) -> (i32, i32) {
    %c0_i32 = arith.constant 0 : i32
    %c0_i32_0 = arith.constant 0 : i32
    %c0_i32_1 = arith.constant 0 : i32
    return %c0_i32, %c0_i32_0 : i32, i32
  }
  func.func @transform_8(%arg0: i32, %arg1: i32) -> (i32, i32) {
    %c0_i32 = arith.constant 0 : i32
    %c0_i32_0 = arith.constant 0 : i32
    %c0_i32_1 = arith.constant 0 : i32
    return %c0_i32, %c0_i32_0 : i32, i32
  }
  func.func @transform_9(%arg0: i32, %arg1: i32) -> (i32, i32) {
    %c0_i32 = arith.constant 0 : i32
    %c0_i32_0 = arith.constant 0 : i32
    %c0_i32_1 = arith.constant 0 : i32
    return %c0_i32, %c0_i32_0 : i32, i32
  }
  func.func @transform_10(%arg0: i32, %arg1: i32) -> (i32, i32, i32) {
    %c0_i32 = arith.constant 0 : i32
    %c0_i32_0 = arith.constant 0 : i32
    %c0_i32_1 = arith.constant 0 : i32
    return %arg0, %c0_i32, %c0_i32_0 : i32, i32, i32
  }
}

</mosaic_0001>

<llo_original>
// kernel: tpu_custom_call.1
$region0: #{tpu_custom_call.1}
  #allocation0 [shape = 'u32[]', space=smem, size = 0x4, offset = 0x4, fixed_abs, tag = 'smem constant byte address 0x4 - core index']
  #allocation1 [shape = 'u32[144,128]{1,0:T(1,128)}', space=vmem, size = 0x12000, scoped, tag = 'internal scratch']
  #allocation2 [shape = 'f32[1,256]{1,0:T(1,128)}', space=vmem, size = 0x400, scoped, tag = 'scratch operand']
  #allocation3 [shape = 'f32[1,256]{1,0:T(1,128)}', space=vmem, size = 0x400, scoped, tag = 'scratch operand']
  #allocation4 [shape = 'f32[1,256]{1,0:T(1,128)}', space=vmem, size = 0x400, scoped, tag = 'scratch operand']
  #allocation5 [shape = 'f32[1,24]{1,0:T(1,128)}', space=vmem, size = 0x200, scoped, tag = 'scratch operand']
  %s0 = inlined_call_operand.vmem [shape: bf16[2,300,80], index: 0, kind: input, shape index: {}]
  %s1 = inlined_call_operand.vmem [shape: bf16[2,300,80], index: 1, kind: input, shape index: {}]
  %s2 = inlined_call_operand.vmem [shape: f32[2,300], index: 2, kind: input, shape index: {}]
  %s3 = inlined_call_operand.vmem [shape: f32[2,300], index: 3, kind: input, shape index: {}]
  %s4 = inlined_call_operand.vmem [shape: f32[2,300], index: 4, kind: input, shape index: {}]
  %s5 = inlined_call_operand.vmem [shape: f32[2,300], index: 5, kind: input, shape index: {}]
  %s6 = inlined_call_operand.vmem [shape: f32[2,24], index: 6, kind: input, shape index: {}]
  %s7 = inlined_call_operand.vmem [shape: f32[2,24], index: 7, kind: input, shape index: {}]
  %s8 = inlined_call_operand.vmem [shape: s32[2,1], index: 8, kind: input, shape index: {}]
  %s9 = inlined_call_operand.vmem [shape: s32[2,1], index: 9, kind: input, shape index: {}]
  %s10 = inlined_call_operand.hbm [shape: f32[2,1,4], index: 10, kind: output, shape index: {}]
  %s11 = sld [smem:[#allocation0]]
  $region209: #{tpu_custom_call.1} parent=0
    _
  %s13 = ssub.s32 1, %s11
  %s14 = scalar_select 0, %s13, %s11
  $region1: #{tpu_custom_call.1} parent=0
    #allocation6 [shape = 'u8[262144]{0}', space=vmem, size = 0x40000, scoped, tag = 'input window, operand 0']
    #allocation7 [shape = 'u8[262144]{0}', space=vmem, size = 0x40000, scoped, tag = 'input window, operand 1']
    #allocation8 [shape = 'u8[1024]{0}', space=smem, size = 0x400, scoped, tag = 'output window, operand 0']
    #allocation9 [shape = 's32[2]{0}', space=sflag, size = 0x8, scoped, tag = 'scoped memory for tpu_custom_call.1']
    %15 = vsyncpa [#allocation9], 0
    %s16 = scalar_lea.sflag [#allocation9], 1
    %17 = vsyncpa %s16, 0
    loop: start=0, step=1, limit=4
    $region2: #{tpu_custom_call.1} parent=1 // loop_pre_header
      _
    $region3: #{tpu_custom_call.1} parent=1 // loop_header
      %s19 = sphi 0, %s23
      %p20 = scmp.ge.s32.totalorder %s19, 4
      %s26 = sphi 0, %s38
      %s27 = sphi 0, %s34
      %s28 = sphi 0, %s26
      %s29 = sphi 0, %s27
      %s30 = sphi 0, %s28
      %s31 = sphi 0, %s29
      %s47 = sphi 0, %s49
      %s50 = sphi 0, %s47
      %s51 = sphi 0, %s50
      %s67 = sphi 0, %s51
      %s79 = sphi 0, %s81
      %s82 = sphi 0, %s79
      %s83 = sphi 0, %s82
      %s99 = sphi 0, %s83
      %s111 = sphi 0, %s113
      %s114 = sphi 0, %s111
      %s115 = sphi 0, %s114
      %s131 = sphi 0, %s115
      %s143 = sphi 0, %s145
      %s146 = sphi 0, %s143
      %s147 = sphi 0, %s146
      %s163 = sphi 0, %s147
      %s175 = sphi 0, %s177
      %s178 = sphi 0, %s175
      %s179 = sphi 0, %s178
      %s195 = sphi 0, %s179
      %s207 = sphi 0, %s209
      %s210 = sphi 0, %s207
      %s211 = sphi 0, %s210
      %s227 = sphi 0, %s211
      %s231 = sphi 0, %s231
      %s233 = sphi 0, %s231
      %s234 = sphi 0, %s233
      %s248 = sphi 0, %s234
      %s252 = sphi 0, %s252
      %s254 = sphi 0, %s252
      %s255 = sphi 0, %s254
      %s269 = sphi 0, %s255
      %s273 = sphi 0, %s273
      %s275 = sphi 0, %s273
      %s276 = sphi 0, %s275
      %s290 = sphi 0, %s276
      %s294 = sphi 0, %s294
      %s296 = sphi 0, %s294
      %s297 = sphi 0, %s296
      %s311 = sphi 0, %s297
      %s317 = sphi 0, %s319
      %s320 = sphi 0, %s317
      %s321 = sphi 0, %s320
      %s337 = sphi 0, %s321
    $region4: #{tpu_custom_call.1} parent=1 // loop_header_branch
      %22 = sbr.rel (%p20) target = $region8
    $region5: #{tpu_custom_call.1} parent=1 // loop_body
      %s24 = ssub.s32 %s19, 1
      %s25 = ssub.s32 %s19, 2
      %s32 = sadd.s32 1, %s27
      %p33 = scmp.ge.s32.totalorder %s32, 1
      %s34 = scalar_select %p33, 0, %s32
      %s35 = sadd.s32 1, %s26
      %s36 = scalar_select %p33, %s35, %s26
      %p37 = scmp.ge.s32.totalorder %s36, 2
      %s38 = scalar_select %p37, 0, %s36
      %s39 = sadd.s32 %s26, %s27
      %p40 = scmp.lt.s32.totalorder %s39, 1
      %s41 = scalar_select %p40, %s39, 1
      %s42 = sadd.s32 %s38, %s34
      %p43 = scmp.lt.s32.totalorder %s42, 1
      %s44 = scalar_select %p43, %s42, 1
      %s45 = ssub.s32 %s41, %s44
      %p46 = scmp.eq.s32.totalorder %s45, 0
      %s48 = sadd.s32 %s47, 1
      %s49 = scalar_select %p46, %s47, %s48
      %p52 = pneg %p46
      %p53 = scmp.eq.s32.totalorder %s19, 1
      %p54 = por %p52, %p53
      %p55 = scmp.ne.s32.totalorder %s47, %s50
      %p56 = scmp.eq.s32.totalorder %s19, 0
      %p57 = por %p55, %p56
      %p58 = scmp.ne.s32.totalorder %s47, %s50
      %p59 = scmp.eq.s32.totalorder %s24, 1
      %p60 = por %p58, %p59
      %p61 = scmp.ne.s32.totalorder %s50, %s51
      %p62 = scmp.eq.s32.totalorder %s24, 0
      %p63 = por %p61, %p62
      %p64 = scmp.ne.s32.totalorder %s50, %s51
      %p65 = scmp.eq.s32.totalorder %s25, 1
      %p66 = por %p64, %p65
      %p68 = scmp.ne.s32.totalorder %s51, %s67
      %p69 = scmp.eq.s32.totalorder %s25, 0
      %p70 = por %p68, %p69
      %s71 = sadd.s32 %s26, %s27
      %p72 = scmp.lt.s32.totalorder %s71, 1
      %s73 = scalar_select %p72, %s71, 1
      %s74 = sadd.s32 %s38, %s34
      %p75 = scmp.lt.s32.totalorder %s74, 1
      %s76 = scalar_select %p75, %s74, 1
      %s77 = ssub.s32 %s73, %s76
      %p78 = scmp.eq.s32.totalorder %s77, 0
      %s80 = sadd.s32 %s79, 1
      %s81 = scalar_select %p78, %s79, %s80
      %p84 = pneg %p78
      %p85 = scmp.eq.s32.totalorder %s19, 1
      %p86 = por %p84, %p85
      %p87 = scmp.ne.s32.totalorder %s79, %s82
      %p88 = scmp.eq.s32.totalorder %s19, 0
      %p89 = por %p87, %p88
      %p90 = scmp.ne.s32.totalorder %s79, %s82
      %p91 = scmp.eq.s32.totalorder %s24, 1
      %p92 = por %p90, %p91
      %p93 = scmp.ne.s32.totalorder %s82, %s83
      %p94 = scmp.eq.s32.totalorder %s24, 0
      %p95 = por %p93, %p94
      %p96 = scmp.ne.s32.totalorder %s82, %s83
      %p97 = scmp.eq.s32.totalorder %s25, 1
      %p98 = por %p96, %p97
      %p100 = scmp.ne.s32.totalorder %s83, %s99
      %p101 = scmp.eq.s32.totalorder %s25, 0
      %p102 = por %p100, %p101
      %s103 = sadd.s32 %s26, %s27
      %p104 = scmp.lt.s32.totalorder %s103, 1
      %s105 = scalar_select %p104, %s103, 1
      %s106 = sadd.s32 %s38, %s34
      %p107 = scmp.lt.s32.totalorder %s106, 1
      %s108 = scalar_select %p107, %s106, 1
      %s109 = ssub.s32 %s105, %s108
      %p110 = scmp.eq.s32.totalorder %s109, 0
      %s112 = sadd.s32 %s111, 1
      %s113 = scalar_select %p110, %s111, %s112
      %p116 = pneg %p110
      %p117 = scmp.eq.s32.totalorder %s19, 1
      %p118 = por %p116, %p117
      %p119 = scmp.ne.s32.totalorder %s111, %s114
      %p120 = scmp.eq.s32.totalorder %s19, 0
      %p121 = por %p119, %p120
      %p122 = scmp.ne.s32.totalorder %s111, %s114
      %p123 = scmp.eq.s32.totalorder %s24, 1
      %p124 = por %p122, %p123
      %p125 = scmp.ne.s32.totalorder %s114, %s115
      %p126 = scmp.eq.s32.totalorder %s24, 0
      %p127 = por %p125, %p126
      %p128 = scmp.ne.s32.totalorder %s114, %s115
      %p129 = scmp.eq.s32.totalorder %s25, 1
      %p130 = por %p128, %p129
      %p132 = scmp.ne.s32.totalorder %s115, %s131
      %p133 = scmp.eq.s32.totalorder %s25, 0
      %p134 = por %p132, %p133
      %s135 = sadd.s32 %s26, %s27
      %p136 = scmp.lt.s32.totalorder %s135, 1
      %s137 = scalar_select %p136, %s135, 1
      %s138 = sadd.s32 %s38, %s34
      %p139 = scmp.lt.s32.totalorder %s138, 1
      %s140 = scalar_select %p139, %s138, 1
      %s141 = ssub.s32 %s137, %s140
      %p142 = scmp.eq.s32.totalorder %s141, 0
      %s144 = sadd.s32 %s143, 1
      %s145 = scalar_select %p142, %s143, %s144
      %p148 = pneg %p142
      %p149 = scmp.eq.s32.totalorder %s19, 1
      %p150 = por %p148, %p149
      %p151 = scmp.ne.s32.totalorder %s143, %s146
      %p152 = scmp.eq.s32.totalorder %s19, 0
      %p153 = por %p151, %p152
      %p154 = scmp.ne.s32.totalorder %s143, %s146
      %p155 = scmp.eq.s32.totalorder %s24, 1
      %p156 = por %p154, %p155
      %p157 = scmp.ne.s32.totalorder %s146, %s147
      %p158 = scmp.eq.s32.totalorder %s24, 0
      %p159 = por %p157, %p158
      %p160 = scmp.ne.s32.totalorder %s146, %s147
      %p161 = scmp.eq.s32.totalorder %s25, 1
      %p162 = por %p160, %p161
      %p164 = scmp.ne.s32.totalorder %s147, %s163
      %p165 = scmp.eq.s32.totalorder %s25, 0
      %p166 = por %p164, %p165
      %s167 = sadd.s32 %s26, %s27
      %p168 = scmp.lt.s32.totalorder %s167, 1
      %s169 = scalar_select %p168, %s167, 1
      %s170 = sadd.s32 %s38, %s34
      %p171 = scmp.lt.s32.totalorder %s170, 1
      %s172 = scalar_select %p171, %s170, 1
      %s173 = ssub.s32 %s169, %s172
      %p174 = scmp.eq.s32.totalorder %s173, 0
      %s176 = sadd.s32 %s175, 1
      %s177 = scalar_select %p174, %s175, %s176
      %p180 = pneg %p174
      %p181 = scmp.eq.s32.totalorder %s19, 1
      %p182 = por %p180, %p181
      %p183 = scmp.ne.s32.totalorder %s175, %s178
      %p184 = scmp.eq.s32.totalorder %s19, 0
      %p185 = por %p183, %p184
      %p186 = scmp.ne.s32.totalorder %s175, %s178
      %p187 = scmp.eq.s32.totalorder %s24, 1
      %p188 = por %p186, %p187
      %p189 = scmp.ne.s32.totalorder %s178, %s179
      %p190 = scmp.eq.s32.totalorder %s24, 0
      %p191 = por %p189, %p190
      %p192 = scmp.ne.s32.totalorder %s178, %s179
      %p193 = scmp.eq.s32.totalorder %s25, 1
      %p194 = por %p192, %p193
      %p196 = scmp.ne.s32.totalorder %s179, %s195
      %p197 = scmp.eq.s32.totalorder %s25, 0
      %p198 = por %p196, %p197
      %s199 = sadd.s32 %s26, %s27
      %p200 = scmp.lt.s32.totalorder %s199, 1
      %s201 = scalar_select %p200, %s199, 1
      %s202 = sadd.s32 %s38, %s34
      %p203 = scmp.lt.s32.totalorder %s202, 1
      %s204 = scalar_select %p203, %s202, 1
      %s205 = ssub.s32 %s201, %s204
      %p206 = scmp.eq.s32.totalorder %s205, 0
      %s208 = sadd.s32 %s207, 1
      %s209 = scalar_select %p206, %s207, %s208
      %p212 = pneg %p206
      %p213 = scmp.eq.s32.totalorder %s19, 1
      %p214 = por %p212, %p213
      %p215 = scmp.ne.s32.totalorder %s207, %s210
      %p216 = scmp.eq.s32.totalorder %s19, 0
      %p217 = por %p215, %p216
      %p218 = scmp.ne.s32.totalorder %s207, %s210
      %p219 = scmp.eq.s32.totalorder %s24, 1
      %p220 = por %p218, %p219
      %p221 = scmp.ne.s32.totalorder %s210, %s211
      %p222 = scmp.eq.s32.totalorder %s24, 0
      %p223 = por %p221, %p222
      %p224 = scmp.ne.s32.totalorder %s210, %s211
      %p225 = scmp.eq.s32.totalorder %s25, 1
      %p226 = por %p224, %p225
      %p228 = scmp.ne.s32.totalorder %s211, %s227
      %p229 = scmp.eq.s32.totalorder %s25, 0
      %p230 = por %p228, %p229
      %s232 = sadd.s32 %s231, 1
      %p235 = scmp.eq.s32.totalorder %s19, 1
      %p236 = scmp.ne.s32.totalorder %s231, %s233
      %p237 = scmp.eq.s32.totalorder %s19, 0
      %p238 = por %p236, %p237
      %p239 = scmp.ne.s32.totalorder %s231, %s233
      %p240 = scmp.eq.s32.totalorder %s24, 1
      %p241 = por %p239, %p240
      %p242 = scmp.ne.s32.totalorder %s233, %s234
      %p243 = scmp.eq.s32.totalorder %s24, 0
      %p244 = por %p242, %p243
      %p245 = scmp.ne.s32.totalorder %s233, %s234
      %p246 = scmp.eq.s32.totalorder %s25, 1
      %p247 = por %p245, %p246
      %p249 = scmp.ne.s32.totalorder %s234, %s248
      %p250 = scmp.eq.s32.totalorder %s25, 0
      %p251 = por %p249, %p250
      %s253 = sadd.s32 %s252, 1
      %p256 = scmp.eq.s32.totalorder %s19, 1
      %p257 = scmp.ne.s32.totalorder %s252, %s254
      %p258 = scmp.eq.s32.totalorder %s19, 0
      %p259 = por %p257, %p258
      %p260 = scmp.ne.s32.totalorder %s252, %s254
      %p261 = scmp.eq.s32.totalorder %s24, 1
      %p262 = por %p260, %p261
      %p263 = scmp.ne.s32.totalorder %s254, %s255
      %p264 = scmp.eq.s32.totalorder %s24, 0
      %p265 = por %p263, %p264
      %p266 = scmp.ne.s32.totalorder %s254, %s255
      %p267 = scmp.eq.s32.totalorder %s25, 1
      %p268 = por %p266, %p267
      %p270 = scmp.ne.s32.totalorder %s255, %s269
      %p271 = scmp.eq.s32.totalorder %s25, 0
      %p272 = por %p270, %p271
      %s274 = sadd.s32 %s273, 1
      %p277 = scmp.eq.s32.totalorder %s19, 1
      %p278 = scmp.ne.s32.totalorder %s273, %s275
      %p279 = scmp.eq.s32.totalorder %s19, 0
      %p280 = por %p278, %p279
      %p281 = scmp.ne.s32.totalorder %s273, %s275
      %p282 = scmp.eq.s32.totalorder %s24, 1
      %p283 = por %p281, %p282
      %p284 = scmp.ne.s32.totalorder %s275, %s276
      %p285 = scmp.eq.s32.totalorder %s24, 0
      %p286 = por %p284, %p285
      %p287 = scmp.ne.s32.totalorder %s275, %s276
      %p288 = scmp.eq.s32.totalorder %s25, 1
      %p289 = por %p287, %p288
      %p291 = scmp.ne.s32.totalorder %s276, %s290
      %p292 = scmp.eq.s32.totalorder %s25, 0
      %p293 = por %p291, %p292
      %s295 = sadd.s32 %s294, 1
      %p298 = scmp.eq.s32.totalorder %s19, 1
      %p299 = scmp.ne.s32.totalorder %s294, %s296
      %p300 = scmp.eq.s32.totalorder %s19, 0
      %p301 = por %p299, %p300
      %p302 = scmp.ne.s32.totalorder %s294, %s296
      %p303 = scmp.eq.s32.totalorder %s24, 1
      %p304 = por %p302, %p303
      %p305 = scmp.ne.s32.totalorder %s296, %s297
      %p306 = scmp.eq.s32.totalorder %s24, 0
      %p307 = por %p305, %p306
      %p308 = scmp.ne.s32.totalorder %s296, %s297
      %p309 = scmp.eq.s32.totalorder %s25, 1
      %p310 = por %p308, %p309
      %p312 = scmp.ne.s32.totalorder %s297, %s311
      %p313 = scmp.eq.s32.totalorder %s25, 0
      %p314 = por %p312, %p313
      %s315 = ssub.s32 %s26, %s38
      %p316 = scmp.eq.s32.totalorder %s315, 0
      %s318 = sadd.s32 %s317, 1
      %s319 = scalar_select %p316, %s317, %s318
      %p322 = pneg %p316
      %p323 = scmp.eq.s32.totalorder %s19, 1
      %p324 = por %p322, %p323
      %p325 = scmp.ne.s32.totalorder %s317, %s320
      %p326 = scmp.eq.s32.totalorder %s19, 0
      %p327 = por %p325, %p326
      %p328 = scmp.ne.s32.totalorder %s317, %s320
      %p329 = scmp.eq.s32.totalorder %s24, 1
      %p330 = por %p328, %p329
      %p331 = scmp.ne.s32.totalorder %s320, %s321
      %p332 = scmp.eq.s32.totalorder %s24, 0
      %p333 = por %p331, %p332
      %p334 = scmp.ne.s32.totalorder %s320, %s321
      %p335 = scmp.eq.s32.totalorder %s25, 1
      %p336 = por %p334, %p335
      %p338 = scmp.ne.s32.totalorder %s321, %s337
      %p339 = scmp.eq.s32.totalorder %s25, 0
      %p340 = por %p338, %p339
      %p341 = scmp.le.s32.totalorder 1, %s19
      %p342 = scmp.lt.s32.totalorder %s19, 3
      %p343 = pnand %p341, %p342
      %p344 = pneg %p343
      // Predicated region
      $region9: #{tpu_custom_call.1} parent=5 // pred_check
        _
      $region10: #{tpu_custom_call.1} parent=5 // pred_check_branch
        %346 = sbr.rel (%p343) target = $region12
      $region11: #{tpu_custom_call.1} parent=5 // pred_region
        %s347 = ssub.s32 %s19, 1
        // Predicated region
        $region13: #{tpu_custom_call.1} parent=11 // pred_check
          %p348 = pneg %p244
        $region14: #{tpu_custom_call.1} parent=11 // pred_check_branch
          %350 = sbr.rel (%p348) target = $region16
        $region15: #{tpu_custom_call.1} parent=11 // pred_region
          _
        $region16: #{tpu_custom_call.1} parent=11 // pred_fallthru
          _
        // Predicated region
        $region17: #{tpu_custom_call.1} parent=11 // pred_check
          %p351 = pneg %p265
        $region18: #{tpu_custom_call.1} parent=11 // pred_check_branch
          %353 = sbr.rel (%p351) target = $region20
        $region19: #{tpu_custom_call.1} parent=11 // pred_region
          _
        $region20: #{tpu_custom_call.1} parent=11 // pred_fallthru
          _
        // Predicated region
        $region21: #{tpu_custom_call.1} parent=11 // pred_check
          %p354 = pneg %p286
        $region22: #{tpu_custom_call.1} parent=11 // pred_check_branch
          %356 = sbr.rel (%p354) target = $region24
        $region23: #{tpu_custom_call.1} parent=11 // pred_region
          _
        $region24: #{tpu_custom_call.1} parent=11 // pred_fallthru
          _
        // Predicated region
        $region25: #{tpu_custom_call.1} parent=11 // pred_check
          %p357 = pneg %p307
        $region26: #{tpu_custom_call.1} parent=11 // pred_check_branch
          %359 = sbr.rel (%p357) target = $region28
        $region27: #{tpu_custom_call.1} parent=11 // pred_region
          _
        $region28: #{tpu_custom_call.1} parent=11 // pred_fallthru
          _
      $region12: #{tpu_custom_call.1} parent=5 // pred_fallthru
        _
      %p360 = scmp.lt.s32.totalorder %s19, 2
      // Predicated region
      $region29: #{tpu_custom_call.1} parent=5 // pred_check
        %p361 = pneg %p360
      $region30: #{tpu_custom_call.1} parent=5 // pred_check_branch
        %363 = sbr.rel (%p361) target = $region32
      $region31: #{tpu_custom_call.1} parent=5 // pred_region
        // Predicated region
        $region33: #{tpu_custom_call.1} parent=31 // pred_check
          %p364 = pneg %p57
        $region34: #{tpu_custom_call.1} parent=31 // pred_check_branch
          %366 = sbr.rel (%p364) target = $region36
        $region35: #{tpu_custom_call.1} parent=31 // pred_region
          %s367 = sand.u32 %s47, 1
          %s368 = sand.u32 %s47, 1
          %s369 = smul.addr %s368, 256
          %s370 = scalar_lea.vmem [#allocation6], %s369
          %s371 = sadd.s32 %s26, %s27
          %p372 = scmp.lt.s32.totalorder %s371, 1
          %s373 = scalar_select %p372, %s371, 1
          %s374 = smul.u32 32, %s373
          %s375 = ssub.s32 38, %s374
          %p376 = scmp.lt.s32.totalorder %s375, 32
          %s377 = scalar_select %p376, %s375, 32
          %s378 = smul.u32 128, %s377
          %p379 = scmp.ne.s32.totalorder 0, %s378
          %s380 = smul.addr %s374, 4
          %s381 = scalar_lea.vmem %s0, %s380
          // Predicated region
          $region37: #{tpu_custom_call.1} parent=35 // pred_check
            %p382 = pneg %p379
          $region38: #{tpu_custom_call.1} parent=35 // pred_check_branch
            %384 = sbr.rel (%p382) target = $region40
          $region39: #{tpu_custom_call.1} parent=35 // pred_region
            // Predicated region
            $region41: #{tpu_custom_call.1} parent=39 // pred_check
              _
            $region42: #{tpu_custom_call.1} parent=39 // pred_check_branch
              %386 = sbr.rel target = $region44
            $region43: #{tpu_custom_call.1} parent=39 // pred_region
              // Predicated region
              $region63: #{tpu_custom_call.1} parent=43 // pred_check
                _
              $region64: #{tpu_custom_call.1} parent=43 // pred_check_branch
                %564 = sbr.rel (0) target = $region66
              $region65: #{tpu_custom_call.1} parent=43 // pred_region
                %s565 = sshrl.u32 %s377, 5
                // While loop
                $region67: #{tpu_custom_call.1} parent=65 // loop_pre_header
                  _
                $region68: #{tpu_custom_call.1} parent=65 // loop_header
                  %s567 = sphi 0, %s569
                  %p568 = scmp.ge.s32.totalorder %s567, %s565
                  %s572 = sphi 0, %s577
                  %s573 = sphi %s381, %s580
                  %s574 = sphi %s370, %s581
                $region69: #{tpu_custom_call.1} parent=65 // loop_header_branch
                  %571 = sbr.rel (%p568) target = $region73
                $region70: #{tpu_custom_call.1} parent=65 // loop_body
                  %s575 = sadd.s32 1, %s572
                  %p576 = scmp.ge.s32.totalorder %s575, %s565
                  %s577 = scalar_select %p576, 0, %s575
                  %s578 = smul.u32 %s577, 128
                  %s579 = smul.u32 %s577, 128
                  %s580 = scalar_lea.vmem %s381, %s578
                  %s581 = scalar_lea.vmem %s370, %s579 [#allocation6]
                $region71: #{tpu_custom_call.1} parent=65 // loop_footer
                  %s569 = sadd.s32 %s567, 1
                $region72: #{tpu_custom_call.1} parent=65 // loop_footer_branch
                  %566 = sbr.rel target = $region68
                $region73: #{tpu_custom_call.1} parent=65 // loop_exit
                  _
                %s582 = sshrl.u32 %s377, 5
                %s583 = sand.u32 %s377, 31
                %s584 = smul.u32 %s582, 32
                %s585 = smul.u32 4, %s584
                %s586 = scalar_lea.vmem %s381, %s585
                %s587 = smul.u32 4, %s584
                %s588 = scalar_lea.vmem %s370, %s587 [#allocation6]
                // While loop
                $region74: #{tpu_custom_call.1} parent=65 // loop_pre_header
                  _
                $region75: #{tpu_custom_call.1} parent=65 // loop_header
                  %s590 = sphi 0, %s592
                  %p591 = scmp.ge.s32.totalorder %s590, %s583
                  %s595 = sphi 0, %s600
                  %s596 = sphi %s586, %s603
                  %s597 = sphi %s588, %s604
                $region76: #{tpu_custom_call.1} parent=65 // loop_header_branch
                  %594 = sbr.rel (%p591) target = $region80
                $region77: #{tpu_custom_call.1} parent=65 // loop_body
                  %s598 = sadd.s32 1, %s595
                  %p599 = scmp.ge.s32.totalorder %s598, %s583
                  %s600 = scalar_select %p599, 0, %s598
                  %s601 = smul.u32 %s600, 4
                  %s602 = smul.u32 %s600, 4
                  %s603 = scalar_lea.vmem %s586, %s601
                  %s604 = scalar_lea.vmem %s588, %s602 [#allocation6]
                $region78: #{tpu_custom_call.1} parent=65 // loop_footer
                  %s592 = sadd.s32 %s590, 1
                $region79: #{tpu_custom_call.1} parent=65 // loop_footer_branch
                  %589 = sbr.rel target = $region75
                $region80: #{tpu_custom_call.1} parent=65 // loop_exit
                  _
                %s606 = ssub.s32 16, 1
                %s607 = sshrl.u32 %s377, 5
                // While loop
                $region81: #{tpu_custom_call.1} parent=65 // loop_pre_header
                  _
                $region82: #{tpu_custom_call.1} parent=65 // loop_header
                  %s609 = sphi 0, %s611
                  %p610 = scmp.ge.s32.totalorder %s609, %s607
                  %s614 = sphi 0, %s747
                  %s615 = sphi %s381, %s750
                  %s616 = sphi %s370, %s751
                $region83: #{tpu_custom_call.1} parent=65 // loop_header_branch
                  %613 = sbr.rel (%p610) target = $region87
                $region84: #{tpu_custom_call.1} parent=65 // loop_body
                  %v617 = vld [vmem:[%s615] sm:%s606]
                  %618 = vst [vmem:[%s616] sm:%s606] %v617
                  %v619 = vld [vmem:[%s615 + $0x4] sm:%s606]
                  %620 = vst [vmem:[%s616 + $0x4] sm:%s606] %v619
                  %v621 = vld [vmem:[%s615 + $0x8] sm:%s606]
                  %622 = vst [vmem:[%s616 + $0x8] sm:%s606] %v621
                  %v623 = vld [vmem:[%s615 + $0xc] sm:%s606]
                  %624 = vst [vmem:[%s616 + $0xc] sm:%s606] %v623
                  %v625 = vld [vmem:[%s615 + $0x10] sm:%s606]
                  %626 = vst [vmem:[%s616 + $0x10] sm:%s606] %v625
                  %v627 = vld [vmem:[%s615 + $0x14] sm:%s606]
                  %628 = vst [vmem:[%s616 + $0x14] sm:%s606] %v627
                  %v629 = vld [vmem:[%s615 + $0x18] sm:%s606]
                  %630 = vst [vmem:[%s616 + $0x18] sm:%s606] %v629
                  %v631 = vld [vmem:[%s615 + $0x1c] sm:%s606]
                  %632 = vst [vmem:[%s616 + $0x1c] sm:%s606] %v631
                  %v633 = vld [vmem:[%s615 + $0x20] sm:%s606]
                  %634 = vst [vmem:[%s616 + $0x20] sm:%s606] %v633
                  %v635 = vld [vmem:[%s615 + $0x24] sm:%s606]
                  %636 = vst [vmem:[%s616 + $0x24] sm:%s606] %v635
                  %v637 = vld [vmem:[%s615 + $0x28] sm:%s606]
                  %638 = vst [vmem:[%s616 + $0x28] sm:%s606] %v637
                  %v639 = vld [vmem:[%s615 + $0x2c] sm:%s606]
                  %640 = vst [vmem:[%s616 + $0x2c] sm:%s606] %v639
                  %v641 = vld [vmem:[%s615 + $0x30] sm:%s606]
                  %642 = vst [vmem:[%s616 + $0x30] sm:%s606] %v641
                  %v643 = vld [vmem:[%s615 + $0x34] sm:%s606]
                  %644 = vst [vmem:[%s616 + $0x34] sm:%s606] %v643
                  %v645 = vld [vmem:[%s615 + $0x38] sm:%s606]
                  %646 = vst [vmem:[%s616 + $0x38] sm:%s606] %v645
                  %v647 = vld [vmem:[%s615 + $0x3c] sm:%s606]
                  %648 = vst [vmem:[%s616 + $0x3c] sm:%s606] %v647
                  %v649 = vld [vmem:[%s615 + $0x40] sm:%s606]
                  %650 = vst [vmem:[%s616 + $0x40] sm:%s606] %v649
                  %v651 = vld [vmem:[%s615 + $0x44] sm:%s606]
                  %652 = vst [vmem:[%s616 + $0x44] sm:%s606] %v651
                  %v653 = vld [vmem:[%s615 + $0x48] sm:%s606]
                  %654 = vst [vmem:[%s616 + $0x48] sm:%s606] %v653
                  %v655 = vld [vmem:[%s615 + $0x4c] sm:%s606]
                  %656 = vst [vmem:[%s616 + $0x4c] sm:%s606] %v655
                  %v657 = vld [vmem:[%s615 + $0x50] sm:%s606]
                  %658 = vst [vmem:[%s616 + $0x50] sm:%s606] %v657
                  %v659 = vld [vmem:[%s615 + $0x54] sm:%s606]
                  %660 = vst [vmem:[%s616 + $0x54] sm:%s606] %v659
                  %v661 = vld [vmem:[%s615 + $0x58] sm:%s606]
                  %662 = vst [vmem:[%s616 + $0x58] sm:%s606] %v661
                  %v663 = vld [vmem:[%s615 + $0x5c] sm:%s606]
                  %664 = vst [vmem:[%s616 + $0x5c] sm:%s606] %v663
                  %v665 = vld [vmem:[%s615 + $0x60] sm:%s606]
                  %666 = vst [vmem:[%s616 + $0x60] sm:%s606] %v665
                  %v667 = vld [vmem:[%s615 + $0x64] sm:%s606]
                  %668 = vst [vmem:[%s616 + $0x64] sm:%s606] %v667
                  %v669 = vld [vmem:[%s615 + $0x68] sm:%s606]
                  %670 = vst [vmem:[%s616 + $0x68] sm:%s606] %v669
                  %v671 = vld [vmem:[%s615 + $0x6c] sm:%s606]
                  %672 = vst [vmem:[%s616 + $0x6c] sm:%s606] %v671
                  %v673 = vld [vmem:[%s615 + $0x70] sm:%s606]
                  %674 = vst [vmem:[%s616 + $0x70] sm:%s606] %v673
                  %v675 = vld [vmem:[%s615 + $0x74] sm:%s606]
                  %676 = vst [vmem:[%s616 + $0x74] sm:%s606] %v675
                  %v677 = vld [vmem:[%s615 + $0x78] sm:%s606]
                  %678 = vst [vmem:[%s616 + $0x78] sm:%s606] %v677
                  %v679 = vld [vmem:[%s615 + $0x7c] sm:%s606]
                  %680 = vst [vmem:[%s616 + $0x7c] sm:%s606] %v679
                  %v681 = vld [vmem:[%s615 + $0x98] sm:%s606]
                  %682 = vst [vmem:[%s616 + $0x80] sm:%s606] %v681
                  %v683 = vld [vmem:[%s615 + $0x9c] sm:%s606]
                  %684 = vst [vmem:[%s616 + $0x84] sm:%s606] %v683
                  %v685 = vld [vmem:[%s615 + $0xa0] sm:%s606]
                  %686 = vst [vmem:[%s616 + $0x88] sm:%s606] %v685
                  %v687 = vld [vmem:[%s615 + $0xa4] sm:%s606]
                  %688 = vst [vmem:[%s616 + $0x8c] sm:%s606] %v687
                  %v689 = vld [vmem:[%s615 + $0xa8] sm:%s606]
                  %690 = vst [vmem:[%s616 + $0x90] sm:%s606] %v689
                  %v691 = vld [vmem:[%s615 + $0xac] sm:%s606]
                  %692 = vst [vmem:[%s616 + $0x94] sm:%s606] %v691
                  %v693 = vld [vmem:[%s615 + $0xb0] sm:%s606]
                  %694 = vst [vmem:[%s616 + $0x98] sm:%s606] %v693
                  %v695 = vld [vmem:[%s615 + $0xb4] sm:%s606]
                  %696 = vst [vmem:[%s616 + $0x9c] sm:%s606] %v695
                  %v697 = vld [vmem:[%s615 + $0xb8] sm:%s606]
                  %698 = vst [vmem:[%s616 + $0xa0] sm:%s606] %v697
                  %v699 = vld [vmem:[%s615 + $0xbc] sm:%s606]
                  %700 = vst [vmem:[%s616 + $0xa4] sm:%s606] %v699
                  %v701 = vld [vmem:[%s615 + $0xc0] sm:%s606]
                  %702 = vst [vmem:[%s616 + $0xa8] sm:%s606] %v701
                  %v703 = vld [vmem:[%s615 + $0xc4] sm:%s606]
                  %704 = vst [vmem:[%s616 + $0xac] sm:%s606] %v703
                  %v705 = vld [vmem:[%s615 + $0xc8] sm:%s606]
                  %706 = vst [vmem:[%s616 + $0xb0] sm:%s606] %v705
                  %v707 = vld [vmem:[%s615 + $0xcc] sm:%s606]
                  %708 = vst [vmem:[%s616 + $0xb4] sm:%s606] %v707
                  %v709 = vld [vmem:[%s615 + $0xd0] sm:%s606]
                  %710 = vst [vmem:[%s616 + $0xb8] sm:%s606] %v709
                  %v711 = vld [vmem:[%s615 + $0xd4] sm:%s606]
                  %712 = vst [vmem:[%s616 + $0xbc] sm:%s606] %v711
                  %v713 = vld [vmem:[%s615 + $0xd8] sm:%s606]
                  %714 = vst [vmem:[%s616 + $0xc0] sm:%s606] %v713
                  %v715 = vld [vmem:[%s615 + $0xdc] sm:%s606]
                  %716 = vst [vmem:[%s616 + $0xc4] sm:%s606] %v715
                  %v717 = vld [vmem:[%s615 + $0xe0] sm:%s606]
                  %718 = vst [vmem:[%s616 + $0xc8] sm:%s606] %v717
                  %v719 = vld [vmem:[%s615 + $0xe4] sm:%s606]
                  %720 = vst [vmem:[%s616 + $0xcc] sm:%s606] %v719
                  %v721 = vld [vmem:[%s615 + $0xe8] sm:%s606]
                  %722 = vst [vmem:[%s616 + $0xd0] sm:%s606] %v721
                  %v723 = vld [vmem:[%s615 + $0xec] sm:%s606]
                  %724 = vst [vmem:[%s616 + $0xd4] sm:%s606] %v723
                  %v725 = vld [vmem:[%s615 + $0xf0] sm:%s606]
                  %726 = vst [vmem:[%s616 + $0xd8] sm:%s606] %v725
                  %v727 = vld [vmem:[%s615 + $0xf4] sm:%s606]
                  %728 = vst [vmem:[%s616 + $0xdc] sm:%s606] %v727
                  %v729 = vld [vmem:[%s615 + $0xf8] sm:%s606]
                  %730 = vst [vmem:[%s616 + $0xe0] sm:%s606] %v729
                  %v731 = vld [vmem:[%s615 + $0xfc] sm:%s606]
                  %732 = vst [vmem:[%s616 + $0xe4] sm:%s606] %v731
                  %v733 = vld [vmem:[%s615 + $0x100] sm:%s606]
                  %734 = vst [vmem:[%s616 + $0xe8] sm:%s606] %v733
                  %v735 = vld [vmem:[%s615 + $0x104] sm:%s606]
                  %736 = vst [vmem:[%s616 + $0xec] sm:%s606] %v735
                  %v737 = vld [vmem:[%s615 + $0x108] sm:%s606]
                  %738 = vst [vmem:[%s616 + $0xf0] sm:%s606] %v737
                  %v739 = vld [vmem:[%s615 + $0x10c] sm:%s606]
                  %740 = vst [vmem:[%s616 + $0xf4] sm:%s606] %v739
                  %v741 = vld [vmem:[%s615 + $0x110] sm:%s606]
                  %742 = vst [vmem:[%s616 + $0xf8] sm:%s606] %v741
                  %v743 = vld [vmem:[%s615 + $0x114] sm:%s606]
                  %744 = vst [vmem:[%s616 + $0xfc] sm:%s606] %v743
                  %s745 = sadd.s32 1, %s614
                  %p746 = scmp.ge.s32.totalorder %s745, %s607
                  %s747 = scalar_select %p746, 0, %s745
                  %s748 = smul.u32 %s747, 128
                  %s749 = smul.u32 %s747, 128
                  %s750 = scalar_lea.vmem %s381, %s748
                  %s751 = scalar_lea.vmem %s370, %s749 [#allocation6]
                $region85: #{tpu_custom_call.1} parent=65 // loop_footer
                  %s611 = sadd.s32 %s609, 1
                $region86: #{tpu_custom_call.1} parent=65 // loop_footer_branch
                  %608 = sbr.rel target = $region82
                $region87: #{tpu_custom_call.1} parent=65 // loop_exit
                  _
                %s752 = sshrl.u32 %s377, 5
                %s753 = sand.u32 %s377, 31
                %s754 = smul.u32 %s752, 32
                %s755 = smul.u32 4, %s754
                %s756 = scalar_lea.vmem %s381, %s755
                %s757 = smul.u32 4, %s754
                %s758 = scalar_lea.vmem %s370, %s757 [#allocation6]
                // While loop
                $region88: #{tpu_custom_call.1} parent=65 // loop_pre_header
                  _
                $region89: #{tpu_custom_call.1} parent=65 // loop_header
                  %s760 = sphi 0, %s762
                  %p761 = scmp.ge.s32.totalorder %s760, %s753
                  %s765 = sphi 0, %s774
                  %s766 = sphi %s756, %s777
                  %s767 = sphi %s758, %s778
                $region90: #{tpu_custom_call.1} parent=65 // loop_header_branch
                  %764 = sbr.rel (%p761) target = $region94
                $region91: #{tpu_custom_call.1} parent=65 // loop_body
                  %v768 = vld [vmem:[%s766] sm:%s606]
                  %769 = vst [vmem:[%s767] sm:%s606] %v768
                  %v770 = vld [vmem:[%s766 + $0x98] sm:%s606]
                  %771 = vst [vmem:[%s767 + $0x80] sm:%s606] %v770
                  %s772 = sadd.s32 1, %s765
                  %p773 = scmp.ge.s32.totalorder %s772, %s753
                  %s774 = scalar_select %p773, 0, %s772
                  %s775 = smul.u32 %s774, 4
                  %s776 = smul.u32 %s774, 4
                  %s777 = scalar_lea.vmem %s756, %s775
                  %s778 = scalar_lea.vmem %s758, %s776 [#allocation6]
                $region92: #{tpu_custom_call.1} parent=65 // loop_footer
                  %s762 = sadd.s32 %s760, 1
                $region93: #{tpu_custom_call.1} parent=65 // loop_footer_branch
                  %759 = sbr.rel target = $region89
                $region94: #{tpu_custom_call.1} parent=65 // loop_exit
                  _
              $region66: #{tpu_custom_call.1} parent=43 // pred_fallthru
                _
            $region44: #{tpu_custom_call.1} parent=39 // pred_fallthru
              _
            // Predicated region
            $region45: #{tpu_custom_call.1} parent=39 // pred_check
              _
            $region46: #{tpu_custom_call.1} parent=39 // pred_check_branch
              %388 = sbr.rel (0) target = $region48
            $region47: #{tpu_custom_call.1} parent=39 // pred_region
              %s390 = ssub.s32 16, 1
              %s391 = sshrl.u32 %s377, 5
              // While loop
              $region49: #{tpu_custom_call.1} parent=47 // loop_pre_header
                _
              $region50: #{tpu_custom_call.1} parent=47 // loop_header
                %s393 = sphi 0, %s395
                %p394 = scmp.ge.s32.totalorder %s393, %s391
                %s398 = sphi 0, %s531
                %s399 = sphi %s381, %s534
                %s400 = sphi %s370, %s535
              $region51: #{tpu_custom_call.1} parent=47 // loop_header_branch
                %397 = sbr.rel (%p394) target = $region55
              $region52: #{tpu_custom_call.1} parent=47 // loop_body
                %v401 = vld [vmem:[%s399] sm:%s390]
                %402 = vst [vmem:[%s400] sm:%s390] %v401
                %v403 = vld [vmem:[%s399 + $0x4] sm:%s390]
                %404 = vst [vmem:[%s400 + $0x4] sm:%s390] %v403
                %v405 = vld [vmem:[%s399 + $0x8] sm:%s390]
                %406 = vst [vmem:[%s400 + $0x8] sm:%s390] %v405
                %v407 = vld [vmem:[%s399 + $0xc] sm:%s390]
                %408 = vst [vmem:[%s400 + $0xc] sm:%s390] %v407
                %v409 = vld [vmem:[%s399 + $0x10] sm:%s390]
                %410 = vst [vmem:[%s400 + $0x10] sm:%s390] %v409
                %v411 = vld [vmem:[%s399 + $0x14] sm:%s390]
                %412 = vst [vmem:[%s400 + $0x14] sm:%s390] %v411
                %v413 = vld [vmem:[%s399 + $0x18] sm:%s390]
                %414 = vst [vmem:[%s400 + $0x18] sm:%s390] %v413
                %v415 = vld [vmem:[%s399 + $0x1c] sm:%s390]
                %416 = vst [vmem:[%s400 + $0x1c] sm:%s390] %v415
                %v417 = vld [vmem:[%s399 + $0x20] sm:%s390]
                %418 = vst [vmem:[%s400 + $0x20] sm:%s390] %v417
                %v419 = vld [vmem:[%s399 + $0x24] sm:%s390]
                %420 = vst [vmem:[%s400 + $0x24] sm:%s390] %v419
                %v421 = vld [vmem:[%s399 + $0x28] sm:%s390]
                %422 = vst [vmem:[%s400 + $0x28] sm:%s390] %v421
                %v423 = vld [vmem:[%s399 + $0x2c] sm:%s390]
                %424 = vst [vmem:[%s400 + $0x2c] sm:%s390] %v423
                %v425 = vld [vmem:[%s399 + $0x30] sm:%s390]
                %426 = vst [vmem:[%s400 + $0x30] sm:%s390] %v425
                %v427 = vld [vmem:[%s399 + $0x34] sm:%s390]
                %428 = vst [vmem:[%s400 + $0x34] sm:%s390] %v427
                %v429 = vld [vmem:[%s399 + $0x38] sm:%s390]
                %430 = vst [vmem:[%s400 + $0x38] sm:%s390] %v429
                %v431 = vld [vmem:[%s399 + $0x3c] sm:%s390]
                %432 = vst [vmem:[%s400 + $0x3c] sm:%s390] %v431
                %v433 = vld [vmem:[%s399 + $0x40] sm:%s390]
                %434 = vst [vmem:[%s400 + $0x40] sm:%s390] %v433
                %v435 = vld [vmem:[%s399 + $0x44] sm:%s390]
                %436 = vst [vmem:[%s400 + $0x44] sm:%s390] %v435
                %v437 = vld [vmem:[%s399 + $0x48] sm:%s390]
                %438 = vst [vmem:[%s400 + $0x48] sm:%s390] %v437
                %v439 = vld [vmem:[%s399 + $0x4c] sm:%s390]
                %440 = vst [vmem:[%s400 + $0x4c] sm:%s390] %v439
                %v441 = vld [vmem:[%s399 + $0x50] sm:%s390]
                %442 = vst [vmem:[%s400 + $0x50] sm:%s390] %v441
                %v443 = vld [vmem:[%s399 + $0x54] sm:%s390]
                %444 = vst [vmem:[%s400 + $0x54] sm:%s390] %v443
                %v445 = vld [vmem:[%s399 + $0x58] sm:%s390]
                %446 = vst [vmem:[%s400 + $0x58] sm:%s390] %v445
                %v447 = vld [vmem:[%s399 + $0x5c] sm:%s390]
                %448 = vst [vmem:[%s400 + $0x5c] sm:%s390] %v447
                %v449 = vld [vmem:[%s399 + $0x60] sm:%s390]
                %450 = vst [vmem:[%s400 + $0x60] sm:%s390] %v449
                %v451 = vld [vmem:[%s399 + $0x64] sm:%s390]
                %452 = vst [vmem:[%s400 + $0x64] sm:%s390] %v451
                %v453 = vld [vmem:[%s399 + $0x68] sm:%s390]
                %454 = vst [vmem:[%s400 + $0x68] sm:%s390] %v453
                %v455 = vld [vmem:[%s399 + $0x6c] sm:%s390]
                %456 = vst [vmem:[%s400 + $0x6c] sm:%s390] %v455
                %v457 = vld [vmem:[%s399 + $0x70] sm:%s390]
                %458 = vst [vmem:[%s400 + $0x70] sm:%s390] %v457
                %v459 = vld [vmem:[%s399 + $0x74] sm:%s390]
                %460 = vst [vmem:[%s400 + $0x74] sm:%s390] %v459
                %v461 = vld [vmem:[%s399 + $0x78] sm:%s390]
                %462 = vst [vmem:[%s400 + $0x78] sm:%s390] %v461
                %v463 = vld [vmem:[%s399 + $0x7c] sm:%s390]
                %464 = vst [vmem:[%s400 + $0x7c] sm:%s390] %v463
                %v465 = vld [vmem:[%s399 + $0x98] sm:%s390]
                %466 = vst [vmem:[%s400 + $0x80] sm:%s390] %v465
                %v467 = vld [vmem:[%s399 + $0x9c] sm:%s390]
                %468 = vst [vmem:[%s400 + $0x84] sm:%s390] %v467
                %v469 = vld [vmem:[%s399 + $0xa0] sm:%s390]
                %470 = vst [vmem:[%s400 + $0x88] sm:%s390] %v469
                %v471 = vld [vmem:[%s399 + $0xa4] sm:%s390]
                %472 = vst [vmem:[%s400 + $0x8c] sm:%s390] %v471
                %v473 = vld [vmem:[%s399 + $0xa8] sm:%s390]
                %474 = vst [vmem:[%s400 + $0x90] sm:%s390] %v473
                %v475 = vld [vmem:[%s399 + $0xac] sm:%s390]
                %476 = vst [vmem:[%s400 + $0x94] sm:%s390] %v475
                %v477 = vld [vmem:[%s399 + $0xb0] sm:%s390]
                %478 = vst [vmem:[%s400 + $0x98] sm:%s390] %v477
                %v479 = vld [vmem:[%s399 + $0xb4] sm:%s390]
                %480 = vst [vmem:[%s400 + $0x9c] sm:%s390] %v479
                %v481 = vld [vmem:[%s399 + $0xb8] sm:%s390]
                %482 = vst [vmem:[%s400 + $0xa0] sm:%s390] %v481
                %v483 = vld [vmem:[%s399 + $0xbc] sm:%s390]
                %484 = vst [vmem:[%s400 + $0xa4] sm:%s390] %v483
                %v485 = vld [vmem:[%s399 + $0xc0] sm:%s390]
                %486 = vst [vmem:[%s400 + $0xa8] sm:%s390] %v485
                %v487 = vld [vmem:[%s399 + $0xc4] sm:%s390]
                %488 = vst [vmem:[%s400 + $0xac] sm:%s390] %v487
                %v489 = vld [vmem:[%s399 + $0xc8] sm:%s390]
                %490 = vst [vmem:[%s400 + $0xb0] sm:%s390] %v489
                %v491 = vld [vmem:[%s399 + $0xcc] sm:%s390]
                %492 = vst [vmem:[%s400 + $0xb4] sm:%s390] %v491
                %v493 = vld [vmem:[%s399 + $0xd0] sm:%s390]
                %494 = vst [vmem:[%s400 + $0xb8] sm:%s390] %v493
                %v495 = vld [vmem:[%s399 + $0xd4] sm:%s390]
                %496 = vst [vmem:[%s400 + $0xbc] sm:%s390] %v495
                %v497 = vld [vmem:[%s399 + $0xd8] sm:%s390]
                %498 = vst [vmem:[%s400 + $0xc0] sm:%s390] %v497
                %v499 = vld [vmem:[%s399 + $0xdc] sm:%s390]
                %500 = vst [vmem:[%s400 + $0xc4] sm:%s390] %v499
                %v501 = vld [vmem:[%s399 + $0xe0] sm:%s390]
                %502 = vst [vmem:[%s400 + $0xc8] sm:%s390] %v501
                %v503 = vld [vmem:[%s399 + $0xe4] sm:%s390]
                %504 = vst [vmem:[%s400 + $0xcc] sm:%s390] %v503
                %v505 = vld [vmem:[%s399 + $0xe8] sm:%s390]
                %506 = vst [vmem:[%s400 + $0xd0] sm:%s390] %v505
                %v507 = vld [vmem:[%s399 + $0xec] sm:%s390]
                %508 = vst [vmem:[%s400 + $0xd4] sm:%s390] %v507
                %v509 = vld [vmem:[%s399 + $0xf0] sm:%s390]
                %510 = vst [vmem:[%s400 + $0xd8] sm:%s390] %v509
                %v511 = vld [vmem:[%s399 + $0xf4] sm:%s390]
                %512 = vst [vmem:[%s400 + $0xdc] sm:%s390] %v511
                %v513 = vld [vmem:[%s399 + $0xf8] sm:%s390]
                %514 = vst [vmem:[%s400 + $0xe0] sm:%s390] %v513
                %v515 = vld [vmem:[%s399 + $0xfc] sm:%s390]
                %516 = vst [vmem:[%s400 + $0xe4] sm:%s390] %v515
                %v517 = vld [vmem:[%s399 + $0x100] sm:%s390]
                %518 = vst [vmem:[%s400 + $0xe8] sm:%s390] %v517
                %v519 = vld [vmem:[%s399 + $0x104] sm:%s390]
                %520 = vst [vmem:[%s400 + $0xec] sm:%s390] %v519
                %v521 = vld [vmem:[%s399 + $0x108] sm:%s390]
                %522 = vst [vmem:[%s400 + $0xf0] sm:%s390] %v521
                %v523 = vld [vmem:[%s399 + $0x10c] sm:%s390]
                %524 = vst [vmem:[%s400 + $0xf4] sm:%s390] %v523
                %v525 = vld [vmem:[%s399 + $0x110] sm:%s390]
                %526 = vst [vmem:[%s400 + $0xf8] sm:%s390] %v525
                %v527 = vld [vmem:[%s399 + $0x114] sm:%s390]
                %528 = vst [vmem:[%s400 + $0xfc] sm:%s390] %v527
                %s529 = sadd.s32 1, %s398
                %p530 = scmp.ge.s32.totalorder %s529, %s391
                %s531 = scalar_select %p530, 0, %s529
                %s532 = smul.u32 %s531, 128
                %s533 = smul.u32 %s531, 128
                %s534 = scalar_lea.vmem %s381, %s532
                %s535 = scalar_lea.vmem %s370, %s533 [#allocation6]
              $region53: #{tpu_custom_call.1} parent=47 // loop_footer
                %s395 = sadd.s32 %s393, 1
              $region54: #{tpu_custom_call.1} parent=47 // loop_footer_branch
                %392 = sbr.rel target = $region50
              $region55: #{tpu_custom_call.1} parent=47 // loop_exit
                _
              %s536 = sshrl.u32 %s377, 5
              %s537 = sand.u32 %s377, 31
              %s538 = smul.u32 %s536, 32
              %s539 = smul.u32 4, %s538
              %s540 = scalar_lea.vmem %s381, %s539
              %s541 = smul.u32 4, %s538
              %s542 = scalar_lea.vmem %s370, %s541 [#allocation6]
              // While loop
              $region56: #{tpu_custom_call.1} parent=47 // loop_pre_header
                _
              $region57: #{tpu_custom_call.1} parent=47 // loop_header
                %s544 = sphi 0, %s546
                %p545 = scmp.ge.s32.totalorder %s544, %s537
                %s549 = sphi 0, %s558
                %s550 = sphi %s540, %s561
                %s551 = sphi %s542, %s562
              $region58: #{tpu_custom_call.1} parent=47 // loop_header_branch
                %548 = sbr.rel (%p545) target = $region62
              $region59: #{tpu_custom_call.1} parent=47 // loop_body
                %v552 = vld [vmem:[%s550] sm:%s390]
                %553 = vst [vmem:[%s551] sm:%s390] %v552
                %v554 = vld [vmem:[%s550 + $0x98] sm:%s390]
                %555 = vst [vmem:[%s551 + $0x80] sm:%s390] %v554
                %s556 = sadd.s32 1, %s549
                %p557 = scmp.ge.s32.totalorder %s556, %s537
                %s558 = scalar_select %p557, 0, %s556
                %s559 = smul.u32 %s558, 4
                %s560 = smul.u32 %s558, 4
                %s561 = scalar_lea.vmem %s540, %s559
                %s562 = scalar_lea.vmem %s542, %s560 [#allocation6]
              $region60: #{tpu_custom_call.1} parent=47 // loop_footer
                %s546 = sadd.s32 %s544, 1
              $region61: #{tpu_custom_call.1} parent=47 // loop_footer_branch
                %543 = sbr.rel target = $region57
              $region62: #{tpu_custom_call.1} parent=47 // loop_exit
                _
            $region48: #{tpu_custom_call.1} parent=39 // pred_fallthru
              _
          $region40: #{tpu_custom_call.1} parent=35 // pred_fallthru
            _
          %779 = vnop
        $region36: #{tpu_custom_call.1} parent=31 // pred_fallthru
          _
        // Predicated region
        $region95: #{tpu_custom_call.1} parent=31 // pred_check
          %p780 = pneg %p89
        $region96: #{tpu_custom_call.1} parent=31 // pred_check_branch
          %782 = sbr.rel (%p780) target = $region98
        $region97: #{tpu_custom_call.1} parent=31 // pred_region
          %s783 = sand.u32 %s79, 1
          %s784 = sand.u32 %s79, 1
          %s785 = smul.addr %s784, 256
          %s786 = scalar_lea.vmem [#allocation7], %s785
          %s787 = sadd.s32 %s26, %s27
          %p788 = scmp.lt.s32.totalorder %s787, 1
          %s789 = scalar_select %p788, %s787, 1
          %s790 = smul.u32 32, %s789
          %s791 = ssub.s32 38, %s790
          %p792 = scmp.lt.s32.totalorder %s791, 32
          %s793 = scalar_select %p792, %s791, 32
          %s794 = smul.u32 128, %s793
          %p795 = scmp.ne.s32.totalorder 0, %s794
          %s796 = smul.addr %s790, 4
          %s797 = scalar_lea.vmem %s1, %s796
          // Predicated region
          $region99: #{tpu_custom_call.1} parent=97 // pred_check
            %p798 = pneg %p795
          $region100: #{tpu_custom_call.1} parent=97 // pred_check_branch
            %800 = sbr.rel (%p798) target = $region102
          $region101: #{tpu_custom_call.1} parent=97 // pred_region
            // Predicated region
            $region103: #{tpu_custom_call.1} parent=101 // pred_check
              _
            $region104: #{tpu_custom_call.1} parent=101 // pred_check_branch
              %802 = sbr.rel target = $region106
            $region105: #{tpu_custom_call.1} parent=101 // pred_region
              // Predicated region
              $region125: #{tpu_custom_call.1} parent=105 // pred_check
                _
              $region126: #{tpu_custom_call.1} parent=105 // pred_check_branch
                %980 = sbr.rel (0) target = $region128
              $region127: #{tpu_custom_call.1} parent=105 // pred_region
                %s981 = sshrl.u32 %s793, 5
                // While loop
                $region129: #{tpu_custom_call.1} parent=127 // loop_pre_header
                  _
                $region130: #{tpu_custom_call.1} parent=127 // loop_header
                  %s983 = sphi 0, %s985
                  %p984 = scmp.ge.s32.totalorder %s983, %s981
                  %s988 = sphi 0, %s993
                  %s989 = sphi %s797, %s996
                  %s990 = sphi %s786, %s997
                $region131: #{tpu_custom_call.1} parent=127 // loop_header_branch
                  %987 = sbr.rel (%p984) target = $region135
                $region132: #{tpu_custom_call.1} parent=127 // loop_body
                  %s991 = sadd.s32 1, %s988
                  %p992 = scmp.ge.s32.totalorder %s991, %s981
                  %s993 = scalar_select %p992, 0, %s991
                  %s994 = smul.u32 %s993, 128
                  %s995 = smul.u32 %s993, 128
                  %s996 = scalar_lea.vmem %s797, %s994
                  %s997 = scalar_lea.vmem %s786, %s995 [#allocation7]
                $region133: #{tpu_custom_call.1} parent=127 // loop_footer
                  %s985 = sadd.s32 %s983, 1
                $region134: #{tpu_custom_call.1} parent=127 // loop_footer_branch
                  %982 = sbr.rel target = $region130
                $region135: #{tpu_custom_call.1} parent=127 // loop_exit
                  _
                %s998 = sshrl.u32 %s793, 5
                %s999 = sand.u32 %s793, 31
                %s1000 = smul.u32 %s998, 32
                %s1001 = smul.u32 4, %s1000
                %s1002 = scalar_lea.vmem %s797, %s1001
                %s1003 = smul.u32 4, %s1000
                %s1004 = scalar_lea.vmem %s786, %s1003 [#allocation7]
                // While loop
                $region136: #{tpu_custom_call.1} parent=127 // loop_pre_header
                  _
                $region137: #{tpu_custom_call.1} parent=127 // loop_header
                  %s1006 = sphi 0, %s1008
                  %p1007 = scmp.ge.s32.totalorder %s1006, %s999
                  %s1011 = sphi 0, %s1016
                  %s1012 = sphi %s1002, %s1019
                  %s1013 = sphi %s1004, %s1020
                $region138: #{tpu_custom_call.1} parent=127 // loop_header_branch
                  %1010 = sbr.rel (%p1007) target = $region142
                $region139: #{tpu_custom_call.1} parent=127 // loop_body
                  %s1014 = sadd.s32 1, %s1011
                  %p1015 = scmp.ge.s32.totalorder %s1014, %s999
                  %s1016 = scalar_select %p1015, 0, %s1014
                  %s1017 = smul.u32 %s1016, 4
                  %s1018 = smul.u32 %s1016, 4
                  %s1019 = scalar_lea.vmem %s1002, %s1017
                  %s1020 = scalar_lea.vmem %s1004, %s1018 [#allocation7]
                $region140: #{tpu_custom_call.1} parent=127 // loop_footer
                  %s1008 = sadd.s32 %s1006, 1
                $region141: #{tpu_custom_call.1} parent=127 // loop_footer_branch
                  %1005 = sbr.rel target = $region137
                $region142: #{tpu_custom_call.1} parent=127 // loop_exit
                  _
                %s1022 = ssub.s32 16, 1
                %s1023 = sshrl.u32 %s793, 5
                // While loop
                $region143: #{tpu_custom_call.1} parent=127 // loop_pre_header
                  _
                $region144: #{tpu_custom_call.1} parent=127 // loop_header
                  %s1025 = sphi 0, %s1027
                  %p1026 = scmp.ge.s32.totalorder %s1025, %s1023
                  %s1030 = sphi 0, %s1163
                  %s1031 = sphi %s797, %s1166
                  %s1032 = sphi %s786, %s1167
                $region145: #{tpu_custom_call.1} parent=127 // loop_header_branch
                  %1029 = sbr.rel (%p1026) target = $region149
                $region146: #{tpu_custom_call.1} parent=127 // loop_body
                  %v1033 = vld [vmem:[%s1031] sm:%s1022]
                  %1034 = vst [vmem:[%s1032] sm:%s1022] %v1033
                  %v1035 = vld [vmem:[%s1031 + $0x4] sm:%s1022]
                  %1036 = vst [vmem:[%s1032 + $0x4] sm:%s1022] %v1035
                  %v1037 = vld [vmem:[%s1031 + $0x8] sm:%s1022]
                  %1038 = vst [vmem:[%s1032 + $0x8] sm:%s1022] %v1037
                  %v1039 = vld [vmem:[%s1031 + $0xc] sm:%s1022]
                  %1040 = vst [vmem:[%s1032 + $0xc] sm:%s1022] %v1039
                  %v1041 = vld [vmem:[%s1031 + $0x10] sm:%s1022]
                  %1042 = vst [vmem:[%s1032 + $0x10] sm:%s1022] %v1041
                  %v1043 = vld [vmem:[%s1031 + $0x14] sm:%s1022]
                  %1044 = vst [vmem:[%s1032 + $0x14] sm:%s1022] %v1043
                  %v1045 = vld [vmem:[%s1031 + $0x18] sm:%s1022]
                  %1046 = vst [vmem:[%s1032 + $0x18] sm:%s1022] %v1045
                  %v1047 = vld [vmem:[%s1031 + $0x1c] sm:%s1022]
                  %1048 = vst [vmem:[%s1032 + $0x1c] sm:%s1022] %v1047
                  %v1049 = vld [vmem:[%s1031 + $0x20] sm:%s1022]
                  %1050 = vst [vmem:[%s1032 + $0x20] sm:%s1022] %v1049
                  %v1051 = vld [vmem:[%s1031 + $0x24] sm:%s1022]
                  %1052 = vst [vmem:[%s1032 + $0x24] sm:%s1022] %v1051
                  %v1053 = vld [vmem:[%s1031 + $0x28] sm:%s1022]
                  %1054 = vst [vmem:[%s1032 + $0x28] sm:%s1022] %v1053
                  %v1055 = vld [vmem:[%s1031 + $0x2c] sm:%s1022]
                  %1056 = vst [vmem:[%s1032 + $0x2c] sm:%s1022] %v1055
                  %v1057 = vld [vmem:[%s1031 + $0x30] sm:%s1022]
                  %1058 = vst [vmem:[%s1032 + $0x30] sm:%s1022] %v1057
                  %v1059 = vld [vmem:[%s1031 + $0x34] sm:%s1022]
                  %1060 = vst [vmem:[%s1032 + $0x34] sm:%s1022] %v1059
                  %v1061 = vld [vmem:[%s1031 + $0x38] sm:%s1022]
                  %1062 = vst [vmem:[%s1032 + $0x38] sm:%s1022] %v1061
                  %v1063 = vld [vmem:[%s1031 + $0x3c] sm:%s1022]
                  %1064 = vst [vmem:[%s1032 + $0x3c] sm:%s1022] %v1063
                  %v1065 = vld [vmem:[%s1031 + $0x40] sm:%s1022]
                  %1066 = vst [vmem:[%s1032 + $0x40] sm:%s1022] %v1065
                  %v1067 = vld [vmem:[%s1031 + $0x44] sm:%s1022]
                  %1068 = vst [vmem:[%s1032 + $0x44] sm:%s1022] %v1067
                  %v1069 = vld [vmem:[%s1031 + $0x48] sm:%s1022]
                  %1070 = vst [vmem:[%s1032 + $0x48] sm:%s1022] %v1069
                  %v1071 = vld [vmem:[%s1031 + $0x4c] sm:%s1022]
                  %1072 = vst [vmem:[%s1032 + $0x4c] sm:%s1022] %v1071
                  %v1073 = vld [vmem:[%s1031 + $0x50] sm:%s1022]
                  %1074 = vst [vmem:[%s1032 + $0x50] sm:%s1022] %v1073
                  %v1075 = vld [vmem:[%s1031 + $0x54] sm:%s1022]
                  %1076 = vst [vmem:[%s1032 + $0x54] sm:%s1022] %v1075
                  %v1077 = vld [vmem:[%s1031 + $0x58] sm:%s1022]
                  %1078 = vst [vmem:[%s1032 + $0x58] sm:%s1022] %v1077
                  %v1079 = vld [vmem:[%s1031 + $0x5c] sm:%s1022]
                  %1080 = vst [vmem:[%s1032 + $0x5c] sm:%s1022] %v1079
                  %v1081 = vld [vmem:[%s1031 + $0x60] sm:%s1022]
                  %1082 = vst [vmem:[%s1032 + $0x60] sm:%s1022] %v1081
                  %v1083 = vld [vmem:[%s1031 + $0x64] sm:%s1022]
                  %1084 = vst [vmem:[%s1032 + $0x64] sm:%s1022] %v1083
                  %v1085 = vld [vmem:[%s1031 + $0x68] sm:%s1022]
                  %1086 = vst [vmem:[%s1032 + $0x68] sm:%s1022] %v1085
                  %v1087 = vld [vmem:[%s1031 + $0x6c] sm:%s1022]
                  %1088 = vst [vmem:[%s1032 + $0x6c] sm:%s1022] %v1087
                  %v1089 = vld [vmem:[%s1031 + $0x70] sm:%s1022]
                  %1090 = vst [vmem:[%s1032 + $0x70] sm:%s1022] %v1089
                  %v1091 = vld [vmem:[%s1031 + $0x74] sm:%s1022]
                  %1092 = vst [vmem:[%s1032 + $0x74] sm:%s1022] %v1091
                  %v1093 = vld [vmem:[%s1031 + $0x78] sm:%s1022]
                  %1094 = vst [vmem:[%s1032 + $0x78] sm:%s1022] %v1093
                  %v1095 = vld [vmem:[%s1031 + $0x7c] sm:%s1022]
                  %1096 = vst [vmem:[%s1032 + $0x7c] sm:%s1022] %v1095
                  %v1097 = vld [vmem:[%s1031 + $0x98] sm:%s1022]
                  %1098 = vst [vmem:[%s1032 + $0x80] sm:%s1022] %v1097
                  %v1099 = vld [vmem:[%s1031 + $0x9c] sm:%s1022]
                  %1100 = vst [vmem:[%s1032 + $0x84] sm:%s1022] %v1099
                  %v1101 = vld [vmem:[%s1031 + $0xa0] sm:%s1022]
                  %1102 = vst [vmem:[%s1032 + $0x88] sm:%s1022] %v1101
                  %v1103 = vld [vmem:[%s1031 + $0xa4] sm:%s1022]
                  %1104 = vst [vmem:[%s1032 + $0x8c] sm:%s1022] %v1103
                  %v1105 = vld [vmem:[%s1031 + $0xa8] sm:%s1022]
                  %1106 = vst [vmem:[%s1032 + $0x90] sm:%s1022] %v1105
                  %v1107 = vld [vmem:[%s1031 + $0xac] sm:%s1022]
                  %1108 = vst [vmem:[%s1032 + $0x94] sm:%s1022] %v1107
                  %v1109 = vld [vmem:[%s1031 + $0xb0] sm:%s1022]
                  %1110 = vst [vmem:[%s1032 + $0x98] sm:%s1022] %v1109
                  %v1111 = vld [vmem:[%s1031 + $0xb4] sm:%s1022]
                  %1112 = vst [vmem:[%s1032 + $0x9c] sm:%s1022] %v1111
                  %v1113 = vld [vmem:[%s1031 + $0xb8] sm:%s1022]
                  %1114 = vst [vmem:[%s1032 + $0xa0] sm:%s1022] %v1113
                  %v1115 = vld [vmem:[%s1031 + $0xbc] sm:%s1022]
                  %1116 = vst [vmem:[%s1032 + $0xa4] sm:%s1022] %v1115
                  %v1117 = vld [vmem:[%s1031 + $0xc0] sm:%s1022]
                  %1118 = vst [vmem:[%s1032 + $0xa8] sm:%s1022] %v1117
                  %v1119 = vld [vmem:[%s1031 + $0xc4] sm:%s1022]
                  %1120 = vst [vmem:[%s1032 + $0xac] sm:%s1022] %v1119
                  %v1121 = vld [vmem:[%s1031 + $0xc8] sm:%s1022]
                  %1122 = vst [vmem:[%s1032 + $0xb0] sm:%s1022] %v1121
                  %v1123 = vld [vmem:[%s1031 + $0xcc] sm:%s1022]
                  %1124 = vst [vmem:[%s1032 + $0xb4] sm:%s1022] %v1123
                  %v1125 = vld [vmem:[%s1031 + $0xd0] sm:%s1022]
                  %1126 = vst [vmem:[%s1032 + $0xb8] sm:%s1022] %v1125
                  %v1127 = vld [vmem:[%s1031 + $0xd4] sm:%s1022]
                  %1128 = vst [vmem:[%s1032 + $0xbc] sm:%s1022] %v1127
                  %v1129 = vld [vmem:[%s1031 + $0xd8] sm:%s1022]
                  %1130 = vst [vmem:[%s1032 + $0xc0] sm:%s1022] %v1129
                  %v1131 = vld [vmem:[%s1031 + $0xdc] sm:%s1022]
                  %1132 = vst [vmem:[%s1032 + $0xc4] sm:%s1022] %v1131
                  %v1133 = vld [vmem:[%s1031 + $0xe0] sm:%s1022]
                  %1134 = vst [vmem:[%s1032 + $0xc8] sm:%s1022] %v1133
                  %v1135 = vld [vmem:[%s1031 + $0xe4] sm:%s1022]
                  %1136 = vst [vmem:[%s1032 + $0xcc] sm:%s1022] %v1135
                  %v1137 = vld [vmem:[%s1031 + $0xe8] sm:%s1022]
                  %1138 = vst [vmem:[%s1032 + $0xd0] sm:%s1022] %v1137
                  %v1139 = vld [vmem:[%s1031 + $0xec] sm:%s1022]
                  %1140 = vst [vmem:[%s1032 + $0xd4] sm:%s1022] %v1139
                  %v1141 = vld [vmem:[%s1031 + $0xf0] sm:%s1022]
                  %1142 = vst [vmem:[%s1032 + $0xd8] sm:%s1022] %v1141
                  %v1143 = vld [vmem:[%s1031 + $0xf4] sm:%s1022]
                  %1144 = vst [vmem:[%s1032 + $0xdc] sm:%s1022] %v1143
                  %v1145 = vld [vmem:[%s1031 + $0xf8] sm:%s1022]
                  %1146 = vst [vmem:[%s1032 + $0xe0] sm:%s1022] %v1145
                  %v1147 = vld [vmem:[%s1031 + $0xfc] sm:%s1022]
                  %1148 = vst [vmem:[%s1032 + $0xe4] sm:%s1022] %v1147
                  %v1149 = vld [vmem:[%s1031 + $0x100] sm:%s1022]
                  %1150 = vst [vmem:[%s1032 + $0xe8] sm:%s1022] %v1149
                  %v1151 = vld [vmem:[%s1031 + $0x104] sm:%s1022]
                  %1152 = vst [vmem:[%s1032 + $0xec] sm:%s1022] %v1151
                  %v1153 = vld [vmem:[%s1031 + $0x108] sm:%s1022]
                  %1154 = vst [vmem:[%s1032 + $0xf0] sm:%s1022] %v1153
                  %v1155 = vld [vmem:[%s1031 + $0x10c] sm:%s1022]
                  %1156 = vst [vmem:[%s1032 + $0xf4] sm:%s1022] %v1155
                  %v1157 = vld [vmem:[%s1031 + $0x110] sm:%s1022]
                  %1158 = vst [vmem:[%s1032 + $0xf8] sm:%s1022] %v1157
                  %v1159 = vld [vmem:[%s1031 + $0x114] sm:%s1022]
                  %1160 = vst [vmem:[%s1032 + $0xfc] sm:%s1022] %v1159
                  %s1161 = sadd.s32 1, %s1030
                  %p1162 = scmp.ge.s32.totalorder %s1161, %s1023
                  %s1163 = scalar_select %p1162, 0, %s1161
                  %s1164 = smul.u32 %s1163, 128
                  %s1165 = smul.u32 %s1163, 128
                  %s1166 = scalar_lea.vmem %s797, %s1164
                  %s1167 = scalar_lea.vmem %s786, %s1165 [#allocation7]
                $region147: #{tpu_custom_call.1} parent=127 // loop_footer
                  %s1027 = sadd.s32 %s1025, 1
                $region148: #{tpu_custom_call.1} parent=127 // loop_footer_branch
                  %1024 = sbr.rel target = $region144
                $region149: #{tpu_custom_call.1} parent=127 // loop_exit
                  _
                %s1168 = sshrl.u32 %s793, 5
                %s1169 = sand.u32 %s793, 31
                %s1170 = smul.u32 %s1168, 32
                %s1171 = smul.u32 4, %s1170
                %s1172 = scalar_lea.vmem %s797, %s1171
                %s1173 = smul.u32 4, %s1170
                %s1174 = scalar_lea.vmem %s786, %s1173 [#allocation7]
                // While loop
                $region150: #{tpu_custom_call.1} parent=127 // loop_pre_header
                  _
                $region151: #{tpu_custom_call.1} parent=127 // loop_header
                  %s1176 = sphi 0, %s1178
                  %p1177 = scmp.ge.s32.totalorder %s1176, %s1169
                  %s1181 = sphi 0, %s1190
                  %s1182 = sphi %s1172, %s1193
                  %s1183 = sphi %s1174, %s1194
                $region152: #{tpu_custom_call.1} parent=127 // loop_header_branch
                  %1180 = sbr.rel (%p1177) target = $region156
                $region153: #{tpu_custom_call.1} parent=127 // loop_body
                  %v1184 = vld [vmem:[%s1182] sm:%s1022]
                  %1185 = vst [vmem:[%s1183] sm:%s1022] %v1184
                  %v1186 = vld [vmem:[%s1182 + $0x98] sm:%s1022]
                  %1187 = vst [vmem:[%s1183 + $0x80] sm:%s1022] %v1186
                  %s1188 = sadd.s32 1, %s1181
                  %p1189 = scmp.ge.s32.totalorder %s1188, %s1169
                  %s1190 = scalar_select %p1189, 0, %s1188
                  %s1191 = smul.u32 %s1190, 4
                  %s1192 = smul.u32 %s1190, 4
                  %s1193 = scalar_lea.vmem %s1172, %s1191
                  %s1194 = scalar_lea.vmem %s1174, %s1192 [#allocation7]
                $region154: #{tpu_custom_call.1} parent=127 // loop_footer
                  %s1178 = sadd.s32 %s1176, 1
                $region155: #{tpu_custom_call.1} parent=127 // loop_footer_branch
                  %1175 = sbr.rel target = $region151
                $region156: #{tpu_custom_call.1} parent=127 // loop_exit
                  _
              $region128: #{tpu_custom_call.1} parent=105 // pred_fallthru
                _
            $region106: #{tpu_custom_call.1} parent=101 // pred_fallthru
              _
            // Predicated region
            $region107: #{tpu_custom_call.1} parent=101 // pred_check
              _
            $region108: #{tpu_custom_call.1} parent=101 // pred_check_branch
              %804 = sbr.rel (0) target = $region110
            $region109: #{tpu_custom_call.1} parent=101 // pred_region
              %s806 = ssub.s32 16, 1
              %s807 = sshrl.u32 %s793, 5
              // While loop
              $region111: #{tpu_custom_call.1} parent=109 // loop_pre_header
                _
              $region112: #{tpu_custom_call.1} parent=109 // loop_header
                %s809 = sphi 0, %s811
                %p810 = scmp.ge.s32.totalorder %s809, %s807
                %s814 = sphi 0, %s947
                %s815 = sphi %s797, %s950
                %s816 = sphi %s786, %s951
              $region113: #{tpu_custom_call.1} parent=109 // loop_header_branch
                %813 = sbr.rel (%p810) target = $region117
              $region114: #{tpu_custom_call.1} parent=109 // loop_body
                %v817 = vld [vmem:[%s815] sm:%s806]
                %818 = vst [vmem:[%s816] sm:%s806] %v817
                %v819 = vld [vmem:[%s815 + $0x4] sm:%s806]
                %820 = vst [vmem:[%s816 + $0x4] sm:%s806] %v819
                %v821 = vld [vmem:[%s815 + $0x8] sm:%s806]
                %822 = vst [vmem:[%s816 + $0x8] sm:%s806] %v821
                %v823 = vld [vmem:[%s815 + $0xc] sm:%s806]
                %824 = vst [vmem:[%s816 + $0xc] sm:%s806] %v823
                %v825 = vld [vmem:[%s815 + $0x10] sm:%s806]
                %826 = vst [vmem:[%s816 + $0x10] sm:%s806] %v825
                %v827 = vld [vmem:[%s815 + $0x14] sm:%s806]
                %828 = vst [vmem:[%s816 + $0x14] sm:%s806] %v827
                %v829 = vld [vmem:[%s815 + $0x18] sm:%s806]
                %830 = vst [vmem:[%s816 + $0x18] sm:%s806] %v829
                %v831 = vld [vmem:[%s815 + $0x1c] sm:%s806]
                %832 = vst [vmem:[%s816 + $0x1c] sm:%s806] %v831
                %v833 = vld [vmem:[%s815 + $0x20] sm:%s806]
                %834 = vst [vmem:[%s816 + $0x20] sm:%s806] %v833
                %v835 = vld [vmem:[%s815 + $0x24] sm:%s806]
                %836 = vst [vmem:[%s816 + $0x24] sm:%s806] %v835
                %v837 = vld [vmem:[%s815 + $0x28] sm:%s806]
                %838 = vst [vmem:[%s816 + $0x28] sm:%s806] %v837
                %v839 = vld [vmem:[%s815 + $0x2c] sm:%s806]
                %840 = vst [vmem:[%s816 + $0x2c] sm:%s806] %v839
                %v841 = vld [vmem:[%s815 + $0x30] sm:%s806]
                %842 = vst [vmem:[%s816 + $0x30] sm:%s806] %v841
                %v843 = vld [vmem:[%s815 + $0x34] sm:%s806]
                %844 = vst [vmem:[%s816 + $0x34] sm:%s806] %v843
                %v845 = vld [vmem:[%s815 + $0x38] sm:%s806]
                %846 = vst [vmem:[%s816 + $0x38] sm:%s806] %v845
                %v847 = vld [vmem:[%s815 + $0x3c] sm:%s806]
                %848 = vst [vmem:[%s816 + $0x3c] sm:%s806] %v847
                %v849 = vld [vmem:[%s815 + $0x40] sm:%s806]
                %850 = vst [vmem:[%s816 + $0x40] sm:%s806] %v849
                %v851 = vld [vmem:[%s815 + $0x44] sm:%s806]
                %852 = vst [vmem:[%s816 + $0x44] sm:%s806] %v851
                %v853 = vld [vmem:[%s815 + $0x48] sm:%s806]
                %854 = vst [vmem:[%s816 + $0x48] sm:%s806] %v853
                %v855 = vld [vmem:[%s815 + $0x4c] sm:%s806]
                %856 = vst [vmem:[%s816 + $0x4c] sm:%s806] %v855
                %v857 = vld [vmem:[%s815 + $0x50] sm:%s806]
                %858 = vst [vmem:[%s816 + $0x50] sm:%s806] %v857
                %v859 = vld [vmem:[%s815 + $0x54] sm:%s806]
                %860 = vst [vmem:[%s816 + $0x54] sm:%s806] %v859
                %v861 = vld [vmem:[%s815 + $0x58] sm:%s806]
                %862 = vst [vmem:[%s816 + $0x58] sm:%s806] %v861
                %v863 = vld [vmem:[%s815 + $0x5c] sm:%s806]
                %864 = vst [vmem:[%s816 + $0x5c] sm:%s806] %v863
                %v865 = vld [vmem:[%s815 + $0x60] sm:%s806]
                %866 = vst [vmem:[%s816 + $0x60] sm:%s806] %v865
                %v867 = vld [vmem:[%s815 + $0x64] sm:%s806]
                %868 = vst [vmem:[%s816 + $0x64] sm:%s806] %v867
                %v869 = vld [vmem:[%s815 + $0x68] sm:%s806]
                %870 = vst [vmem:[%s816 + $0x68] sm:%s806] %v869
                %v871 = vld [vmem:[%s815 + $0x6c] sm:%s806]
                %872 = vst [vmem:[%s816 + $0x6c] sm:%s806] %v871
                %v873 = vld [vmem:[%s815 + $0x70] sm:%s806]
                %874 = vst [vmem:[%s816 + $0x70] sm:%s806] %v873
                %v875 = vld [vmem:[%s815 + $0x74] sm:%s806]
                %876 = vst [vmem:[%s816 + $0x74] sm:%s806] %v875
                %v877 = vld [vmem:[%s815 + $0x78] sm:%s806]
                %878 = vst [vmem:[%s816 + $0x78] sm:%s806] %v877
                %v879 = vld [vmem:[%s815 + $0x7c] sm:%s806]
                %880 = vst [vmem:[%s816 + $0x7c] sm:%s806] %v879
                %v881 = vld [vmem:[%s815 + $0x98] sm:%s806]
                %882 = vst [vmem:[%s816 + $0x80] sm:%s806] %v881
                %v883 = vld [vmem:[%s815 + $0x9c] sm:%s806]
                %884 = vst [vmem:[%s816 + $0x84] sm:%s806] %v883
                %v885 = vld [vmem:[%s815 + $0xa0] sm:%s806]
                %886 = vst [vmem:[%s816 + $0x88] sm:%s806] %v885
                %v887 = vld [vmem:[%s815 + $0xa4] sm:%s806]
                %888 = vst [vmem:[%s816 + $0x8c] sm:%s806] %v887
                %v889 = vld [vmem:[%s815 + $0xa8] sm:%s806]
                %890 = vst [vmem:[%s816 + $0x90] sm:%s806] %v889
                %v891 = vld [vmem:[%s815 + $0xac] sm:%s806]
                %892 = vst [vmem:[%s816 + $0x94] sm:%s806] %v891
                %v893 = vld [vmem:[%s815 + $0xb0] sm:%s806]
                %894 = vst [vmem:[%s816 + $0x98] sm:%s806] %v893
                %v895 = vld [vmem:[%s815 + $0xb4] sm:%s806]
                %896 = vst [vmem:[%s816 + $0x9c] sm:%s806] %v895
                %v897 = vld [vmem:[%s815 + $0xb8] sm:%s806]
                %898 = vst [vmem:[%s816 + $0xa0] sm:%s806] %v897
                %v899 = vld [vmem:[%s815 + $0xbc] sm:%s806]
                %900 = vst [vmem:[%s816 + $0xa4] sm:%s806] %v899
                %v901 = vld [vmem:[%s815 + $0xc0] sm:%s806]
                %902 = vst [vmem:[%s816 + $0xa8] sm:%s806] %v901
                %v903 = vld [vmem:[%s815 + $0xc4] sm:%s806]
                %904 = vst [vmem:[%s816 + $0xac] sm:%s806] %v903
                %v905 = vld [vmem:[%s815 + $0xc8] sm:%s806]
                %906 = vst [vmem:[%s816 + $0xb0] sm:%s806] %v905
                %v907 = vld [vmem:[%s815 + $0xcc] sm:%s806]
                %908 = vst [vmem:[%s816 + $0xb4] sm:%s806] %v907
                %v909 = vld [vmem:[%s815 + $0xd0] sm:%s806]
                %910 = vst [vmem:[%s816 + $0xb8] sm:%s806] %v909
                %v911 = vld [vmem:[%s815 + $0xd4] sm:%s806]
                %912 = vst [vmem:[%s816 + $0xbc] sm:%s806] %v911
                %v913 = vld [vmem:[%s815 + $0xd8] sm:%s806]
                %914 = vst [vmem:[%s816 + $0xc0] sm:%s806] %v913
                %v915 = vld [vmem:[%s815 + $0xdc] sm:%s806]
                %916 = vst [vmem:[%s816 + $0xc4] sm:%s806] %v915
                %v917 = vld [vmem:[%s815 + $0xe0] sm:%s806]
                %918 = vst [vmem:[%s816 + $0xc8] sm:%s806] %v917
                %v919 = vld [vmem:[%s815 + $0xe4] sm:%s806]
                %920 = vst [vmem:[%s816 + $0xcc] sm:%s806] %v919
                %v921 = vld [vmem:[%s815 + $0xe8] sm:%s806]
                %922 = vst [vmem:[%s816 + $0xd0] sm:%s806] %v921
                %v923 = vld [vmem:[%s815 + $0xec] sm:%s806]
                %924 = vst [vmem:[%s816 + $0xd4] sm:%s806] %v923
                %v925 = vld [vmem:[%s815 + $0xf0] sm:%s806]
                %926 = vst [vmem:[%s816 + $0xd8] sm:%s806] %v925
                %v927 = vld [vmem:[%s815 + $0xf4] sm:%s806]
                %928 = vst [vmem:[%s816 + $0xdc] sm:%s806] %v927
                %v929 = vld [vmem:[%s815 + $0xf8] sm:%s806]
                %930 = vst [vmem:[%s816 + $0xe0] sm:%s806] %v929
                %v931 = vld [vmem:[%s815 + $0xfc] sm:%s806]
                %932 = vst [vmem:[%s816 + $0xe4] sm:%s806] %v931
                %v933 = vld [vmem:[%s815 + $0x100] sm:%s806]
                %934 = vst [vmem:[%s816 + $0xe8] sm:%s806] %v933
                %v935 = vld [vmem:[%s815 + $0x104] sm:%s806]
                %936 = vst [vmem:[%s816 + $0xec] sm:%s806] %v935
                %v937 = vld [vmem:[%s815 + $0x108] sm:%s806]
                %938 = vst [vmem:[%s816 + $0xf0] sm:%s806] %v937
                %v939 = vld [vmem:[%s815 + $0x10c] sm:%s806]
                %940 = vst [vmem:[%s816 + $0xf4] sm:%s806] %v939
                %v941 = vld [vmem:[%s815 + $0x110] sm:%s806]
                %942 = vst [vmem:[%s816 + $0xf8] sm:%s806] %v941
                %v943 = vld [vmem:[%s815 + $0x114] sm:%s806]
                %944 = vst [vmem:[%s816 + $0xfc] sm:%s806] %v943
                %s945 = sadd.s32 1, %s814
                %p946 = scmp.ge.s32.totalorder %s945, %s807
                %s947 = scalar_select %p946, 0, %s945
                %s948 = smul.u32 %s947, 128
                %s949 = smul.u32 %s947, 128
                %s950 = scalar_lea.vmem %s797, %s948
                %s951 = scalar_lea.vmem %s786, %s949 [#allocation7]
              $region115: #{tpu_custom_call.1} parent=109 // loop_footer
                %s811 = sadd.s32 %s809, 1
              $region116: #{tpu_custom_call.1} parent=109 // loop_footer_branch
                %808 = sbr.rel target = $region112
              $region117: #{tpu_custom_call.1} parent=109 // loop_exit
                _
              %s952 = sshrl.u32 %s793, 5
              %s953 = sand.u32 %s793, 31
              %s954 = smul.u32 %s952, 32
              %s955 = smul.u32 4, %s954
              %s956 = scalar_lea.vmem %s797, %s955
              %s957 = smul.u32 4, %s954
              %s958 = scalar_lea.vmem %s786, %s957 [#allocation7]
              // While loop
              $region118: #{tpu_custom_call.1} parent=109 // loop_pre_header
                _
              $region119: #{tpu_custom_call.1} parent=109 // loop_header
                %s960 = sphi 0, %s962
                %p961 = scmp.ge.s32.totalorder %s960, %s953
                %s965 = sphi 0, %s974
                %s966 = sphi %s956, %s977
                %s967 = sphi %s958, %s978
              $region120: #{tpu_custom_call.1} parent=109 // loop_header_branch
                %964 = sbr.rel (%p961) target = $region124
              $region121: #{tpu_custom_call.1} parent=109 // loop_body
                %v968 = vld [vmem:[%s966] sm:%s806]
                %969 = vst [vmem:[%s967] sm:%s806] %v968
                %v970 = vld [vmem:[%s966 + $0x98] sm:%s806]
                %971 = vst [vmem:[%s967 + $0x80] sm:%s806] %v970
                %s972 = sadd.s32 1, %s965
                %p973 = scmp.ge.s32.totalorder %s972, %s953
                %s974 = scalar_select %p973, 0, %s972
                %s975 = smul.u32 %s974, 4
                %s976 = smul.u32 %s974, 4
                %s977 = scalar_lea.vmem %s956, %s975
                %s978 = scalar_lea.vmem %s958, %s976 [#allocation7]
              $region122: #{tpu_custom_call.1} parent=109 // loop_footer
                %s962 = sadd.s32 %s960, 1
              $region123: #{tpu_custom_call.1} parent=109 // loop_footer_branch
                %959 = sbr.rel target = $region119
              $region124: #{tpu_custom_call.1} parent=109 // loop_exit
                _
            $region110: #{tpu_custom_call.1} parent=101 // pred_fallthru
              _
          $region102: #{tpu_custom_call.1} parent=97 // pred_fallthru
            _
          %1195 = vnop
        $region98: #{tpu_custom_call.1} parent=31 // pred_fallthru
          _
        // Predicated region
        $region157: #{tpu_custom_call.1} parent=31 // pred_check
          %p1196 = pneg %p121
        $region158: #{tpu_custom_call.1} parent=31 // pred_check_branch
          %1198 = sbr.rel (%p1196) target = $region160
        $region159: #{tpu_custom_call.1} parent=31 // pred_region
          %s1199 = sadd.s32 %s26, %s27
          %p1200 = scmp.lt.s32.totalorder %s1199, 1
          %s1201 = scalar_select %p1200, %s1199, 1
          %s1202 = smul.u32 2, %s1201
          %s1203 = ssub.s32 3, %s1202
          %p1204 = scmp.lt.s32.totalorder %s1203, 2
          %s1205 = scalar_select %p1204, %s1203, 2
          %s1206 = smul.u32 32, %s1205
          %p1207 = scmp.lt.s32.totalorder %s1202, 2
          %s1208 = scalar_select %p1207, %s1202, 2
          %s1209 = smul.addr %s1208, 2
          %s1210 = scalar_lea.vmem %s2, %s1209
          %s1211 = sadd.s32 %s26, %s27
          %p1212 = scmp.lt.s32.totalorder %s1211, 1
          %s1213 = scalar_select %p1212, %s1211, 1
          %s1214 = smul.u32 2, %s1213
          %s1215 = ssub.s32 3, %s1214
          %p1216 = scmp.lt.s32.totalorder %s1215, 2
          %s1217 = scalar_select %p1216, %s1215, 2
          %s1218 = smul.u32 32, %s1217
        $region160: #{tpu_custom_call.1} parent=31 // pred_fallthru
          _
        // Predicated region
        $region161: #{tpu_custom_call.1} parent=31 // pred_check
          %p1219 = pneg %p153
        $region162: #{tpu_custom_call.1} parent=31 // pred_check_branch
          %1221 = sbr.rel (%p1219) target = $region164
        $region163: #{tpu_custom_call.1} parent=31 // pred_region
          %s1222 = sadd.s32 %s26, %s27
          %p1223 = scmp.lt.s32.totalorder %s1222, 1
          %s1224 = scalar_select %p1223, %s1222, 1
          %s1225 = smul.u32 2, %s1224
          %s1226 = ssub.s32 3, %s1225
          %p1227 = scmp.lt.s32.totalorder %s1226, 2
          %s1228 = scalar_select %p1227, %s1226, 2
          %s1229 = smul.u32 32, %s1228
          %p1230 = scmp.lt.s32.totalorder %s1225, 2
          %s1231 = scalar_select %p1230, %s1225, 2
          %s1232 = smul.addr %s1231, 2
          %s1233 = scalar_lea.vmem %s3, %s1232
          %s1234 = sadd.s32 %s26, %s27
          %p1235 = scmp.lt.s32.totalorder %s1234, 1
          %s1236 = scalar_select %p1235, %s1234, 1
          %s1237 = smul.u32 2, %s1236
          %s1238 = ssub.s32 3, %s1237
          %p1239 = scmp.lt.s32.totalorder %s1238, 2
          %s1240 = scalar_select %p1239, %s1238, 2
          %s1241 = smul.u32 32, %s1240
        $region164: #{tpu_custom_call.1} parent=31 // pred_fallthru
          _
        // Predicated region
        $region165: #{tpu_custom_call.1} parent=31 // pred_check
          %p1242 = pneg %p185
        $region166: #{tpu_custom_call.1} parent=31 // pred_check_branch
          %1244 = sbr.rel (%p1242) target = $region168
        $region167: #{tpu_custom_call.1} parent=31 // pred_region
          %s1245 = sadd.s32 %s26, %s27
          %p1246 = scmp.lt.s32.totalorder %s1245, 1
          %s1247 = scalar_select %p1246, %s1245, 1
          %s1248 = smul.u32 2, %s1247
          %s1249 = ssub.s32 3, %s1248
          %p1250 = scmp.lt.s32.totalorder %s1249, 2
          %s1251 = scalar_select %p1250, %s1249, 2
          %s1252 = smul.u32 32, %s1251
          %p1253 = scmp.lt.s32.totalorder %s1248, 2
          %s1254 = scalar_select %p1253, %s1248, 2
          %s1255 = smul.addr %s1254, 2
          %s1256 = scalar_lea.vmem %s4, %s1255
          %s1257 = sadd.s32 %s26, %s27
          %p1258 = scmp.lt.s32.totalorder %s1257, 1
          %s1259 = scalar_select %p1258, %s1257, 1
          %s1260 = smul.u32 2, %s1259
          %s1261 = ssub.s32 3, %s1260
          %p1262 = scmp.lt.s32.totalorder %s1261, 2
          %s1263 = scalar_select %p1262, %s1261, 2
          %s1264 = smul.u32 32, %s1263
        $region168: #{tpu_custom_call.1} parent=31 // pred_fallthru
          _
        // Predicated region
        $region169: #{tpu_custom_call.1} parent=31 // pred_check
          %p1265 = pneg %p217
        $region170: #{tpu_custom_call.1} parent=31 // pred_check_branch
          %1267 = sbr.rel (%p1265) target = $region172
        $region171: #{tpu_custom_call.1} parent=31 // pred_region
          %s1268 = sadd.s32 %s26, %s27
          %p1269 = scmp.lt.s32.totalorder %s1268, 1
          %s1270 = scalar_select %p1269, %s1268, 1
          %s1271 = smul.u32 2, %s1270
          %s1272 = ssub.s32 3, %s1271
          %p1273 = scmp.lt.s32.totalorder %s1272, 2
          %s1274 = scalar_select %p1273, %s1272, 2
          %s1275 = smul.u32 32, %s1274
          %p1276 = scmp.lt.s32.totalorder %s1271, 2
          %s1277 = scalar_select %p1276, %s1271, 2
          %s1278 = smul.addr %s1277, 2
          %s1279 = scalar_lea.vmem %s5, %s1278
          %s1280 = sadd.s32 %s26, %s27
          %p1281 = scmp.lt.s32.totalorder %s1280, 1
          %s1282 = scalar_select %p1281, %s1280, 1
          %s1283 = smul.u32 2, %s1282
          %s1284 = ssub.s32 3, %s1283
          %p1285 = scmp.lt.s32.totalorder %s1284, 2
          %s1286 = scalar_select %p1285, %s1284, 2
          %s1287 = smul.u32 32, %s1286
        $region172: #{tpu_custom_call.1} parent=31 // pred_fallthru
          _
      $region32: #{tpu_custom_call.1} parent=5 // pred_fallthru
        _
      %p1288 = scmp.le.s32.totalorder 1, %s19
      %p1289 = scmp.lt.s32.totalorder %s19, 3
      %p1290 = pnand %p1288, %p1289
      %p1291 = pneg %p1290
      // Predicated region
      $region173: #{tpu_custom_call.1} parent=5 // pred_check
        _
      $region174: #{tpu_custom_call.1} parent=5 // pred_check_branch
        %1293 = sbr.rel (%p1290) target = $region176
      $region175: #{tpu_custom_call.1} parent=5 // pred_region
        %s1294 = ssub.s32 %s19, 1
        %s1295 = sand.u32 %s50, 1
        %s1296 = sand.u32 %s50, 1
        %s1297 = smul.addr %s1296, 256
        %s1298 = scalar_lea.vmem [#allocation6], %s1297
        // Predicated region
        $region177: #{tpu_custom_call.1} parent=175 // pred_check
          %p1299 = pneg %p63
        $region178: #{tpu_custom_call.1} parent=175 // pred_check_branch
          %1301 = sbr.rel (%p1299) target = $region180
        $region179: #{tpu_custom_call.1} parent=175 // pred_region
          _
        $region180: #{tpu_custom_call.1} parent=175 // pred_fallthru
          _
        %s1302 = sand.u32 %s82, 1
        %s1303 = sand.u32 %s82, 1
        %s1304 = smul.addr %s1303, 256
        %s1305 = scalar_lea.vmem [#allocation7], %s1304
        // Predicated region
        $region181: #{tpu_custom_call.1} parent=175 // pred_check
          %p1306 = pneg %p95
        $region182: #{tpu_custom_call.1} parent=175 // pred_check_branch
          %1308 = sbr.rel (%p1306) target = $region184
        $region183: #{tpu_custom_call.1} parent=175 // pred_region
          _
        $region184: #{tpu_custom_call.1} parent=175 // pred_fallthru
          _
        %s1309 = sand.u32 %s50, 1
        %s1310 = sand.u32 %s50, 1
        %s1311 = smul.addr %s1310, 256
        %s1312 = scalar_lea.vmem [#allocation6], %s1311
        %p1313 = pneg %p63
        %p1314 = pneg %p60
        %s1315 = sand.u32 %s82, 1
        %s1316 = sand.u32 %s82, 1
        %s1317 = smul.addr %s1316, 256
        %s1318 = scalar_lea.vmem [#allocation7], %s1317
        %p1319 = pneg %p95
        %p1320 = pneg %p92
        %s1321 = sadd.s32 %s28, %s29
        %p1322 = scmp.lt.s32.totalorder %s1321, 1
        %s1323 = scalar_select %p1322, %s1321, 1
        %s1324 = smul.u32 2, %s1323
        %s1325 = ssub.s32 3, %s1324
        %p1326 = scmp.lt.s32.totalorder %s1325, 2
        %s1327 = scalar_select %p1326, %s1325, 2
        %s1328 = smul.u32 32, %s1327
        %p1329 = scmp.lt.s32.totalorder %s1324, 2
        %s1330 = scalar_select %p1329, %s1324, 2
        %s1331 = smul.addr %s1330, 2
        %s1332 = scalar_lea.vmem %s2, %s1331
        %p1333 = pneg %p127
        %p1334 = pneg %p124
        %s1335 = sadd.s32 %s28, %s29
        %p1336 = scmp.lt.s32.totalorder %s1335, 1
        %s1337 = scalar_select %p1336, %s1335, 1
        %s1338 = smul.u32 2, %s1337
        %s1339 = ssub.s32 3, %s1338
        %p1340 = scmp.lt.s32.totalorder %s1339, 2
        %s1341 = scalar_select %p1340, %s1339, 2
        %s1342 = smul.u32 32, %s1341
        %p1343 = scmp.lt.s32.totalorder %s1338, 2
        %s1344 = scalar_select %p1343, %s1338, 2
        %s1345 = smul.addr %s1344, 2
        %s1346 = scalar_lea.vmem %s3, %s1345
        %p1347 = pneg %p159
        %p1348 = pneg %p156
        %s1349 = sadd.s32 %s28, %s29
        %p1350 = scmp.lt.s32.totalorder %s1349, 1
        %s1351 = scalar_select %p1350, %s1349, 1
        %s1352 = smul.u32 2, %s1351
        %s1353 = ssub.s32 3, %s1352
        %p1354 = scmp.lt.s32.totalorder %s1353, 2
        %s1355 = scalar_select %p1354, %s1353, 2
        %s1356 = smul.u32 32, %s1355
        %p1357 = scmp.lt.s32.totalorder %s1352, 2
        %s1358 = scalar_select %p1357, %s1352, 2
        %s1359 = smul.addr %s1358, 2
        %s1360 = scalar_lea.vmem %s4, %s1359
        %p1361 = pneg %p191
        %p1362 = pneg %p188
        %s1363 = sadd.s32 %s28, %s29
        %p1364 = scmp.lt.s32.totalorder %s1363, 1
        %s1365 = scalar_select %p1364, %s1363, 1
        %s1366 = smul.u32 2, %s1365
        %s1367 = ssub.s32 3, %s1366
        %p1368 = scmp.lt.s32.totalorder %s1367, 2
        %s1369 = scalar_select %p1368, %s1367, 2
        %s1370 = smul.u32 32, %s1369
        %p1371 = scmp.lt.s32.totalorder %s1366, 2
        %s1372 = scalar_select %p1371, %s1366, 2
        %s1373 = smul.addr %s1372, 2
        %s1374 = scalar_lea.vmem %s5, %s1373
        %p1375 = pneg %p223
        %p1376 = pneg %p220
        %p1377 = pneg %p244
        %p1378 = pneg %p241
        %p1379 = pneg %p265
        %p1380 = pneg %p262
        %p1381 = pneg %p286
        %p1382 = pneg %p283
        %p1383 = pneg %p307
        %p1384 = pneg %p304
        %p1385 = pneg %p333
        %p1386 = pneg %p330
        %s1387 = sand.u32 %s320, 1
        %s1388 = scalar_lea.sflag [#allocation9], %s1387
        %s1389 = sand.u32 %s320, 1
        %s1390 = smul.addr %s1389, 128
        %s1391 = scalar_lea.smem [#allocation8], %s1390
        %s1392 = sadd.s32 %s28, %s29
        %p1393 = scmp.lt.s32.totalorder %s1392, 1
        %s1394 = scalar_select %p1393, %s1392, 1
        %s1395 = smul.u32 32, %s1394
        %s1396 = ssub.s32 38, %s1395
        %p1397 = scmp.lt.s32.totalorder %s1396, 32
        %s1398 = scalar_select %p1397, %s1396, 32
        %s1399 = smul.u32 128, %s1398
        %s1400 = sadd.s32 %s28, %s29
        %p1401 = scmp.lt.s32.totalorder %s1400, 1
        %s1402 = scalar_select %p1401, %s1400, 1
        %s1403 = smul.u32 32, %s1402
        %s1404 = ssub.s32 38, %s1403
        %p1405 = scmp.lt.s32.totalorder %s1404, 32
        %s1406 = scalar_select %p1405, %s1404, 32
        %s1407 = smul.u32 128, %s1406
        %s1408 = sadd.s32 %s28, %s29
        %p1409 = scmp.lt.s32.totalorder %s1408, 1
        %s1410 = scalar_select %p1409, %s1408, 1
        %s1411 = smul.u32 2, %s1410
        %s1412 = ssub.s32 3, %s1411
        %p1413 = scmp.lt.s32.totalorder %s1412, 2
        %s1414 = scalar_select %p1413, %s1412, 2
        %s1415 = smul.u32 32, %s1414
        %p1416 = scmp.lt.s32.totalorder %s1411, 2
        %s1417 = scalar_select %p1416, %s1411, 2
        %s1418 = smul.addr %s1417, 2
        %s1419 = scalar_lea.vmem %s2, %s1418
        %s1420 = sadd.s32 %s28, %s29
        %p1421 = scmp.lt.s32.totalorder %s1420, 1
        %s1422 = scalar_select %p1421, %s1420, 1
        %s1423 = smul.u32 2, %s1422
        %s1424 = ssub.s32 3, %s1423
        %p1425 = scmp.lt.s32.totalorder %s1424, 2
        %s1426 = scalar_select %p1425, %s1424, 2
        %s1427 = smul.u32 32, %s1426
        %s1428 = sadd.s32 %s28, %s29
        %p1429 = scmp.lt.s32.totalorder %s1428, 1
        %s1430 = scalar_select %p1429, %s1428, 1
        %s1431 = smul.u32 2, %s1430
        %s1432 = ssub.s32 3, %s1431
        %p1433 = scmp.lt.s32.totalorder %s1432, 2
        %s1434 = scalar_select %p1433, %s1432, 2
        %s1435 = smul.u32 32, %s1434
        %p1436 = scmp.lt.s32.totalorder %s1431, 2
        %s1437 = scalar_select %p1436, %s1431, 2
        %s1438 = smul.addr %s1437, 2
        %s1439 = scalar_lea.vmem %s3, %s1438
        %s1440 = sadd.s32 %s28, %s29
        %p1441 = scmp.lt.s32.totalorder %s1440, 1
        %s1442 = scalar_select %p1441, %s1440, 1
        %s1443 = smul.u32 2, %s1442
        %s1444 = ssub.s32 3, %s1443
        %p1445 = scmp.lt.s32.totalorder %s1444, 2
        %s1446 = scalar_select %p1445, %s1444, 2
        %s1447 = smul.u32 32, %s1446
        %s1448 = sadd.s32 %s28, %s29
        %p1449 = scmp.lt.s32.totalorder %s1448, 1
        %s1450 = scalar_select %p1449, %s1448, 1
        %s1451 = smul.u32 2, %s1450
        %s1452 = ssub.s32 3, %s1451
        %p1453 = scmp.lt.s32.totalorder %s1452, 2
        %s1454 = scalar_select %p1453, %s1452, 2
        %s1455 = smul.u32 32, %s1454
        %p1456 = scmp.lt.s32.totalorder %s1451, 2
        %s1457 = scalar_select %p1456, %s1451, 2
        %s1458 = smul.addr %s1457, 2
        %s1459 = scalar_lea.vmem %s4, %s1458
        %s1460 = sadd.s32 %s28, %s29
        %p1461 = scmp.lt.s32.totalorder %s1460, 1
        %s1462 = scalar_select %p1461, %s1460, 1
        %s1463 = smul.u32 2, %s1462
        %s1464 = ssub.s32 3, %s1463
        %p1465 = scmp.lt.s32.totalorder %s1464, 2
        %s1466 = scalar_select %p1465, %s1464, 2
        %s1467 = smul.u32 32, %s1466
        %s1468 = sadd.s32 %s28, %s29
        %p1469 = scmp.lt.s32.totalorder %s1468, 1
        %s1470 = scalar_select %p1469, %s1468, 1
        %s1471 = smul.u32 2, %s1470
        %s1472 = ssub.s32 3, %s1471
        %p1473 = scmp.lt.s32.totalorder %s1472, 2
        %s1474 = scalar_select %p1473, %s1472, 2
        %s1475 = smul.u32 32, %s1474
        %p1476 = scmp.lt.s32.totalorder %s1471, 2
        %s1477 = scalar_select %p1476, %s1471, 2
        %s1478 = smul.addr %s1477, 2
        %s1479 = scalar_lea.vmem %s5, %s1478
        %s1480 = sadd.s32 %s28, %s29
        %p1481 = scmp.lt.s32.totalorder %s1480, 1
        %s1482 = scalar_select %p1481, %s1480, 1
        %s1483 = smul.u32 2, %s1482
        %s1484 = ssub.s32 3, %s1483
        %p1485 = scmp.lt.s32.totalorder %s1484, 2
        %s1486 = scalar_select %p1485, %s1484, 2
        %s1487 = smul.u32 32, %s1486
        %v1488 = vld [vmem:[%s8] sm:$0x3]
        %v1489 = vld [vmem:[%s9] sm:$0x3]
        %p1490 = scmp.eq.s32.totalorder %s29, 0
        // Predicated region
        $region185: #{tpu_custom_call.1} parent=175 // pred_check
          %p1491 = pneg %p1490
        $region186: #{tpu_custom_call.1} parent=175 // pred_check_branch
          %1493 = sbr.rel (%p1491) target = $region188
        $region187: #{tpu_custom_call.1} parent=175 // pred_region
          %v1494 = vlaneseq
          %vm1495 = vcmp.ge.s32.totalorder %v1494, 0
          %vm1496 = vcmp.lt.s32.totalorder %v1494, 256
          %vm1497 = vmand %vm1495, %vm1496
          %1498 = vst.msk [vmem:[#allocation2] sm:$0x3] %vm1497, 0.0
          %1499 = vst.msk [vmem:[#allocation3] sm:$0x3] %vm1497, 0.0
          %1500 = vst.msk [vmem:[#allocation4] sm:$0x3] %vm1497, 0.0
          %vm1501 = vcmask 188416
          %1502 = vst.msk [vmem:[#allocation5] sm:$0x1] %vm1501, 0.0
        $region188: #{tpu_custom_call.1} parent=175 // pred_fallthru
          _
        %p1503 = scmp.eq.s32.totalorder %s28, 0
        %p1504 = pnand %p1503, %p1490
        %p1505 = pneg %p1504
        // Predicated region
        $region189: #{tpu_custom_call.1} parent=175 // pred_check
          _
        $region190: #{tpu_custom_call.1} parent=175 // pred_check_branch
          %1507 = sbr.rel (%p1504) target = $region192
        $region191: #{tpu_custom_call.1} parent=175 // pred_region
          %v1508 = vld [vmem:[%s6] sm:$0x3]
          %v1509 = vadd.f32 %v1508, 1.0
          %v1510 = vlog2.pop %v1509
          %v1511 = vmul.f32 %v1510, 0.6931472
          %v1512 = vld [vmem:[%s7] sm:$0x3]
          %v1513 = vsub.f32 %v1512, %v1511
          %v1514 = vlaneseq
          %v1515 = vand.u32 %v1514, 127
          %1516 = vset.pattern.permute.xlu0 0
          %1517 = vperm.xlu0 %1516, %v1489
          %v1518 = vpop.permute.xlu0 %1517
          %vm1519 = vcmp.lt.s32.totalorder %v1515, %v1518
          %v1520 = vmul.f32 %v1513, %v1513
          %v1521 = vsel %vm1519, %v1520, 0.0
          %vm1522 = vcmask 189440
          %v1523 = vsel %vm1522, %v1521, 0.0
          %v1524 = vrot.slane %v1523, 4
          %v1525 = vadd.f32 %v1523, %v1524
          %v1526 = vrot.slane %v1525, 2
          %v1527 = vadd.f32 %v1525, %v1526
          %v1528 = vrot.slane %v1527, 1
          %v1529 = vadd.f32 %v1527, %v1528
          %vm1530 = vcmask 188416
          %1531 = vst.msk [vmem:[#allocation5] sm:$0x1] %vm1530, %v1529
        $region192: #{tpu_custom_call.1} parent=175 // pred_fallthru
          _
        %s1532 = sadd.s32 %s28, %s29
        %s1533 = smul.u32 %s1532, 256
        %v1534 = vlaneseq
        %v1535 = vand.u32 %v1534, 127
        %v1536 = vadd.s32 %v1535, 128
        %v1537 = vstv %s1533
        %v1538 = vadd.s32 %v1537, %v1535
        %v1539 = vadd.s32 %v1537, %v1536
        %1540 = vset.pattern.permute.xlu0 0
        %1541 = vperm.xlu0 %1540, %v1488
        %v1542 = vpop.permute.xlu0 %1541
        %vm1543 = vcmp.lt.s32.totalorder %v1538, %v1542
        %vm1544 = vcmp.lt.s32.totalorder %v1539, %v1542
        %v1545 = vld [vmem:[%s1305] sm:$0xf]
        %v1546 = vld [vmem:[%s1305 + $0x4] sm:$0xf]
        %v1547 = vld [vmem:[%s1305 + $0x8] sm:$0xf]
        %v1548 = vld [vmem:[%s1305 + $0xc] sm:$0xf]
        %v1549 = vld [vmem:[%s1305 + $0x10] sm:$0xf]
        %v1550 = vld [vmem:[%s1305 + $0x14] sm:$0xf]
        %v1551 = vld [vmem:[%s1305 + $0x18] sm:$0xf]
        %v1552 = vld [vmem:[%s1305 + $0x1c] sm:$0xf]
        %v1553 = vld [vmem:[%s1305 + $0x20] sm:$0xf]
        %v1554 = vld [vmem:[%s1305 + $0x24] sm:$0xf]
        %v1555 = vld [vmem:[%s1305 + $0x28] sm:$0xf]
        %v1556 = vld [vmem:[%s1305 + $0x2c] sm:$0xf]
        %v1557 = vld [vmem:[%s1305 + $0x30] sm:$0xf]
        %v1558 = vld [vmem:[%s1305 + $0x34] sm:$0xf]
        %v1559 = vld [vmem:[%s1305 + $0x38] sm:$0xf]
        %v1560 = vld [vmem:[%s1305 + $0x3c] sm:$0xf]
        %v1561 = vld [vmem:[%s1305 + $0x40] sm:$0xf]
        %v1562 = vld [vmem:[%s1305 + $0x44] sm:$0xf]
        %v1563 = vld [vmem:[%s1305 + $0x48] sm:$0xf]
        %v1564 = vld [vmem:[%s1305 + $0x4c] sm:$0xf]
        %v1565 = vld [vmem:[%s1305 + $0x50] sm:$0xf]
        %v1566 = vld [vmem:[%s1305 + $0x54] sm:$0xf]
        %v1567 = vld [vmem:[%s1305 + $0x58] sm:$0xf]
        %v1568 = vld [vmem:[%s1305 + $0x5c] sm:$0xf]
        %v1569 = vld [vmem:[%s1305 + $0x60] sm:$0xf]
        %v1570 = vld [vmem:[%s1305 + $0x64] sm:$0xf]
        %v1571 = vld [vmem:[%s1305 + $0x68] sm:$0xf]
        %v1572 = vld [vmem:[%s1305 + $0x6c] sm:$0xf]
        %v1573 = vld [vmem:[%s1305 + $0x70] sm:$0xf]
        %v1574 = vld [vmem:[%s1305 + $0x74] sm:$0xf]
        %v1575 = vld [vmem:[%s1305 + $0x78] sm:$0xf]
        %v1576 = vld [vmem:[%s1305 + $0x7c] sm:$0xf]
        %v1577 = vld [vmem:[%s1305 + $0x80] sm:$0xf]
        %v1578 = vld [vmem:[%s1305 + $0x84] sm:$0xf]
        %v1579 = vld [vmem:[%s1305 + $0x88] sm:$0xf]
        %v1580 = vld [vmem:[%s1305 + $0x8c] sm:$0xf]
        %v1581 = vld [vmem:[%s1305 + $0x90] sm:$0xf]
        %v1582 = vld [vmem:[%s1305 + $0x94] sm:$0xf]
        %v1583 = vld [vmem:[%s1305 + $0x98] sm:$0xf]
        %v1584 = vld [vmem:[%s1305 + $0x9c] sm:$0xf]
        %v1585 = vld [vmem:[%s1305 + $0xa0] sm:$0xf]
        %v1586 = vld [vmem:[%s1305 + $0xa4] sm:$0xf]
        %v1587 = vld [vmem:[%s1305 + $0xa8] sm:$0xf]
        %v1588 = vld [vmem:[%s1305 + $0xac] sm:$0xf]
        %v1589 = vld [vmem:[%s1305 + $0xb0] sm:$0xf]
        %v1590 = vld [vmem:[%s1305 + $0xb4] sm:$0xf]
        %v1591 = vld [vmem:[%s1305 + $0xb8] sm:$0xf]
        %v1592 = vld [vmem:[%s1305 + $0xbc] sm:$0xf]
        %v1593 = vld [vmem:[%s1305 + $0xc0] sm:$0xf]
        %v1594 = vld [vmem:[%s1305 + $0xc4] sm:$0xf]
        %v1595 = vld [vmem:[%s1305 + $0xc8] sm:$0xf]
        %v1596 = vld [vmem:[%s1305 + $0xcc] sm:$0xf]
        %v1597 = vld [vmem:[%s1305 + $0xd0] sm:$0xf]
        %v1598 = vld [vmem:[%s1305 + $0xd4] sm:$0xf]
        %v1599 = vld [vmem:[%s1305 + $0xd8] sm:$0xf]
        %v1600 = vld [vmem:[%s1305 + $0xdc] sm:$0xf]
        %v1601 = vld [vmem:[%s1305 + $0xe0] sm:$0xf]
        %v1602 = vld [vmem:[%s1305 + $0xe4] sm:$0xf]
        %v1603 = vld [vmem:[%s1305 + $0xe8] sm:$0xf]
        %v1604 = vld [vmem:[%s1305 + $0xec] sm:$0xf]
        %v1605 = vld [vmem:[%s1305 + $0xf0] sm:$0xf]
        %v1606 = vld [vmem:[%s1305 + $0xf4] sm:$0xf]
        %v1607 = vld [vmem:[%s1305 + $0xf8] sm:$0xf]
        %v1608 = vld [vmem:[%s1305 + $0xfc] sm:$0xf]
        %v1609 = vunpack.c.l.bf16 %v1545
        %v1610 = vunpack.c.l.bf16 %v1546
        %v1611 = vunpack.c.l.bf16 %v1547
        %v1612 = vunpack.c.l.bf16 %v1548
        %v1613 = vunpack.c.l.bf16 %v1549
        %v1614 = vunpack.c.l.bf16 %v1550
        %v1615 = vunpack.c.l.bf16 %v1551
        %v1616 = vunpack.c.l.bf16 %v1552
        %v1617 = vunpack.c.l.bf16 %v1553
        %v1618 = vunpack.c.l.bf16 %v1554
        %v1619 = vunpack.c.l.bf16 %v1555
        %v1620 = vunpack.c.l.bf16 %v1556
        %v1621 = vunpack.c.l.bf16 %v1557
        %v1622 = vunpack.c.l.bf16 %v1558
        %v1623 = vunpack.c.l.bf16 %v1559
        %v1624 = vunpack.c.l.bf16 %v1560
        %v1625 = vunpack.c.l.bf16 %v1561
        %v1626 = vunpack.c.l.bf16 %v1562
        %v1627 = vunpack.c.l.bf16 %v1563
        %v1628 = vunpack.c.l.bf16 %v1564
        %v1629 = vunpack.c.l.bf16 %v1565
        %v1630 = vunpack.c.l.bf16 %v1566
        %v1631 = vunpack.c.l.bf16 %v1567
        %v1632 = vunpack.c.l.bf16 %v1568
        %v1633 = vunpack.c.l.bf16 %v1569
        %v1634 = vunpack.c.l.bf16 %v1570
        %v1635 = vunpack.c.l.bf16 %v1571
        %v1636 = vunpack.c.l.bf16 %v1572
        %v1637 = vunpack.c.l.bf16 %v1573
        %v1638 = vunpack.c.l.bf16 %v1574
        %v1639 = vunpack.c.l.bf16 %v1575
        %v1640 = vunpack.c.l.bf16 %v1576
        %v1641 = vunpack.c.l.bf16 %v1577
        %v1642 = vunpack.c.l.bf16 %v1578
        %v1643 = vunpack.c.l.bf16 %v1579
        %v1644 = vunpack.c.l.bf16 %v1580
        %v1645 = vunpack.c.l.bf16 %v1581
        %v1646 = vunpack.c.l.bf16 %v1582
        %v1647 = vunpack.c.l.bf16 %v1583
        %v1648 = vunpack.c.l.bf16 %v1584
        %v1649 = vunpack.c.l.bf16 %v1585
        %v1650 = vunpack.c.l.bf16 %v1586
        %v1651 = vunpack.c.l.bf16 %v1587
        %v1652 = vunpack.c.l.bf16 %v1588
        %v1653 = vunpack.c.l.bf16 %v1589
        %v1654 = vunpack.c.l.bf16 %v1590
        %v1655 = vunpack.c.l.bf16 %v1591
        %v1656 = vunpack.c.l.bf16 %v1592
        %v1657 = vunpack.c.l.bf16 %v1593
        %v1658 = vunpack.c.l.bf16 %v1594
        %v1659 = vunpack.c.l.bf16 %v1595
        %v1660 = vunpack.c.l.bf16 %v1596
        %v1661 = vunpack.c.l.bf16 %v1597
        %v1662 = vunpack.c.l.bf16 %v1598
        %v1663 = vunpack.c.l.bf16 %v1599
        %v1664 = vunpack.c.l.bf16 %v1600
        %v1665 = vunpack.c.l.bf16 %v1601
        %v1666 = vunpack.c.l.bf16 %v1602
        %v1667 = vunpack.c.l.bf16 %v1603
        %v1668 = vunpack.c.l.bf16 %v1604
        %v1669 = vunpack.c.l.bf16 %v1605
        %v1670 = vunpack.c.l.bf16 %v1606
        %v1671 = vunpack.c.l.bf16 %v1607
        %v1672 = vunpack.c.l.bf16 %v1608
        %v1673 = vld [vmem:[%s1298] sm:$0xf]
        %v1674 = vld [vmem:[%s1298 + $0x4] sm:$0xf]
        %v1675 = vld [vmem:[%s1298 + $0x8] sm:$0xf]
        %v1676 = vld [vmem:[%s1298 + $0xc] sm:$0xf]
        %v1677 = vld [vmem:[%s1298 + $0x10] sm:$0xf]
        %v1678 = vld [vmem:[%s1298 + $0x14] sm:$0xf]
        %v1679 = vld [vmem:[%s1298 + $0x18] sm:$0xf]
        %v1680 = vld [vmem:[%s1298 + $0x1c] sm:$0xf]
        %v1681 = vld [vmem:[%s1298 + $0x20] sm:$0xf]
        %v1682 = vld [vmem:[%s1298 + $0x24] sm:$0xf]
        %v1683 = vld [vmem:[%s1298 + $0x28] sm:$0xf]
        %v1684 = vld [vmem:[%s1298 + $0x2c] sm:$0xf]
        %v1685 = vld [vmem:[%s1298 + $0x30] sm:$0xf]
        %v1686 = vld [vmem:[%s1298 + $0x34] sm:$0xf]
        %v1687 = vld [vmem:[%s1298 + $0x38] sm:$0xf]
        %v1688 = vld [vmem:[%s1298 + $0x3c] sm:$0xf]
        %v1689 = vld [vmem:[%s1298 + $0x40] sm:$0xf]
        %v1690 = vld [vmem:[%s1298 + $0x44] sm:$0xf]
        %v1691 = vld [vmem:[%s1298 + $0x48] sm:$0xf]
        %v1692 = vld [vmem:[%s1298 + $0x4c] sm:$0xf]
        %v1693 = vld [vmem:[%s1298 + $0x50] sm:$0xf]
        %v1694 = vld [vmem:[%s1298 + $0x54] sm:$0xf]
        %v1695 = vld [vmem:[%s1298 + $0x58] sm:$0xf]
        %v1696 = vld [vmem:[%s1298 + $0x5c] sm:$0xf]
        %v1697 = vld [vmem:[%s1298 + $0x60] sm:$0xf]
        %v1698 = vld [vmem:[%s1298 + $0x64] sm:$0xf]
        %v1699 = vld [vmem:[%s1298 + $0x68] sm:$0xf]
        %v1700 = vld [vmem:[%s1298 + $0x6c] sm:$0xf]
        %v1701 = vld [vmem:[%s1298 + $0x70] sm:$0xf]
        %v1702 = vld [vmem:[%s1298 + $0x74] sm:$0xf]
        %v1703 = vld [vmem:[%s1298 + $0x78] sm:$0xf]
        %v1704 = vld [vmem:[%s1298 + $0x7c] sm:$0xf]
        %v1705 = vld [vmem:[%s1298 + $0x80] sm:$0xf]
        %v1706 = vld [vmem:[%s1298 + $0x84] sm:$0xf]
        %v1707 = vld [vmem:[%s1298 + $0x88] sm:$0xf]
        %v1708 = vld [vmem:[%s1298 + $0x8c] sm:$0xf]
        %v1709 = vld [vmem:[%s1298 + $0x90] sm:$0xf]
        %v1710 = vld [vmem:[%s1298 + $0x94] sm:$0xf]
        %v1711 = vld [vmem:[%s1298 + $0x98] sm:$0xf]
        %v1712 = vld [vmem:[%s1298 + $0x9c] sm:$0xf]
        %v1713 = vld [vmem:[%s1298 + $0xa0] sm:$0xf]
        %v1714 = vld [vmem:[%s1298 + $0xa4] sm:$0xf]
        %v1715 = vld [vmem:[%s1298 + $0xa8] sm:$0xf]
        %v1716 = vld [vmem:[%s1298 + $0xac] sm:$0xf]
        %v1717 = vld [vmem:[%s1298 + $0xb0] sm:$0xf]
        %v1718 = vld [vmem:[%s1298 + $0xb4] sm:$0xf]
        %v1719 = vld [vmem:[%s1298 + $0xb8] sm:$0xf]
        %v1720 = vld [vmem:[%s1298 + $0xbc] sm:$0xf]
        %v1721 = vld [vmem:[%s1298 + $0xc0] sm:$0xf]
        %v1722 = vld [vmem:[%s1298 + $0xc4] sm:$0xf]
        %v1723 = vld [vmem:[%s1298 + $0xc8] sm:$0xf]
        %v1724 = vld [vmem:[%s1298 + $0xcc] sm:$0xf]
        %v1725 = vld [vmem:[%s1298 + $0xd0] sm:$0xf]
        %v1726 = vld [vmem:[%s1298 + $0xd4] sm:$0xf]
        %v1727 = vld [vmem:[%s1298 + $0xd8] sm:$0xf]
        %v1728 = vld [vmem:[%s1298 + $0xdc] sm:$0xf]
        %v1729 = vld [vmem:[%s1298 + $0xe0] sm:$0xf]
        %v1730 = vld [vmem:[%s1298 + $0xe4] sm:$0xf]
        %v1731 = vld [vmem:[%s1298 + $0xe8] sm:$0xf]
        %v1732 = vld [vmem:[%s1298 + $0xec] sm:$0xf]
        %v1733 = vld [vmem:[%s1298 + $0xf0] sm:$0xf]
        %v1734 = vld [vmem:[%s1298 + $0xf4] sm:$0xf]
        %v1735 = vld [vmem:[%s1298 + $0xf8] sm:$0xf]
        %v1736 = vld [vmem:[%s1298 + $0xfc] sm:$0xf]
        %v1737 = vunpack.c.l.bf16 %v1673
        %v1738 = vunpack.c.l.bf16 %v1674
        %v1739 = vunpack.c.l.bf16 %v1675
        %v1740 = vunpack.c.l.bf16 %v1676
        %v1741 = vunpack.c.l.bf16 %v1677
        %v1742 = vunpack.c.l.bf16 %v1678
        %v1743 = vunpack.c.l.bf16 %v1679
        %v1744 = vunpack.c.l.bf16 %v1680
        %v1745 = vunpack.c.l.bf16 %v1681
        %v1746 = vunpack.c.l.bf16 %v1682
        %v1747 = vunpack.c.l.bf16 %v1683
        %v1748 = vunpack.c.l.bf16 %v1684
        %v1749 = vunpack.c.l.bf16 %v1685
        %v1750 = vunpack.c.l.bf16 %v1686
        %v1751 = vunpack.c.l.bf16 %v1687
        %v1752 = vunpack.c.l.bf16 %v1688
        %v1753 = vunpack.c.l.bf16 %v1689
        %v1754 = vunpack.c.l.bf16 %v1690
        %v1755 = vunpack.c.l.bf16 %v1691
        %v1756 = vunpack.c.l.bf16 %v1692
        %v1757 = vunpack.c.l.bf16 %v1693
        %v1758 = vunpack.c.l.bf16 %v1694
        %v1759 = vunpack.c.l.bf16 %v1695
        %v1760 = vunpack.c.l.bf16 %v1696
        %v1761 = vunpack.c.l.bf16 %v1697
        %v1762 = vunpack.c.l.bf16 %v1698
        %v1763 = vunpack.c.l.bf16 %v1699
        %v1764 = vunpack.c.l.bf16 %v1700
        %v1765 = vunpack.c.l.bf16 %v1701
        %v1766 = vunpack.c.l.bf16 %v1702
        %v1767 = vunpack.c.l.bf16 %v1703
        %v1768 = vunpack.c.l.bf16 %v1704
        %v1769 = vunpack.c.l.bf16 %v1705
        %v1770 = vunpack.c.l.bf16 %v1706
        %v1771 = vunpack.c.l.bf16 %v1707
        %v1772 = vunpack.c.l.bf16 %v1708
        %v1773 = vunpack.c.l.bf16 %v1709
        %v1774 = vunpack.c.l.bf16 %v1710
        %v1775 = vunpack.c.l.bf16 %v1711
        %v1776 = vunpack.c.l.bf16 %v1712
        %v1777 = vunpack.c.l.bf16 %v1713
        %v1778 = vunpack.c.l.bf16 %v1714
        %v1779 = vunpack.c.l.bf16 %v1715
        %v1780 = vunpack.c.l.bf16 %v1716
        %v1781 = vunpack.c.l.bf16 %v1717
        %v1782 = vunpack.c.l.bf16 %v1718
        %v1783 = vunpack.c.l.bf16 %v1719
        %v1784 = vunpack.c.l.bf16 %v1720
        %v1785 = vunpack.c.l.bf16 %v1721
        %v1786 = vunpack.c.l.bf16 %v1722
        %v1787 = vunpack.c.l.bf16 %v1723
        %v1788 = vunpack.c.l.bf16 %v1724
        %v1789 = vunpack.c.l.bf16 %v1725
        %v1790 = vunpack.c.l.bf16 %v1726
        %v1791 = vunpack.c.l.bf16 %v1727
        %v1792 = vunpack.c.l.bf16 %v1728
        %v1793 = vunpack.c.l.bf16 %v1729
        %v1794 = vunpack.c.l.bf16 %v1730
        %v1795 = vunpack.c.l.bf16 %v1731
        %v1796 = vunpack.c.l.bf16 %v1732
        %v1797 = vunpack.c.l.bf16 %v1733
        %v1798 = vunpack.c.l.bf16 %v1734
        %v1799 = vunpack.c.l.bf16 %v1735
        %v1800 = vunpack.c.l.bf16 %v1736
        %v1801 = vsub.f32 %v1609, %v1737
        %v1802 = vsub.f32 %v1610, %v1738
        %v1803 = vsub.f32 %v1611, %v1739
        %v1804 = vsub.f32 %v1612, %v1740
        %v1805 = vsub.f32 %v1613, %v1741
        %v1806 = vsub.f32 %v1614, %v1742
        %v1807 = vsub.f32 %v1615, %v1743
        %v1808 = vsub.f32 %v1616, %v1744
        %v1809 = vsub.f32 %v1617, %v1745
        %v1810 = vsub.f32 %v1618, %v1746
        %v1811 = vsub.f32 %v1619, %v1747
        %v1812 = vsub.f32 %v1620, %v1748
        %v1813 = vsub.f32 %v1621, %v1749
        %v1814 = vsub.f32 %v1622, %v1750
        %v1815 = vsub.f32 %v1623, %v1751
        %v1816 = vsub.f32 %v1624, %v1752
        %v1817 = vsub.f32 %v1625, %v1753
        %v1818 = vsub.f32 %v1626, %v1754
        %v1819 = vsub.f32 %v1627, %v1755
        %v1820 = vsub.f32 %v1628, %v1756
        %v1821 = vsub.f32 %v1629, %v1757
        %v1822 = vsub.f32 %v1630, %v1758
        %v1823 = vsub.f32 %v1631, %v1759
        %v1824 = vsub.f32 %v1632, %v1760
        %v1825 = vsub.f32 %v1633, %v1761
        %v1826 = vsub.f32 %v1634, %v1762
        %v1827 = vsub.f32 %v1635, %v1763
        %v1828 = vsub.f32 %v1636, %v1764
        %v1829 = vsub.f32 %v1637, %v1765
        %v1830 = vsub.f32 %v1638, %v1766
        %v1831 = vsub.f32 %v1639, %v1767
        %v1832 = vsub.f32 %v1640, %v1768
        %v1833 = vsub.f32 %v1641, %v1769
        %v1834 = vsub.f32 %v1642, %v1770
        %v1835 = vsub.f32 %v1643, %v1771
        %v1836 = vsub.f32 %v1644, %v1772
        %v1837 = vsub.f32 %v1645, %v1773
        %v1838 = vsub.f32 %v1646, %v1774
        %v1839 = vsub.f32 %v1647, %v1775
        %v1840 = vsub.f32 %v1648, %v1776
        %v1841 = vsub.f32 %v1649, %v1777
        %v1842 = vsub.f32 %v1650, %v1778
        %v1843 = vsub.f32 %v1651, %v1779
        %v1844 = vsub.f32 %v1652, %v1780
        %v1845 = vsub.f32 %v1653, %v1781
        %v1846 = vsub.f32 %v1654, %v1782
        %v1847 = vsub.f32 %v1655, %v1783
        %v1848 = vsub.f32 %v1656, %v1784
        %v1849 = vsub.f32 %v1657, %v1785
        %v1850 = vsub.f32 %v1658, %v1786
        %v1851 = vsub.f32 %v1659, %v1787
        %v1852 = vsub.f32 %v1660, %v1788
        %v1853 = vsub.f32 %v1661, %v1789
        %v1854 = vsub.f32 %v1662, %v1790
        %v1855 = vsub.f32 %v1663, %v1791
        %v1856 = vsub.f32 %v1664, %v1792
        %v1857 = vsub.f32 %v1665, %v1793
        %v1858 = vsub.f32 %v1666, %v1794
        %v1859 = vsub.f32 %v1667, %v1795
        %v1860 = vsub.f32 %v1668, %v1796
        %v1861 = vsub.f32 %v1669, %v1797
        %v1862 = vsub.f32 %v1670, %v1798
        %v1863 = vsub.f32 %v1671, %v1799
        %v1864 = vsub.f32 %v1672, %v1800
        %v1865 = vand.u32 2147483647, %v1801
        %v1866 = vand.u32 2147483647, %v1802
        %v1867 = vand.u32 2147483647, %v1803
        %v1868 = vand.u32 2147483647, %v1804
        %v1869 = vand.u32 2147483647, %v1805
        %v1870 = vand.u32 2147483647, %v1806
        %v1871 = vand.u32 2147483647, %v1807
        %v1872 = vand.u32 2147483647, %v1808
        %v1873 = vand.u32 2147483647, %v1809
        %v1874 = vand.u32 2147483647, %v1810
        %v1875 = vand.u32 2147483647, %v1811
        %v1876 = vand.u32 2147483647, %v1812
        %v1877 = vand.u32 2147483647, %v1813
        %v1878 = vand.u32 2147483647, %v1814
        %v1879 = vand.u32 2147483647, %v1815
        %v1880 = vand.u32 2147483647, %v1816
        %v1881 = vand.u32 2147483647, %v1817
        %v1882 = vand.u32 2147483647, %v1818
        %v1883 = vand.u32 2147483647, %v1819
        %v1884 = vand.u32 2147483647, %v1820
        %v1885 = vand.u32 2147483647, %v1821
        %v1886 = vand.u32 2147483647, %v1822
        %v1887 = vand.u32 2147483647, %v1823
        %v1888 = vand.u32 2147483647, %v1824
        %v1889 = vand.u32 2147483647, %v1825
        %v1890 = vand.u32 2147483647, %v1826
        %v1891 = vand.u32 2147483647, %v1827
        %v1892 = vand.u32 2147483647, %v1828
        %v1893 = vand.u32 2147483647, %v1829
        %v1894 = vand.u32 2147483647, %v1830
        %v1895 = vand.u32 2147483647, %v1831
        %v1896 = vand.u32 2147483647, %v1832
        %v1897 = vand.u32 2147483647, %v1833
        %v1898 = vand.u32 2147483647, %v1834
        %v1899 = vand.u32 2147483647, %v1835
        %v1900 = vand.u32 2147483647, %v1836
        %v1901 = vand.u32 2147483647, %v1837
        %v1902 = vand.u32 2147483647, %v1838
        %v1903 = vand.u32 2147483647, %v1839
        %v1904 = vand.u32 2147483647, %v1840
        %v1905 = vand.u32 2147483647, %v1841
        %v1906 = vand.u32 2147483647, %v1842
        %v1907 = vand.u32 2147483647, %v1843
        %v1908 = vand.u32 2147483647, %v1844
        %v1909 = vand.u32 2147483647, %v1845
        %v1910 = vand.u32 2147483647, %v1846
        %v1911 = vand.u32 2147483647, %v1847
        %v1912 = vand.u32 2147483647, %v1848
        %v1913 = vand.u32 2147483647, %v1849
        %v1914 = vand.u32 2147483647, %v1850
        %v1915 = vand.u32 2147483647, %v1851
        %v1916 = vand.u32 2147483647, %v1852
        %v1917 = vand.u32 2147483647, %v1853
        %v1918 = vand.u32 2147483647, %v1854
        %v1919 = vand.u32 2147483647, %v1855
        %v1920 = vand.u32 2147483647, %v1856
        %v1921 = vand.u32 2147483647, %v1857
        %v1922 = vand.u32 2147483647, %v1858
        %v1923 = vand.u32 2147483647, %v1859
        %v1924 = vand.u32 2147483647, %v1860
        %v1925 = vand.u32 2147483647, %v1861
        %v1926 = vand.u32 2147483647, %v1862
        %v1927 = vand.u32 2147483647, %v1863
        %v1928 = vand.u32 2147483647, %v1864
        %vm1929 = vcmask 654336
        %v1930 = vsel %vm1929, %v1865, 0.0
        %1931 = vadd.xlane.f32.xlu0 %v1930
        %v1932 = vpop.xlane.xlu0 %1931
        %v1933 = vsel %vm1929, %v1866, 0.0
        %1934 = vadd.xlane.f32.xlu0 %v1933
        %v1935 = vpop.xlane.xlu0 %1934
        %v1936 = vsel %vm1929, %v1867, 0.0
        %1937 = vadd.xlane.f32.xlu0 %v1936
        %v1938 = vpop.xlane.xlu0 %1937
        %v1939 = vsel %vm1929, %v1868, 0.0
        %1940 = vadd.xlane.f32.xlu0 %v1939
        %v1941 = vpop.xlane.xlu0 %1940
        %v1942 = vsel %vm1929, %v1869, 0.0
        %1943 = vadd.xlane.f32.xlu0 %v1942
        %v1944 = vpop.xlane.xlu0 %1943
        %v1945 = vsel %vm1929, %v1870, 0.0
        %1946 = vadd.xlane.f32.xlu0 %v1945
        %v1947 = vpop.xlane.xlu0 %1946
        %v1948 = vsel %vm1929, %v1871, 0.0
        %1949 = vadd.xlane.f32.xlu0 %v1948
        %v1950 = vpop.xlane.xlu0 %1949
        %v1951 = vsel %vm1929, %v1872, 0.0
        %1952 = vadd.xlane.f32.xlu0 %v1951
        %v1953 = vpop.xlane.xlu0 %1952
        %v1954 = vsel %vm1929, %v1873, 0.0
        %1955 = vadd.xlane.f32.xlu0 %v1954
        %v1956 = vpop.xlane.xlu0 %1955
        %v1957 = vsel %vm1929, %v1874, 0.0
        %1958 = vadd.xlane.f32.xlu0 %v1957
        %v1959 = vpop.xlane.xlu0 %1958
        %v1960 = vsel %vm1929, %v1875, 0.0
        %1961 = vadd.xlane.f32.xlu0 %v1960
        %v1962 = vpop.xlane.xlu0 %1961
        %v1963 = vsel %vm1929, %v1876, 0.0
        %1964 = vadd.xlane.f32.xlu0 %v1963
        %v1965 = vpop.xlane.xlu0 %1964
        %v1966 = vsel %vm1929, %v1877, 0.0
        %1967 = vadd.xlane.f32.xlu0 %v1966
        %v1968 = vpop.xlane.xlu0 %1967
        %v1969 = vsel %vm1929, %v1878, 0.0
        %1970 = vadd.xlane.f32.xlu0 %v1969
        %v1971 = vpop.xlane.xlu0 %1970
        %v1972 = vsel %vm1929, %v1879, 0.0
        %1973 = vadd.xlane.f32.xlu0 %v1972
        %v1974 = vpop.xlane.xlu0 %1973
        %v1975 = vsel %vm1929, %v1880, 0.0
        %1976 = vadd.xlane.f32.xlu0 %v1975
        %v1977 = vpop.xlane.xlu0 %1976
        %v1978 = vsel %vm1929, %v1881, 0.0
        %1979 = vadd.xlane.f32.xlu0 %v1978
        %v1980 = vpop.xlane.xlu0 %1979
        %v1981 = vsel %vm1929, %v1882, 0.0
        %1982 = vadd.xlane.f32.xlu0 %v1981
        %v1983 = vpop.xlane.xlu0 %1982
        %v1984 = vsel %vm1929, %v1883, 0.0
        %1985 = vadd.xlane.f32.xlu0 %v1984
        %v1986 = vpop.xlane.xlu0 %1985
        %v1987 = vsel %vm1929, %v1884, 0.0
        %1988 = vadd.xlane.f32.xlu0 %v1987
        %v1989 = vpop.xlane.xlu0 %1988
        %v1990 = vsel %vm1929, %v1885, 0.0
        %1991 = vadd.xlane.f32.xlu0 %v1990
        %v1992 = vpop.xlane.xlu0 %1991
        %v1993 = vsel %vm1929, %v1886, 0.0
        %1994 = vadd.xlane.f32.xlu0 %v1993
        %v1995 = vpop.xlane.xlu0 %1994
        %v1996 = vsel %vm1929, %v1887, 0.0
        %1997 = vadd.xlane.f32.xlu0 %v1996
        %v1998 = vpop.xlane.xlu0 %1997
        %v1999 = vsel %vm1929, %v1888, 0.0
        %2000 = vadd.xlane.f32.xlu0 %v1999
        %v2001 = vpop.xlane.xlu0 %2000
        %v2002 = vsel %vm1929, %v1889, 0.0
        %2003 = vadd.xlane.f32.xlu0 %v2002
        %v2004 = vpop.xlane.xlu0 %2003
        %v2005 = vsel %vm1929, %v1890, 0.0
        %2006 = vadd.xlane.f32.xlu0 %v2005
        %v2007 = vpop.xlane.xlu0 %2006
        %v2008 = vsel %vm1929, %v1891, 0.0
        %2009 = vadd.xlane.f32.xlu0 %v2008
        %v2010 = vpop.xlane.xlu0 %2009
        %v2011 = vsel %vm1929, %v1892, 0.0
        %2012 = vadd.xlane.f32.xlu0 %v2011
        %v2013 = vpop.xlane.xlu0 %2012
        %v2014 = vsel %vm1929, %v1893, 0.0
        %2015 = vadd.xlane.f32.xlu0 %v2014
        %v2016 = vpop.xlane.xlu0 %2015
        %v2017 = vsel %vm1929, %v1894, 0.0
        %2018 = vadd.xlane.f32.xlu0 %v2017
        %v2019 = vpop.xlane.xlu0 %2018
        %v2020 = vsel %vm1929, %v1895, 0.0
        %2021 = vadd.xlane.f32.xlu0 %v2020
        %v2022 = vpop.xlane.xlu0 %2021
        %v2023 = vsel %vm1929, %v1896, 0.0
        %2024 = vadd.xlane.f32.xlu0 %v2023
        %v2025 = vpop.xlane.xlu0 %2024
        %v2026 = vsel %vm1929, %v1897, 0.0
        %2027 = vadd.xlane.f32.xlu0 %v2026
        %v2028 = vpop.xlane.xlu0 %2027
        %v2029 = vsel %vm1929, %v1898, 0.0
        %2030 = vadd.xlane.f32.xlu0 %v2029
        %v2031 = vpop.xlane.xlu0 %2030
        %v2032 = vsel %vm1929, %v1899, 0.0
        %2033 = vadd.xlane.f32.xlu0 %v2032
        %v2034 = vpop.xlane.xlu0 %2033
        %v2035 = vsel %vm1929, %v1900, 0.0
        %2036 = vadd.xlane.f32.xlu0 %v2035
        %v2037 = vpop.xlane.xlu0 %2036
        %v2038 = vsel %vm1929, %v1901, 0.0
        %2039 = vadd.xlane.f32.xlu0 %v2038
        %v2040 = vpop.xlane.xlu0 %2039
        %v2041 = vsel %vm1929, %v1902, 0.0
        %2042 = vadd.xlane.f32.xlu0 %v2041
        %v2043 = vpop.xlane.xlu0 %2042
        %v2044 = vsel %vm1929, %v1903, 0.0
        %2045 = vadd.xlane.f32.xlu0 %v2044
        %v2046 = vpop.xlane.xlu0 %2045
        %v2047 = vsel %vm1929, %v1904, 0.0
        %2048 = vadd.xlane.f32.xlu0 %v2047
        %v2049 = vpop.xlane.xlu0 %2048
        %v2050 = vsel %vm1929, %v1905, 0.0
        %2051 = vadd.xlane.f32.xlu0 %v2050
        %v2052 = vpop.xlane.xlu0 %2051
        %v2053 = vsel %vm1929, %v1906, 0.0
        %2054 = vadd.xlane.f32.xlu0 %v2053
        %v2055 = vpop.xlane.xlu0 %2054
        %v2056 = vsel %vm1929, %v1907, 0.0
        %2057 = vadd.xlane.f32.xlu0 %v2056
        %v2058 = vpop.xlane.xlu0 %2057
        %v2059 = vsel %vm1929, %v1908, 0.0
        %2060 = vadd.xlane.f32.xlu0 %v2059
        %v2061 = vpop.xlane.xlu0 %2060
        %v2062 = vsel %vm1929, %v1909, 0.0
        %2063 = vadd.xlane.f32.xlu0 %v2062
        %v2064 = vpop.xlane.xlu0 %2063
        %v2065 = vsel %vm1929, %v1910, 0.0
        %2066 = vadd.xlane.f32.xlu0 %v2065
        %v2067 = vpop.xlane.xlu0 %2066
        %v2068 = vsel %vm1929, %v1911, 0.0
        %2069 = vadd.xlane.f32.xlu0 %v2068
        %v2070 = vpop.xlane.xlu0 %2069
        %v2071 = vsel %vm1929, %v1912, 0.0
        %2072 = vadd.xlane.f32.xlu0 %v2071
        %v2073 = vpop.xlane.xlu0 %2072
        %v2074 = vsel %vm1929, %v1913, 0.0
        %2075 = vadd.xlane.f32.xlu0 %v2074
        %v2076 = vpop.xlane.xlu0 %2075
        %v2077 = vsel %vm1929, %v1914, 0.0
        %2078 = vadd.xlane.f32.xlu0 %v2077
        %v2079 = vpop.xlane.xlu0 %2078
        %v2080 = vsel %vm1929, %v1915, 0.0
        %2081 = vadd.xlane.f32.xlu0 %v2080
        %v2082 = vpop.xlane.xlu0 %2081
        %v2083 = vsel %vm1929, %v1916, 0.0
        %2084 = vadd.xlane.f32.xlu0 %v2083
        %v2085 = vpop.xlane.xlu0 %2084
        %v2086 = vsel %vm1929, %v1917, 0.0
        %2087 = vadd.xlane.f32.xlu0 %v2086
        %v2088 = vpop.xlane.xlu0 %2087
        %v2089 = vsel %vm1929, %v1918, 0.0
        %2090 = vadd.xlane.f32.xlu0 %v2089
        %v2091 = vpop.xlane.xlu0 %2090
        %v2092 = vsel %vm1929, %v1919, 0.0
        %2093 = vadd.xlane.f32.xlu0 %v2092
        %v2094 = vpop.xlane.xlu0 %2093
        %v2095 = vsel %vm1929, %v1920, 0.0
        %2096 = vadd.xlane.f32.xlu0 %v2095
        %v2097 = vpop.xlane.xlu0 %2096
        %v2098 = vsel %vm1929, %v1921, 0.0
        %2099 = vadd.xlane.f32.xlu0 %v2098
        %v2100 = vpop.xlane.xlu0 %2099
        %v2101 = vsel %vm1929, %v1922, 0.0
        %2102 = vadd.xlane.f32.xlu0 %v2101
        %v2103 = vpop.xlane.xlu0 %2102
        %v2104 = vsel %vm1929, %v1923, 0.0
        %2105 = vadd.xlane.f32.xlu0 %v2104
        %v2106 = vpop.xlane.xlu0 %2105
        %v2107 = vsel %vm1929, %v1924, 0.0
        %2108 = vadd.xlane.f32.xlu0 %v2107
        %v2109 = vpop.xlane.xlu0 %2108
        %v2110 = vsel %vm1929, %v1925, 0.0
        %2111 = vadd.xlane.f32.xlu0 %v2110
        %v2112 = vpop.xlane.xlu0 %2111
        %v2113 = vsel %vm1929, %v1926, 0.0
        %2114 = vadd.xlane.f32.xlu0 %v2113
        %v2115 = vpop.xlane.xlu0 %2114
        %v2116 = vsel %vm1929, %v1927, 0.0
        %2117 = vadd.xlane.f32.xlu0 %v2116
        %v2118 = vpop.xlane.xlu0 %2117
        %v2119 = vsel %vm1929, %v1928, 0.0
        %2120 = vadd.xlane.f32.xlu0 %v2119
        %v2121 = vpop.xlane.xlu0 %2120
        %v2122 = vld [vmem:[#allocation2] sm:$0x3]
        %v2187 = vlaneseq
        %v2188 = vshrl.u32 %v2187, 7
        %v2189 = vsub.s32 %v1535, %v2188
        %v2190 = vrot.slane %v1932, %v2189
        %v2191 = vadd.s32 %v1535, 4294967288
        %v2192 = vlaneseq
        %v2193 = vshrl.u32 %v2192, 7
        %v2194 = vsub.s32 %v2191, %v2193
        %v2195 = vrot.slane %v1935, %v2194
        %vm2196 = vcmask 130112
        %v2197 = vsel %vm2196, %v2195, %v2190
        %v2198 = vadd.s32 %v1535, 4294967280
        %v2199 = vlaneseq
        %v2200 = vshrl.u32 %v2199, 7
        %v2201 = vsub.s32 %v2198, %v2200
        %v2202 = vrot.slane %v1938, %v2201
        %vm2203 = vcmask 195712
        %v2204 = vsel %vm2203, %v2202, %v2197
        %v2205 = vadd.s32 %v1535, 4294967272
        %v2206 = vlaneseq
        %v2207 = vshrl.u32 %v2206, 7
        %v2208 = vsub.s32 %v2205, %v2207
        %v2209 = vrot.slane %v1941, %v2208
        %vm2210 = vcmask 261312
        %v2211 = vsel %vm2210, %v2209, %v2204
        %v2212 = vadd.s32 %v1535, 4294967264
        %v2213 = vlaneseq
        %v2214 = vshrl.u32 %v2213, 7
        %v2215 = vsub.s32 %v2212, %v2214
        %v2216 = vrot.slane %v1944, %v2215
        %vm2217 = vcmask 326912
        %v2218 = vsel %vm2217, %v2216, %v2211
        %v2219 = vadd.s32 %v1535, 4294967256
        %v2220 = vlaneseq
        %v2221 = vshrl.u32 %v2220, 7
        %v2222 = vsub.s32 %v2219, %v2221
        %v2223 = vrot.slane %v1947, %v2222
        %vm2224 = vcmask 392512
        %v2225 = vsel %vm2224, %v2223, %v2218
        %v2226 = vadd.s32 %v1535, 4294967248
        %v2227 = vlaneseq
        %v2228 = vshrl.u32 %v2227, 7
        %v2229 = vsub.s32 %v2226, %v2228
        %v2230 = vrot.slane %v1950, %v2229
        %vm2231 = vcmask 458112
        %v2232 = vsel %vm2231, %v2230, %v2225
        %v2233 = vadd.s32 %v1535, 4294967240
        %v2234 = vlaneseq
        %v2235 = vshrl.u32 %v2234, 7
        %v2236 = vsub.s32 %v2233, %v2235
        %v2237 = vrot.slane %v1953, %v2236
        %vm2238 = vcmask 523712
        %v2239 = vsel %vm2238, %v2237, %v2232
        %v2240 = vadd.s32 %v1535, 4294967232
        %v2241 = vlaneseq
        %v2242 = vshrl.u32 %v2241, 7
        %v2243 = vsub.s32 %v2240, %v2242
        %v2244 = vrot.slane %v1956, %v2243
        %vm2245 = vcmask 589312
        %v2246 = vsel %vm2245, %v2244, %v2239
        %v2247 = vadd.s32 %v1535, 4294967224
        %v2248 = vlaneseq
        %v2249 = vshrl.u32 %v2248, 7
        %v2250 = vsub.s32 %v2247, %v2249
        %v2251 = vrot.slane %v1959, %v2250
        %vm2252 = vcmask 654912
        %v2253 = vsel %vm2252, %v2251, %v2246
        %v2254 = vadd.s32 %v1535, 4294967216
        %v2255 = vlaneseq
        %v2256 = vshrl.u32 %v2255, 7
        %v2257 = vsub.s32 %v2254, %v2256
        %v2258 = vrot.slane %v1962, %v2257
        %vm2259 = vcmask 720512
        %v2260 = vsel %vm2259, %v2258, %v2253
        %v2261 = vadd.s32 %v1535, 4294967208
        %v2262 = vlaneseq
        %v2263 = vshrl.u32 %v2262, 7
        %v2264 = vsub.s32 %v2261, %v2263
        %v2265 = vrot.slane %v1965, %v2264
        %vm2266 = vcmask 786112
        %v2267 = vsel %vm2266, %v2265, %v2260
        %v2268 = vadd.s32 %v1535, 4294967200
        %v2269 = vlaneseq
        %v2270 = vshrl.u32 %v2269, 7
        %v2271 = vsub.s32 %v2268, %v2270
        %v2272 = vrot.slane %v1968, %v2271
        %vm2273 = vcmask 851712
        %v2274 = vsel %vm2273, %v2272, %v2267
        %v2275 = vadd.s32 %v1535, 4294967192
        %v2276 = vlaneseq
        %v2277 = vshrl.u32 %v2276, 7
        %v2278 = vsub.s32 %v2275, %v2277
        %v2279 = vrot.slane %v1971, %v2278
        %vm2280 = vcmask 917312
        %v2281 = vsel %vm2280, %v2279, %v2274
        %v2282 = vadd.s32 %v1535, 4294967184
        %v2283 = vlaneseq
        %v2284 = vshrl.u32 %v2283, 7
        %v2285 = vsub.s32 %v2282, %v2284
        %v2286 = vrot.slane %v1974, %v2285
        %vm2287 = vcmask 982912
        %v2288 = vsel %vm2287, %v2286, %v2281
        %v2289 = vadd.s32 %v1535, 4294967176
        %v2290 = vlaneseq
        %v2291 = vshrl.u32 %v2290, 7
        %v2292 = vsub.s32 %v2289, %v2291
        %v2293 = vrot.slane %v1977, %v2292
        %vm2294 = vcmask 1048512
        %v2295 = vsel %vm2294, %v2293, %v2288
        %v2296 = vlaneseq
        %v2297 = vshrl.u32 %v2296, 7
        %v2298 = vsub.s32 %v1535, %v2297
        %v2299 = vrot.slane %v1980, %v2298
        %v2300 = vlaneseq
        %v2301 = vshrl.u32 %v2300, 7
        %v2302 = vsub.s32 %v2191, %v2301
        %v2303 = vrot.slane %v1983, %v2302
        %v2304 = vsel %vm2196, %v2303, %v2299
        %v2305 = vlaneseq
        %v2306 = vshrl.u32 %v2305, 7
        %v2307 = vsub.s32 %v2198, %v2306
        %v2308 = vrot.slane %v1986, %v2307
        %v2309 = vsel %vm2203, %v2308, %v2304
        %v2310 = vlaneseq
        %v2311 = vshrl.u32 %v2310, 7
        %v2312 = vsub.s32 %v2205, %v2311
        %v2313 = vrot.slane %v1989, %v2312
        %v2314 = vsel %vm2210, %v2313, %v2309
        %v2315 = vlaneseq
        %v2316 = vshrl.u32 %v2315, 7
        %v2317 = vsub.s32 %v2212, %v2316
        %v2318 = vrot.slane %v1992, %v2317
        %v2319 = vsel %vm2217, %v2318, %v2314
        %v2320 = vlaneseq
        %v2321 = vshrl.u32 %v2320, 7
        %v2322 = vsub.s32 %v2219, %v2321
        %v2323 = vrot.slane %v1995, %v2322
        %v2324 = vsel %vm2224, %v2323, %v2319
        %v2325 = vlaneseq
        %v2326 = vshrl.u32 %v2325, 7
        %v2327 = vsub.s32 %v2226, %v2326
        %v2328 = vrot.slane %v1998, %v2327
        %v2329 = vsel %vm2231, %v2328, %v2324
        %v2330 = vlaneseq
        %v2331 = vshrl.u32 %v2330, 7
        %v2332 = vsub.s32 %v2233, %v2331
        %v2333 = vrot.slane %v2001, %v2332
        %v2334 = vsel %vm2238, %v2333, %v2329
        %v2335 = vlaneseq
        %v2336 = vshrl.u32 %v2335, 7
        %v2337 = vsub.s32 %v2240, %v2336
        %v2338 = vrot.slane %v2004, %v2337
        %v2339 = vsel %vm2245, %v2338, %v2334
        %v2340 = vlaneseq
        %v2341 = vshrl.u32 %v2340, 7
        %v2342 = vsub.s32 %v2247, %v2341
        %v2343 = vrot.slane %v2007, %v2342
        %v2344 = vsel %vm2252, %v2343, %v2339
        %v2345 = vlaneseq
        %v2346 = vshrl.u32 %v2345, 7
        %v2347 = vsub.s32 %v2254, %v2346
        %v2348 = vrot.slane %v2010, %v2347
        %v2349 = vsel %vm2259, %v2348, %v2344
        %v2350 = vlaneseq
        %v2351 = vshrl.u32 %v2350, 7
        %v2352 = vsub.s32 %v2261, %v2351
        %v2353 = vrot.slane %v2013, %v2352
        %v2354 = vsel %vm2266, %v2353, %v2349
        %v2355 = vlaneseq
        %v2356 = vshrl.u32 %v2355, 7
        %v2357 = vsub.s32 %v2268, %v2356
        %v2358 = vrot.slane %v2016, %v2357
        %v2359 = vsel %vm2273, %v2358, %v2354
        %v2360 = vlaneseq
        %v2361 = vshrl.u32 %v2360, 7
        %v2362 = vsub.s32 %v2275, %v2361
        %v2363 = vrot.slane %v2019, %v2362
        %v2364 = vsel %vm2280, %v2363, %v2359
        %v2365 = vlaneseq
        %v2366 = vshrl.u32 %v2365, 7
        %v2367 = vsub.s32 %v2282, %v2366
        %v2368 = vrot.slane %v2022, %v2367
        %v2369 = vsel %vm2287, %v2368, %v2364
        %v2370 = vlaneseq
        %v2371 = vshrl.u32 %v2370, 7
        %v2372 = vsub.s32 %v2289, %v2371
        %v2373 = vrot.slane %v2025, %v2372
        %v2374 = vsel %vm2294, %v2373, %v2369
        %v2375 = vlaneseq
        %v2376 = vshrl.u32 %v2375, 7
        %v2377 = vsub.s32 %v1535, %v2376
        %v2378 = vrot.slane %v2028, %v2377
        %v2379 = vlaneseq
        %v2380 = vshrl.u32 %v2379, 7
        %v2381 = vsub.s32 %v2191, %v2380
        %v2382 = vrot.slane %v2031, %v2381
        %v2383 = vsel %vm2196, %v2382, %v2378
        %v2384 = vlaneseq
        %v2385 = vshrl.u32 %v2384, 7
        %v2386 = vsub.s32 %v2198, %v2385
        %v2387 = vrot.slane %v2034, %v2386
        %v2388 = vsel %vm2203, %v2387, %v2383
        %v2389 = vlaneseq
        %v2390 = vshrl.u32 %v2389, 7
        %v2391 = vsub.s32 %v2205, %v2390
        %v2392 = vrot.slane %v2037, %v2391
        %v2393 = vsel %vm2210, %v2392, %v2388
        %v2394 = vlaneseq
        %v2395 = vshrl.u32 %v2394, 7
        %v2396 = vsub.s32 %v2212, %v2395
        %v2397 = vrot.slane %v2040, %v2396
        %v2398 = vsel %vm2217, %v2397, %v2393
        %v2399 = vlaneseq
        %v2400 = vshrl.u32 %v2399, 7
        %v2401 = vsub.s32 %v2219, %v2400
        %v2402 = vrot.slane %v2043, %v2401
        %v2403 = vsel %vm2224, %v2402, %v2398
        %v2404 = vlaneseq
        %v2405 = vshrl.u32 %v2404, 7
        %v2406 = vsub.s32 %v2226, %v2405
        %v2407 = vrot.slane %v2046, %v2406
        %v2408 = vsel %vm2231, %v2407, %v2403
        %v2409 = vlaneseq
        %v2410 = vshrl.u32 %v2409, 7
        %v2411 = vsub.s32 %v2233, %v2410
        %v2412 = vrot.slane %v2049, %v2411
        %v2413 = vsel %vm2238, %v2412, %v2408
        %v2414 = vlaneseq
        %v2415 = vshrl.u32 %v2414, 7
        %v2416 = vsub.s32 %v2240, %v2415
        %v2417 = vrot.slane %v2052, %v2416
        %v2418 = vsel %vm2245, %v2417, %v2413
        %v2419 = vlaneseq
        %v2420 = vshrl.u32 %v2419, 7
        %v2421 = vsub.s32 %v2247, %v2420
        %v2422 = vrot.slane %v2055, %v2421
        %v2423 = vsel %vm2252, %v2422, %v2418
        %v2424 = vlaneseq
        %v2425 = vshrl.u32 %v2424, 7
        %v2426 = vsub.s32 %v2254, %v2425
        %v2427 = vrot.slane %v2058, %v2426
        %v2428 = vsel %vm2259, %v2427, %v2423
        %v2429 = vlaneseq
        %v2430 = vshrl.u32 %v2429, 7
        %v2431 = vsub.s32 %v2261, %v2430
        %v2432 = vrot.slane %v2061, %v2431
        %v2433 = vsel %vm2266, %v2432, %v2428
        %v2434 = vlaneseq
        %v2435 = vshrl.u32 %v2434, 7
        %v2436 = vsub.s32 %v2268, %v2435
        %v2437 = vrot.slane %v2064, %v2436
        %v2438 = vsel %vm2273, %v2437, %v2433
        %v2439 = vlaneseq
        %v2440 = vshrl.u32 %v2439, 7
        %v2441 = vsub.s32 %v2275, %v2440
        %v2442 = vrot.slane %v2067, %v2441
        %v2443 = vsel %vm2280, %v2442, %v2438
        %v2444 = vlaneseq
        %v2445 = vshrl.u32 %v2444, 7
        %v2446 = vsub.s32 %v2282, %v2445
        %v2447 = vrot.slane %v2070, %v2446
        %v2448 = vsel %vm2287, %v2447, %v2443
        %v2449 = vlaneseq
        %v2450 = vshrl.u32 %v2449, 7
        %v2451 = vsub.s32 %v2289, %v2450
        %v2452 = vrot.slane %v2073, %v2451
        %v2453 = vsel %vm2294, %v2452, %v2448
        %v2454 = vlaneseq
        %v2455 = vshrl.u32 %v2454, 7
        %v2456 = vsub.s32 %v1535, %v2455
        %v2457 = vrot.slane %v2076, %v2456
        %v2458 = vlaneseq
        %v2459 = vshrl.u32 %v2458, 7
        %v2460 = vsub.s32 %v2191, %v2459
        %v2461 = vrot.slane %v2079, %v2460
        %v2462 = vsel %vm2196, %v2461, %v2457
        %v2463 = vlaneseq
        %v2464 = vshrl.u32 %v2463, 7
        %v2465 = vsub.s32 %v2198, %v2464
        %v2466 = vrot.slane %v2082, %v2465
        %v2467 = vsel %vm2203, %v2466, %v2462
        %v2468 = vlaneseq
        %v2469 = vshrl.u32 %v2468, 7
        %v2470 = vsub.s32 %v2205, %v2469
        %v2471 = vrot.slane %v2085, %v2470
        %v2472 = vsel %vm2210, %v2471, %v2467
        %v2473 = vlaneseq
        %v2474 = vshrl.u32 %v2473, 7
        %v2475 = vsub.s32 %v2212, %v2474
        %v2476 = vrot.slane %v2088, %v2475
        %v2477 = vsel %vm2217, %v2476, %v2472
        %v2478 = vlaneseq
        %v2479 = vshrl.u32 %v2478, 7
        %v2480 = vsub.s32 %v2219, %v2479
        %v2481 = vrot.slane %v2091, %v2480
        %v2482 = vsel %vm2224, %v2481, %v2477
        %v2483 = vlaneseq
        %v2484 = vshrl.u32 %v2483, 7
        %v2485 = vsub.s32 %v2226, %v2484
        %v2486 = vrot.slane %v2094, %v2485
        %v2487 = vsel %vm2231, %v2486, %v2482
        %v2488 = vlaneseq
        %v2489 = vshrl.u32 %v2488, 7
        %v2490 = vsub.s32 %v2233, %v2489
        %v2491 = vrot.slane %v2097, %v2490
        %v2492 = vsel %vm2238, %v2491, %v2487
        %v2493 = vlaneseq
        %v2494 = vshrl.u32 %v2493, 7
        %v2495 = vsub.s32 %v2240, %v2494
        %v2496 = vrot.slane %v2100, %v2495
        %v2497 = vsel %vm2245, %v2496, %v2492
        %v2498 = vlaneseq
        %v2499 = vshrl.u32 %v2498, 7
        %v2500 = vsub.s32 %v2247, %v2499
        %v2501 = vrot.slane %v2103, %v2500
        %v2502 = vsel %vm2252, %v2501, %v2497
        %v2503 = vlaneseq
        %v2504 = vshrl.u32 %v2503, 7
        %v2505 = vsub.s32 %v2254, %v2504
        %v2506 = vrot.slane %v2106, %v2505
        %v2507 = vsel %vm2259, %v2506, %v2502
        %v2508 = vlaneseq
        %v2509 = vshrl.u32 %v2508, 7
        %v2510 = vsub.s32 %v2261, %v2509
        %v2511 = vrot.slane %v2109, %v2510
        %v2512 = vsel %vm2266, %v2511, %v2507
        %v2513 = vlaneseq
        %v2514 = vshrl.u32 %v2513, 7
        %v2515 = vsub.s32 %v2268, %v2514
        %v2516 = vrot.slane %v2112, %v2515
        %v2517 = vsel %vm2273, %v2516, %v2512
        %v2518 = vlaneseq
        %v2519 = vshrl.u32 %v2518, 7
        %v2520 = vsub.s32 %v2275, %v2519
        %v2521 = vrot.slane %v2115, %v2520
        %v2522 = vsel %vm2280, %v2521, %v2517
        %v2523 = vlaneseq
        %v2524 = vshrl.u32 %v2523, 7
        %v2525 = vsub.s32 %v2282, %v2524
        %v2526 = vrot.slane %v2118, %v2525
        %v2527 = vsel %vm2287, %v2526, %v2522
        %v2528 = vlaneseq
        %v2529 = vshrl.u32 %v2528, 7
        %v2530 = vsub.s32 %v2289, %v2529
        %v2531 = vrot.slane %v2121, %v2530
        %v2532 = vsel %vm2294, %v2531, %v2527
        %vm2533 = vcmask 1041409
        %v2534 = vsel %vm2533, %v2453, %v2295
        %v2535 = vsel %vm2533, %v2532, %v2374
        %v2538 = vsel %vm1543, %v2534, 0.0
        %v2539 = vsel %vm1544, %v2535, 0.0
        %vm2540 = vcmask 1041408
        %v2541 = vsel %vm2540, %v2538, 0.0
        %v2542 = vrot.slane %v2541, 4
        %v2543 = vadd.f32 %v2541, %v2542
        %v2544 = vrot.slane %v2543, 2
        %v2545 = vadd.f32 %v2543, %v2544
        %v2546 = vrot.slane %v2545, 1
        %v2547 = vadd.f32 %v2545, %v2546
        %v2548 = vsel %vm2540, %v2539, 0.0
        %v2549 = vrot.slane %v2548, 4
        %v2550 = vadd.f32 %v2548, %v2549
        %v2551 = vrot.slane %v2550, 2
        %v2552 = vadd.f32 %v2550, %v2551
        %v2553 = vrot.slane %v2552, 1
        %v2554 = vadd.f32 %v2552, %v2553
        %v2557 = vcombine.low %v2547, %v2554
        %v2559 = vunpack.c.l.s4 1966171168
        %v2560 = vunpack.c.0.s8 %v2559
        %v2561 = vlaneseq
        %v2562 = vshrl.u32 %v2561, 7
        %v2563 = vsub.s32 %v2560, %v2562
        %v2564 = vrot.slane %v2557, %v2563
        %v2566 = vunpack.c.l.s4 1966171168
        %v2567 = vunpack.c.0.s8 %v2566
        %v2568 = vlaneseq
        %v2569 = vshrl.u32 %v2568, 7
        %v2570 = vsub.s32 %v2567, %v2569
        %v2571 = vrot.slane %v2564, %v2570
        %v2573 = vadd.f32 %v2122, %v2571
        %v2574 = vlaneseq
        %vm2575 = vcmp.ge.s32.totalorder %v2574, 0
        %vm2576 = vcmp.lt.s32.totalorder %v2574, 256
        %vm2577 = vmand %vm2575, %vm2576
        %2578 = vst.msk [vmem:[#allocation2] sm:$0x3] %vm2577, %v2573
        %v2579 = vld [vmem:[%s1439] sm:$0xf]
        %v2580 = vld [vmem:[%s1419] sm:$0xf]
        %v2581 = vsub.f32 %v2579, %v2580
        %v2582 = vld [vmem:[#allocation3] sm:$0x3]
        %v2583 = vmul.f32 %v2581, %v2581
        %v2586 = vunpack.c.l.s4 1983009808
        %v2587 = vunpack.c.0.s8 %v2586
        %v2588 = vlaneseq
        %v2589 = vshrl.u32 %v2588, 7
        %v2590 = vsub.s32 %v2587, %v2589
        %v2591 = vrot.slane %v2583, %v2590
        %v2592 = vcombine.high %v2591, %v2591
        %v2595 = vsel %vm1543, %v2591, 0.0
        %v2596 = vsel %vm1544, %v2592, 0.0
        %v2597 = vsel %vm2540, %v2595, 0.0
        %v2598 = vrot.slane %v2597, 4
        %v2599 = vadd.f32 %v2597, %v2598
        %v2600 = vrot.slane %v2599, 2
        %v2601 = vadd.f32 %v2599, %v2600
        %v2602 = vrot.slane %v2601, 1
        %v2603 = vadd.f32 %v2601, %v2602
        %v2604 = vsel %vm2540, %v2596, 0.0
        %v2605 = vrot.slane %v2604, 4
        %v2606 = vadd.f32 %v2604, %v2605
        %v2607 = vrot.slane %v2606, 2
        %v2608 = vadd.f32 %v2606, %v2607
        %v2609 = vrot.slane %v2608, 1
        %v2610 = vadd.f32 %v2608, %v2609
        %v2613 = vcombine.low %v2603, %v2610
        %v2615 = vunpack.c.l.s4 1966171168
        %v2616 = vunpack.c.0.s8 %v2615
        %v2617 = vlaneseq
        %v2618 = vshrl.u32 %v2617, 7
        %v2619 = vsub.s32 %v2616, %v2618
        %v2620 = vrot.slane %v2613, %v2619
        %v2622 = vunpack.c.l.s4 1966171168
        %v2623 = vunpack.c.0.s8 %v2622
        %v2624 = vlaneseq
        %v2625 = vshrl.u32 %v2624, 7
        %v2626 = vsub.s32 %v2623, %v2625
        %v2627 = vrot.slane %v2620, %v2626
        %v2629 = vadd.f32 %v2582, %v2627
        %2630 = vst.msk [vmem:[#allocation3] sm:$0x3] %vm2577, %v2629
        %v2631 = vld [vmem:[%s1479] sm:$0xf]
        %v2632 = vld [vmem:[%s1459] sm:$0xf]
        %v2633 = vsub.f32 %v2631, %v2632
        %v2634 = vld [vmem:[#allocation4] sm:$0x3]
        %v2635 = vmul.f32 %v2633, %v2633
        %v2638 = vunpack.c.l.s4 1983009808
        %v2639 = vunpack.c.0.s8 %v2638
        %v2640 = vlaneseq
        %v2641 = vshrl.u32 %v2640, 7
        %v2642 = vsub.s32 %v2639, %v2641
        %v2643 = vrot.slane %v2635, %v2642
        %v2644 = vcombine.high %v2643, %v2643
        %v2647 = vsel %vm1543, %v2643, 0.0
        %v2648 = vsel %vm1544, %v2644, 0.0
        %v2649 = vsel %vm2540, %v2647, 0.0
        %v2650 = vrot.slane %v2649, 4
        %v2651 = vadd.f32 %v2649, %v2650
        %v2652 = vrot.slane %v2651, 2
        %v2653 = vadd.f32 %v2651, %v2652
        %v2654 = vrot.slane %v2653, 1
        %v2655 = vadd.f32 %v2653, %v2654
        %v2656 = vsel %vm2540, %v2648, 0.0
        %v2657 = vrot.slane %v2656, 4
        %v2658 = vadd.f32 %v2656, %v2657
        %v2659 = vrot.slane %v2658, 2
        %v2660 = vadd.f32 %v2658, %v2659
        %v2661 = vrot.slane %v2660, 1
        %v2662 = vadd.f32 %v2660, %v2661
        %v2665 = vcombine.low %v2655, %v2662
        %v2667 = vunpack.c.l.s4 1966171168
        %v2668 = vunpack.c.0.s8 %v2667
        %v2669 = vlaneseq
        %v2670 = vshrl.u32 %v2669, 7
        %v2671 = vsub.s32 %v2668, %v2670
        %v2672 = vrot.slane %v2665, %v2671
        %v2674 = vunpack.c.l.s4 1966171168
        %v2675 = vunpack.c.0.s8 %v2674
        %v2676 = vlaneseq
        %v2677 = vshrl.u32 %v2676, 7
        %v2678 = vsub.s32 %v2675, %v2677
        %v2679 = vrot.slane %v2672, %v2678
        %v2681 = vadd.f32 %v2634, %v2679
        %2682 = vst.msk [vmem:[#allocation4] sm:$0x3] %vm2577, %v2681
        // Predicated region
        $region193: #{tpu_custom_call.1} parent=175 // pred_check
          %p2683 = pneg %p1490
        $region194: #{tpu_custom_call.1} parent=175 // pred_check_branch
          %2685 = sbr.rel (%p2683) target = $region196
        $region195: #{tpu_custom_call.1} parent=175 // pred_region
          %v2686 = vld [vmem:[#allocation2] sm:$0x3]
          %v2688 = vlaneseq
          %v2689 = vshrl.u32 %v2688, 7
          %v2690 = vsub.s32 0, %v2689
          %v2691 = vrot.slane %v2686, %v2690
          %v2692 = vlaneseq
          %v2693 = vshrl.u32 %v2692, 7
          %v2694 = vsub.s32 1, %v2693
          %v2695 = vrot.slane %v2686, %v2694
          %vm2698 = vcmask 1040384
          %v2699 = vsel %vm2698, %v2691, 0.0
          %v2700 = vsel %vm2698, %v2695, 0.0
          %v2701 = vadd.f32 %v2699, %v2700
          %2702 = vadd.xlane.f32.xlu0 %v2701
          %v2703 = vpop.xlane.xlu0 %2702
          %v2704 = vrot.slane %v2703, 4
          %v2705 = vadd.f32 %v2703, %v2704
          %v2706 = vrot.slane %v2705, 2
          %v2707 = vadd.f32 %v2705, %v2706
          %v2708 = vrot.slane %v2707, 1
          %v2709 = vadd.f32 %v2707, %v2708
          %s2710 = vtos %v2709
          %s2711 = scalar_lea.smem %s1391, 0 [#allocation8]
          %2712 = sst [smem:[%s2711]] %s2710
          %v2713 = vld [vmem:[#allocation3] sm:$0x3]
          %v2715 = vlaneseq
          %v2716 = vshrl.u32 %v2715, 7
          %v2717 = vsub.s32 0, %v2716
          %v2718 = vrot.slane %v2713, %v2717
          %v2719 = vlaneseq
          %v2720 = vshrl.u32 %v2719, 7
          %v2721 = vsub.s32 1, %v2720
          %v2722 = vrot.slane %v2713, %v2721
          %v2725 = vsel %vm2698, %v2718, 0.0
          %v2726 = vsel %vm2698, %v2722, 0.0
          %v2727 = vadd.f32 %v2725, %v2726
          %2728 = vadd.xlane.f32.xlu0 %v2727
          %v2729 = vpop.xlane.xlu0 %2728
          %v2730 = vrot.slane %v2729, 4
          %v2731 = vadd.f32 %v2729, %v2730
          %v2732 = vrot.slane %v2731, 2
          %v2733 = vadd.f32 %v2731, %v2732
          %v2734 = vrot.slane %v2733, 1
          %v2735 = vadd.f32 %v2733, %v2734
          %s2736 = vtos %v2735
          %s2737 = scalar_lea.smem %s1391, 1 [#allocation8]
          %2738 = sst [smem:[%s2737]] %s2736
          %v2739 = vld [vmem:[#allocation4] sm:$0x3]
          %v2741 = vlaneseq
          %v2742 = vshrl.u32 %v2741, 7
          %v2743 = vsub.s32 0, %v2742
          %v2744 = vrot.slane %v2739, %v2743
          %v2745 = vlaneseq
          %v2746 = vshrl.u32 %v2745, 7
          %v2747 = vsub.s32 1, %v2746
          %v2748 = vrot.slane %v2739, %v2747
          %v2751 = vsel %vm2698, %v2744, 0.0
          %v2752 = vsel %vm2698, %v2748, 0.0
          %v2753 = vadd.f32 %v2751, %v2752
          %2754 = vadd.xlane.f32.xlu0 %v2753
          %v2755 = vpop.xlane.xlu0 %2754
          %v2756 = vrot.slane %v2755, 4
          %v2757 = vadd.f32 %v2755, %v2756
          %v2758 = vrot.slane %v2757, 2
          %v2759 = vadd.f32 %v2757, %v2758
          %v2760 = vrot.slane %v2759, 1
          %v2761 = vadd.f32 %v2759, %v2760
          %s2762 = vtos %v2761
          %s2763 = scalar_lea.smem %s1391, 2 [#allocation8]
          %2764 = sst [smem:[%s2763]] %s2762
          %v2765 = vld [vmem:[#allocation5] sm:$0x1]
          %vm2766 = vcmask 188416
          %v2767 = vsel %vm2766, %v2765, 0.0
          %2768 = vadd.xlane.f32.xlu0 %v2767
          %v2769 = vpop.xlane.xlu0 %2768
          %v2770 = vrot.slane %v2769, 4
          %v2771 = vadd.f32 %v2769, %v2770
          %v2772 = vrot.slane %v2771, 2
          %v2773 = vadd.f32 %v2771, %v2772
          %v2774 = vrot.slane %v2773, 1
          %v2775 = vadd.f32 %v2773, %v2774
          %s2776 = vtos %v2775
          %s2777 = scalar_lea.smem %s1391, 3 [#allocation8]
          %2778 = sst [smem:[%s2777]] %s2776
        $region196: #{tpu_custom_call.1} parent=175 // pred_fallthru
          _
        %s2779 = sand.u32 %s320, 1
        %s2780 = scalar_lea.sflag [#allocation9], %s2779
        %s2781 = sand.u32 %s320, 1
        %s2782 = smul.addr %s2781, 128
        %s2783 = scalar_lea.smem [#allocation8], %s2782
        // Predicated region
        $region197: #{tpu_custom_call.1} parent=175 // pred_check
          %p2784 = pneg %p330
        $region198: #{tpu_custom_call.1} parent=175 // pred_check_branch
          %2786 = sbr.rel (%p2784) target = $region200
        $region199: #{tpu_custom_call.1} parent=175 // pred_region
          %s2788 = ssub.s32 16, 16
          %2789 = vsyncadd %s2780, %s2788
          %s2790 = smul.addr %s28, 16
          %s2791 = scalar_lea.hbm %s10, %s2790
          %2794 = dma.smem_to_hbm %s2783, 16, %s2791, %s2780
        $region200: #{tpu_custom_call.1} parent=175 // pred_fallthru
          _
      $region176: #{tpu_custom_call.1} parent=5 // pred_fallthru
        _
      %p2795 = scmp.le.s32.totalorder 2, %s19
      // Predicated region
      $region201: #{tpu_custom_call.1} parent=5 // pred_check
        %p2796 = pneg %p2795
      $region202: #{tpu_custom_call.1} parent=5 // pred_check_branch
        %2798 = sbr.rel (%p2796) target = $region204
      $region203: #{tpu_custom_call.1} parent=5 // pred_region
        %s2799 = ssub.s32 %s19, 2
        // Predicated region
        $region205: #{tpu_custom_call.1} parent=203 // pred_check
          %p2800 = pneg %p336
        $region206: #{tpu_custom_call.1} parent=203 // pred_check_branch
          %2802 = sbr.rel (%p2800) target = $region208
        $region207: #{tpu_custom_call.1} parent=203 // pred_region
          %s2803 = sand.u32 %s321, 1
          %s2804 = scalar_lea.sflag [#allocation9], %s2803
          %s2805 = sand.u32 %s321, 1
          %s2806 = smul.addr %s2805, 128
          %s2807 = scalar_lea.smem [#allocation8], %s2806
          %2808 = dma.done %s2804, 16
        $region208: #{tpu_custom_call.1} parent=203 // pred_fallthru
          _
        %2809 = sfence
      $region204: #{tpu_custom_call.1} parent=5 // pred_fallthru
        _
    $region6: #{tpu_custom_call.1} parent=1 // loop_footer
      %s23 = sadd.s32 1, %s19
    $region7: #{tpu_custom_call.1} parent=1 // loop_footer_branch
      %18 = sbr.rel target = $region3
    $region8: #{tpu_custom_call.1} parent=1 // loop_exit
      _
    %2810 = vsyncpa [#allocation9], 1
    %s2811 = scalar_lea.sflag [#allocation9], 1
    %2812 = vsyncpa %s2811, 1

</llo_original>
